<compile_context>
chip_gen: v6e
topology: v6e:2x2x1
jax: 0.10.0
libtpu: 0.0.40
codegen_flags: <defaults>
</compile_context>

<pallas_src>
import functools

import numpy as np
import jax
import jax.numpy as jnp
from jax.experimental import pallas as pl
from jax.experimental.pallas import tpu as pltpu


IMG_SIZE = 16
CAM_SIZE = 4
NUM_KNOWN = 5
FEATURE_DIM = 32
BBOX_THR = 0.5
C_IN = 3
C_L3 = 16


# ---------------------------------------------------------------------------
# Fused Pallas kernel: whole MultiBranchNet forward for ONE image per grid pt.
# ---------------------------------------------------------------------------

def _fused_forward_kernel(*refs, bbox_thr):
    (x_ref, ym_ref, p1_ref, p2_ref, u_ref,
     ws1_ref, bs1_ref, wsh_ref, bsh_ref,
     w4bd_ref, b4bd_ref, w5bd_ref, b5bd_ref, wcbd_ref, bcbd_ref,
     w24_ref, b24_ref, w25_ref, b25_ref, w2c_ref, b2c_ref,
     w34_ref, b34_ref, w35_ref, b35_ref, w3c_ref, b3c_ref,
     wg2_ref, bg2_ref, out_ref) = refs

    f32 = jnp.float32
    bf16 = jnp.bfloat16
    k = ym_ref.shape[1]

    def mm(a, w_ref, b_ref, relu=False):
        # MXU matmul in bf16 with f32 accumulation; elementwise stays f32.
        r = jnp.dot(a.astype(bf16), w_ref[...],
                    preferred_element_type=f32) + b_ref[...]
        return jnp.maximum(r, 0.0) if relu else r

    def pool(p_ref, a):
        # 2x2 average pool as a small per-image constant matmul.
        return jnp.dot(p_ref[...], a.astype(bf16), preferred_element_type=f32)

    def gap(a):
        # global average pool over the 16 spatial positions (sublane reduce).
        return jnp.mean(a, axis=0, keepdims=True)

    def cam_norm(conv_cls):
        # class-channel CAM + per-image min/max normalization at 4x4 res
        # (exact: upsample is pure replication, so min/max commute with it).
        cam = jnp.sum(conv_cls * ym_ref[...], axis=1, keepdims=True)   # (16,1)
        mn = jnp.min(cam, axis=0, keepdims=True)
        mx = jnp.max(cam, axis=0, keepdims=True)
        return (cam - mn) * pl.reciprocal(mx - mn + 1e-6, approx=True)

    def upsample(col):
        # nearest-neighbour 4x4 -> 16x16 replication as a (256,16)x(16,1)
        # matmul (the matrix is 0/1 with exactly one hit per row).
        return jnp.dot(u_ref[...], col.astype(bf16), preferred_element_type=f32)

    def tail(f8, w4, b4, w5, b5):
        t = mm(f8, w4, b4, relu=True)        # l4 conv+ReLU  (8x8)
        t = pool(p2_ref, t)                  # pool 8x8 -> 4x4
        return mm(t, w5, b5, relu=True)      # l5 conv+ReLU  (4x4)

    # ---- branch 1 + gate, fused via lane-concat / block-diagonal weights --
    h1 = mm(x_ref[...], ws1_ref, bs1_ref, relu=True)          # (256, 32)
    h1p = pool(p1_ref, h1)                                     # (64, 32)
    t5 = tail(h1p, w4bd_ref, b4bd_ref, w5bd_ref, b5bd_ref)     # (16, 64)
    conv1 = mm(t5, wcbd_ref, bcbd_ref)                         # (16, K+8)
    gp1 = gap(conv1)                                           # (1, K+8)
    b1_logits = gp1[:, :k]                                     # (1, K)
    g_hid = gp1[:, k:]                                         # (1, 8) gate hidden
    cam1 = cam_norm(conv1[:, :k])                              # (16, 1)

    # ---- branch 2 (cam_dot approx: image * upsampled normalized CAM) ------
    x2 = x_ref[...] * upsample(cam1)                           # (256, 3)
    f2 = pool(p1_ref, mm(x2, wsh_ref, bsh_ref, relu=True))     # (64, 16)
    l5_2 = tail(f2, w24_ref, b24_ref, w25_ref, b25_ref)        # (16, 32)
    conv2 = mm(l5_2, w2c_ref, b2c_ref)                         # (16, K)
    b2_logits = gap(conv2)                                     # (1, K)
    cam2 = cam_norm(conv2)                                     # (16, 1)

    # ---- branch 3 (cam_mask approx: image * (CAM > thr)) ------------------
    mask3 = (cam2 > bbox_thr).astype(f32)                      # threshold at 4x4
    x3 = x_ref[...] * upsample(mask3)                          # (256, 3)
    f3 = pool(p1_ref, mm(x3, wsh_ref, bsh_ref, relu=True))     # (64, 16)
    l5_3 = tail(f3, w34_ref, b34_ref, w35_ref, b35_ref)        # (16, 32)
    b3_logits = mm(gap(l5_3), w3c_ref, b3c_ref)                # (1, K)

    # ---- gate head ---------------------------------------------------------
    g_raw = mm(g_hid, wg2_ref, bg2_ref)                        # (1, 3)
    gl = g_raw * 0.1
    gl = gl - jnp.max(gl, axis=1, keepdims=True)
    e = jnp.exp(gl)
    pred = e * pl.reciprocal(jnp.sum(e, axis=1, keepdims=True), approx=True)

    gate_logits = (b1_logits * pred[:, 0:1]
                   + b2_logits * pred[:, 1:2]
                   + b3_logits * pred[:, 2:3])                 # (1, K)

    # single lane-packed output slab: [b1 | b2 | b3 | gate_logits | pred]
    out = jnp.concatenate(
        [b1_logits, b2_logits, b3_logits, gate_logits, pred], axis=1)
    out_ref[...] = out.reshape(out_ref.shape)


# ---------------------------------------------------------------------------
# Per-image geometry constants (batch-independent, tiny)
# ---------------------------------------------------------------------------

def _pool_matrix(h, w):
    ho, wo = h // 2, w // 2
    m = np.zeros((ho * wo, h * w), np.float32)
    for oh in range(ho):
        for ow in range(wo):
            r = oh * wo + ow
            for dh in range(2):
                for dw in range(2):
                    m[r, (2 * oh + dh) * w + (2 * ow + dw)] = 0.25
    return m


def _upsample_matrix(hs, ws, factor):
    hd, wd = hs * factor, ws * factor
    m = np.zeros((hd * wd, hs * ws), np.float32)
    for hh in range(hd):
        for ww in range(wd):
            m[hh * wd + ww, (hh // factor) * ws + (ww // factor)] = 1.0
    return m


def _block_diag(a, b):
    r1, c1 = a.shape
    r2, c2 = b.shape
    out = jnp.zeros((r1 + r2, c1 + c2), jnp.float32)
    out = out.at[:r1, :c1].set(a)
    out = out.at[r1:, c1:].set(b)
    return out


# ---------------------------------------------------------------------------
# Parameters (deterministic init)
# ---------------------------------------------------------------------------

def _init_params():
    key = jax.random.PRNGKey(0)

    def layer(kk, cin, cout):
        kw, kb = jax.random.split(kk)
        return {
            "w": 0.05 * jax.random.normal(kw, (cin, cout), jnp.float32),
            "b": 0.05 * jax.random.normal(kb, (1, cout), jnp.float32),
        }

    keys = jax.random.split(key, 16)
    p = {}
    p["shared_l3"] = layer(keys[0], C_IN, C_L3)
    p["b1_l4"] = layer(keys[1], C_L3, FEATURE_DIM)
    p["b1_l5"] = layer(keys[2], FEATURE_DIM, FEATURE_DIM)
    p["b1_cls"] = layer(keys[3], FEATURE_DIM, NUM_KNOWN)
    p["b2_l4"] = layer(keys[4], C_L3, FEATURE_DIM)
    p["b2_l5"] = layer(keys[5], FEATURE_DIM, FEATURE_DIM)
    p["b2_cls"] = layer(keys[6], FEATURE_DIM, NUM_KNOWN)
    p["b3_l4"] = layer(keys[7], C_L3, FEATURE_DIM)
    p["b3_l5"] = layer(keys[8], FEATURE_DIM, FEATURE_DIM)
    p["b3_cls"] = layer(keys[9], FEATURE_DIM, NUM_KNOWN)
    p["gate_l3"] = layer(keys[10], C_IN, C_L3)
    p["gate_l4"] = layer(keys[11], C_L3, FEATURE_DIM)
    p["gate_l5"] = layer(keys[12], FEATURE_DIM, FEATURE_DIM)
    p["gate_cls1"] = layer(keys[13], FEATURE_DIM, FEATURE_DIM // 4)
    p["gate_cls2"] = layer(keys[14], FEATURE_DIM // 4, 3)
    # TODO(synk): mix_exps_cls exists in __init__ but is unused in forward; omitted.
    return p


# ---------------------------------------------------------------------------
# Forward pass wrapper (one fused pallas_call, grid over batch)
# ---------------------------------------------------------------------------

def multibranch_forward(x_nhwc, y, params):
    nb, h, w, cin = x_nhwc.shape
    k = NUM_KNOWN
    hw = h * w
    m2 = CAM_SIZE * CAM_SIZE
    bf16 = jnp.bfloat16

    x2d = x_nhwc.reshape(nb * hw, cin).astype(jnp.float32)
    # per-row one-hot of label on the 4x4 CAM grid (one 16-row block / image)
    ymask = jnp.repeat(jax.nn.one_hot(y, k, dtype=jnp.float32), m2, axis=0)

    # per-image, batch-independent geometry constants (bf16 values are exact)
    p1 = jnp.asarray(_pool_matrix(h, w), dtype=bf16)               # (64, 256)
    p2 = jnp.asarray(_pool_matrix(h // 2, w // 2), dtype=bf16)     # (16, 64)
    u = jnp.asarray(_upsample_matrix(CAM_SIZE, CAM_SIZE, h // CAM_SIZE),
                    dtype=bf16)                                    # (256, 16)

    def w_(name):
        return params[name]["w"]

    def b_(name):
        return params[name]["b"]

    # shared_l3 | gate_l3 consume the same input x -> lane-concatenated matmul
    w_s1 = jnp.concatenate([w_("shared_l3"), w_("gate_l3")], axis=1).astype(bf16)
    b_s1 = jnp.concatenate([b_("shared_l3"), b_("gate_l3")], axis=1)
    # branch-1 tail and gate tail fused with block-diagonal weights
    w4bd = _block_diag(w_("b1_l4"), w_("gate_l4")).astype(bf16)    # (32, 64)
    b4bd = jnp.concatenate([b_("b1_l4"), b_("gate_l4")], axis=1)
    w5bd = _block_diag(w_("b1_l5"), w_("gate_l5")).astype(bf16)    # (64, 64)
    b5bd = jnp.concatenate([b_("b1_l5"), b_("gate_l5")], axis=1)
    # b1_cls and gate_cls1 fused per-pixel (exact: GAP commutes with 1x1+bias)
    wcbd = _block_diag(w_("b1_cls"), w_("gate_cls1")).astype(bf16)  # (64, 13)
    bcbd = jnp.concatenate([b_("b1_cls"), b_("gate_cls1")], axis=1)

    const_inputs = [
        p1, p2, u,
        w_s1, b_s1, w_("shared_l3").astype(bf16), b_("shared_l3"),
        w4bd, b4bd, w5bd, b5bd, wcbd, bcbd,
        w_("b2_l4").astype(bf16), b_("b2_l4"),
        w_("b2_l5").astype(bf16), b_("b2_l5"),
        w_("b2_cls").astype(bf16), b_("b2_cls"),
        w_("b3_l4").astype(bf16), b_("b3_l4"),
        w_("b3_l5").astype(bf16), b_("b3_l5"),
        w_("b3_cls").astype(bf16), b_("b3_cls"),
        w_("gate_cls2").astype(bf16), b_("gate_cls2"),
    ]

    x_spec = pl.BlockSpec((hw, cin), lambda b: (b, 0))     # one image / step
    ym_spec = pl.BlockSpec((m2, k), lambda b: (b, 0))

    def const_spec(a):
        return pl.BlockSpec(a.shape, lambda b: (0, 0))     # VMEM-resident

    out_lanes = 4 * k + 3
    kernel = functools.partial(_fused_forward_kernel, bbox_thr=BBOX_THR)

    out = pl.pallas_call(
        kernel,
        out_shape=jax.ShapeDtypeStruct((nb, 1, out_lanes), jnp.float32),
        grid=(nb,),
        in_specs=[x_spec, ym_spec] + [const_spec(a) for a in const_inputs],
        out_specs=pl.BlockSpec((1, 1, out_lanes), lambda b: (b, 0, 0)),
        compiler_params=pltpu.CompilerParams(
            dimension_semantics=("parallel",)),
    )(x2d, ymask, *const_inputs)

    out = out.reshape(nb, out_lanes)
    b1_logits = out[:, 0:k]
    b2_logits = out[:, k:2 * k]
    b3_logits = out[:, 2 * k:3 * k]
    gate_logits = out[:, 3 * k:4 * k]
    gate_pred = out[:, 4 * k:4 * k + 3]
    return {"logits": [b1_logits, b2_logits, b3_logits, gate_logits],
            "gate_pred": gate_pred}


# ---------------------------------------------------------------------------
# Main
# ---------------------------------------------------------------------------

if __name__ == "__main__":
    key = jax.random.PRNGKey(0)
    kx, _ = jax.random.split(key)
    # Reference takes NCHW (2, 3, 16, 16); convert to NHWC for the kernel.
    x_nchw = jax.random.normal(kx, (2, C_IN, IMG_SIZE, IMG_SIZE), jnp.float32)
    x_nhwc = jnp.transpose(x_nchw, (0, 2, 3, 1))
    y = jnp.array([1, 3], dtype=jnp.int32)

    params = _init_params()
    fwd = jax.jit(multibranch_forward)
    out = fwd(x_nhwc, y, params)

    for t in out["logits"]:
        jax.block_until_ready(t)
    jax.block_until_ready(out["gate_pred"])

    assert all(t.shape == (2, NUM_KNOWN) for t in out["logits"])
    assert out["gate_pred"].shape == (2, 3)
    assert all(bool(jnp.all(jnp.isfinite(t))) for t in out["logits"])
    print("KERNEL_OK")
</pallas_src>

<mosaic_0001>
module attributes {stable_mosaic.version = 11 : i64} {
  func.func @_fused_forward_kernel(%arg0: i32, %arg1: memref<256x3xf32, #tpu.memory_space<vmem>>, %arg2: memref<16x5xf32, #tpu.memory_space<vmem>>, %arg3: memref<64x256xbf16, #tpu.memory_space<vmem>>, %arg4: memref<16x64xbf16, #tpu.memory_space<vmem>>, %arg5: memref<256x16xbf16, #tpu.memory_space<vmem>>, %arg6: memref<3x32xbf16, #tpu.memory_space<vmem>>, %arg7: memref<1x32xf32, #tpu.memory_space<vmem>>, %arg8: memref<3x16xbf16, #tpu.memory_space<vmem>>, %arg9: memref<1x16xf32, #tpu.memory_space<vmem>>, %arg10: memref<32x64xbf16, #tpu.memory_space<vmem>>, %arg11: memref<1x64xf32, #tpu.memory_space<vmem>>, %arg12: memref<64x64xbf16, #tpu.memory_space<vmem>>, %arg13: memref<1x64xf32, #tpu.memory_space<vmem>>, %arg14: memref<64x13xbf16, #tpu.memory_space<vmem>>, %arg15: memref<1x13xf32, #tpu.memory_space<vmem>>, %arg16: memref<16x32xbf16, #tpu.memory_space<vmem>>, %arg17: memref<1x32xf32, #tpu.memory_space<vmem>>, %arg18: memref<32x32xbf16, #tpu.memory_space<vmem>>, %arg19: memref<1x32xf32, #tpu.memory_space<vmem>>, %arg20: memref<32x5xbf16, #tpu.memory_space<vmem>>, %arg21: memref<1x5xf32, #tpu.memory_space<vmem>>, %arg22: memref<16x32xbf16, #tpu.memory_space<vmem>>, %arg23: memref<1x32xf32, #tpu.memory_space<vmem>>, %arg24: memref<32x32xbf16, #tpu.memory_space<vmem>>, %arg25: memref<1x32xf32, #tpu.memory_space<vmem>>, %arg26: memref<32x5xbf16, #tpu.memory_space<vmem>>, %arg27: memref<1x5xf32, #tpu.memory_space<vmem>>, %arg28: memref<8x3xbf16, #tpu.memory_space<vmem>>, %arg29: memref<1x3xf32, #tpu.memory_space<vmem>>, %arg30: memref<1x1x23xf32, #tpu.memory_space<vmem>>) attributes {dimension_semantics = [#tpu.dimension_semantics<parallel>], iteration_bounds = array<i64: 2>, scalar_prefetch = 0 : i64, scratch_operands = 0 : i64, tpu.core_type = #tpu.core_type<tc>, window_params = [{transform_indices = @transform_0, window_bounds = array<i64: 256, 3>}, {transform_indices = @transform_1, window_bounds = array<i64: 16, 5>}, {pipeline_mode = #tpu.pipeline_mode<synchronous>, transform_indices = @transform_2, window_bounds = array<i64: 64, 256>}, {pipeline_mode = #tpu.pipeline_mode<synchronous>, transform_indices = @transform_3, window_bounds = array<i64: 16, 64>}, {pipeline_mode = #tpu.pipeline_mode<synchronous>, transform_indices = @transform_4, window_bounds = array<i64: 256, 16>}, {pipeline_mode = #tpu.pipeline_mode<synchronous>, transform_indices = @transform_5, window_bounds = array<i64: 3, 32>}, {pipeline_mode = #tpu.pipeline_mode<synchronous>, transform_indices = @transform_6, window_bounds = array<i64: 1, 32>}, {pipeline_mode = #tpu.pipeline_mode<synchronous>, transform_indices = @transform_7, window_bounds = array<i64: 3, 16>}, {pipeline_mode = #tpu.pipeline_mode<synchronous>, transform_indices = @transform_8, window_bounds = array<i64: 1, 16>}, {pipeline_mode = #tpu.pipeline_mode<synchronous>, transform_indices = @transform_9, window_bounds = array<i64: 32, 64>}, {pipeline_mode = #tpu.pipeline_mode<synchronous>, transform_indices = @transform_10, window_bounds = array<i64: 1, 64>}, {pipeline_mode = #tpu.pipeline_mode<synchronous>, transform_indices = @transform_11, window_bounds = array<i64: 64, 64>}, {pipeline_mode = #tpu.pipeline_mode<synchronous>, transform_indices = @transform_12, window_bounds = array<i64: 1, 64>}, {pipeline_mode = #tpu.pipeline_mode<synchronous>, transform_indices = @transform_13, window_bounds = array<i64: 64, 13>}, {pipeline_mode = #tpu.pipeline_mode<synchronous>, transform_indices = @transform_14, window_bounds = array<i64: 1, 13>}, {pipeline_mode = #tpu.pipeline_mode<synchronous>, transform_indices = @transform_15, window_bounds = array<i64: 16, 32>}, {pipeline_mode = #tpu.pipeline_mode<synchronous>, transform_indices = @transform_16, window_bounds = array<i64: 1, 32>}, {pipeline_mode = #tpu.pipeline_mode<synchronous>, transform_indices = @transform_17, window_bounds = array<i64: 32, 32>}, {pipeline_mode = #tpu.pipeline_mode<synchronous>, transform_indices = @transform_18, window_bounds = array<i64: 1, 32>}, {pipeline_mode = #tpu.pipeline_mode<synchronous>, transform_indices = @transform_19, window_bounds = array<i64: 32, 5>}, {pipeline_mode = #tpu.pipeline_mode<synchronous>, transform_indices = @transform_20, window_bounds = array<i64: 1, 5>}, {pipeline_mode = #tpu.pipeline_mode<synchronous>, transform_indices = @transform_21, window_bounds = array<i64: 16, 32>}, {pipeline_mode = #tpu.pipeline_mode<synchronous>, transform_indices = @transform_22, window_bounds = array<i64: 1, 32>}, {pipeline_mode = #tpu.pipeline_mode<synchronous>, transform_indices = @transform_23, window_bounds = array<i64: 32, 32>}, {pipeline_mode = #tpu.pipeline_mode<synchronous>, transform_indices = @transform_24, window_bounds = array<i64: 1, 32>}, {pipeline_mode = #tpu.pipeline_mode<synchronous>, transform_indices = @transform_25, window_bounds = array<i64: 32, 5>}, {pipeline_mode = #tpu.pipeline_mode<synchronous>, transform_indices = @transform_26, window_bounds = array<i64: 1, 5>}, {pipeline_mode = #tpu.pipeline_mode<synchronous>, transform_indices = @transform_27, window_bounds = array<i64: 8, 3>}, {pipeline_mode = #tpu.pipeline_mode<synchronous>, transform_indices = @transform_28, window_bounds = array<i64: 1, 3>}, {transform_indices = @transform_29, window_bounds = array<i64: 1, 1, 23>}]} {
    %c0 = arith.constant 0 : index
    %c0_0 = arith.constant 0 : index
    %0 = vector.load %arg1[%c0, %c0_0] : memref<256x3xf32, #tpu.memory_space<vmem>>, vector<256x3xf32>
    %1 = arith.truncf %0 : vector<256x3xf32> to vector<256x3xbf16>
    %c0_1 = arith.constant 0 : index
    %c0_2 = arith.constant 0 : index
    %2 = vector.load %arg6[%c0_1, %c0_2] : memref<3x32xbf16, #tpu.memory_space<vmem>>, vector<3x32xbf16>
    %cst = arith.constant dense<0.000000e+00> : vector<256x32xf32>
    %3 = tpu.matmul %1, %2, %cst {dimension_numbers = #tpu.dot_dimension_numbers<[1], [0], [0], [1], [0, 0, 1, 1], [], []>} : vector<256x3xbf16>, vector<3x32xbf16>, vector<256x32xf32> -> vector<256x32xf32>
    %c0_3 = arith.constant 0 : index
    %c0_4 = arith.constant 0 : index
    %4 = vector.load %arg7[%c0_3, %c0_4] : memref<1x32xf32, #tpu.memory_space<vmem>>, vector<1x32xf32>
    %5 = vector.broadcast %4 : vector<1x32xf32> to vector<256x32xf32>
    %6 = arith.addf %3, %5 : vector<256x32xf32>
    %cst_5 = arith.constant 0.000000e+00 : f32
    %7 = vector.broadcast %cst_5 : f32 to vector<256x32xf32>
    %8 = arith.maximumf %6, %7 : vector<256x32xf32>
    %c0_6 = arith.constant 0 : index
    %c0_7 = arith.constant 0 : index
    %9 = vector.load %arg3[%c0_6, %c0_7] : memref<64x256xbf16, #tpu.memory_space<vmem>>, vector<64x256xbf16>
    %10 = arith.truncf %8 : vector<256x32xf32> to vector<256x32xbf16>
    %cst_8 = arith.constant dense<0.000000e+00> : vector<64x32xf32>
    %11 = tpu.matmul %9, %10, %cst_8 {dimension_numbers = #tpu.dot_dimension_numbers<[1], [0], [0], [1], [0, 0, 1, 1], [], []>} : vector<64x256xbf16>, vector<256x32xbf16>, vector<64x32xf32> -> vector<64x32xf32>
    %12 = arith.truncf %11 : vector<64x32xf32> to vector<64x32xbf16>
    %c0_9 = arith.constant 0 : index
    %c0_10 = arith.constant 0 : index
    %13 = vector.load %arg10[%c0_9, %c0_10] : memref<32x64xbf16, #tpu.memory_space<vmem>>, vector<32x64xbf16>
    %cst_11 = arith.constant dense<0.000000e+00> : vector<64x64xf32>
    %14 = tpu.matmul %12, %13, %cst_11 {dimension_numbers = #tpu.dot_dimension_numbers<[1], [0], [0], [1], [0, 0, 1, 1], [], []>} : vector<64x32xbf16>, vector<32x64xbf16>, vector<64x64xf32> -> vector<64x64xf32>
    %c0_12 = arith.constant 0 : index
    %c0_13 = arith.constant 0 : index
    %15 = vector.load %arg11[%c0_12, %c0_13] : memref<1x64xf32, #tpu.memory_space<vmem>>, vector<1x64xf32>
    %16 = vector.broadcast %15 : vector<1x64xf32> to vector<64x64xf32>
    %17 = arith.addf %14, %16 : vector<64x64xf32>
    %cst_14 = arith.constant 0.000000e+00 : f32
    %18 = vector.broadcast %cst_14 : f32 to vector<64x64xf32>
    %19 = arith.maximumf %17, %18 : vector<64x64xf32>
    %c0_15 = arith.constant 0 : index
    %c0_16 = arith.constant 0 : index
    %20 = vector.load %arg4[%c0_15, %c0_16] : memref<16x64xbf16, #tpu.memory_space<vmem>>, vector<16x64xbf16>
    %21 = arith.truncf %19 : vector<64x64xf32> to vector<64x64xbf16>
    %cst_17 = arith.constant dense<0.000000e+00> : vector<16x64xf32>
    %22 = tpu.matmul %20, %21, %cst_17 {dimension_numbers = #tpu.dot_dimension_numbers<[1], [0], [0], [1], [0, 0, 1, 1], [], []>} : vector<16x64xbf16>, vector<64x64xbf16>, vector<16x64xf32> -> vector<16x64xf32>
    %23 = arith.truncf %22 : vector<16x64xf32> to vector<16x64xbf16>
    %c0_18 = arith.constant 0 : index
    %c0_19 = arith.constant 0 : index
    %24 = vector.load %arg12[%c0_18, %c0_19] : memref<64x64xbf16, #tpu.memory_space<vmem>>, vector<64x64xbf16>
    %cst_20 = arith.constant dense<0.000000e+00> : vector<16x64xf32>
    %25 = tpu.matmul %23, %24, %cst_20 {dimension_numbers = #tpu.dot_dimension_numbers<[1], [0], [0], [1], [0, 0, 1, 1], [], []>} : vector<16x64xbf16>, vector<64x64xbf16>, vector<16x64xf32> -> vector<16x64xf32>
    %c0_21 = arith.constant 0 : index
    %c0_22 = arith.constant 0 : index
    %26 = vector.load %arg13[%c0_21, %c0_22] : memref<1x64xf32, #tpu.memory_space<vmem>>, vector<1x64xf32>
    %27 = vector.broadcast %26 : vector<1x64xf32> to vector<16x64xf32>
    %28 = arith.addf %25, %27 : vector<16x64xf32>
    %cst_23 = arith.constant 0.000000e+00 : f32
    %29 = vector.broadcast %cst_23 : f32 to vector<16x64xf32>
    %30 = arith.maximumf %28, %29 : vector<16x64xf32>
    %31 = arith.truncf %30 : vector<16x64xf32> to vector<16x64xbf16>
    %c0_24 = arith.constant 0 : index
    %c0_25 = arith.constant 0 : index
    %32 = vector.load %arg14[%c0_24, %c0_25] : memref<64x13xbf16, #tpu.memory_space<vmem>>, vector<64x13xbf16>
    %cst_26 = arith.constant dense<0.000000e+00> : vector<16x13xf32>
    %33 = tpu.matmul %31, %32, %cst_26 {dimension_numbers = #tpu.dot_dimension_numbers<[1], [0], [0], [1], [0, 0, 1, 1], [], []>} : vector<16x64xbf16>, vector<64x13xbf16>, vector<16x13xf32> -> vector<16x13xf32>
    %c0_27 = arith.constant 0 : index
    %c0_28 = arith.constant 0 : index
    %34 = vector.load %arg15[%c0_27, %c0_28] : memref<1x13xf32, #tpu.memory_space<vmem>>, vector<1x13xf32>
    %35 = vector.broadcast %34 : vector<1x13xf32> to vector<16x13xf32>
    %36 = arith.addf %33, %35 : vector<16x13xf32>
    %cst_29 = arith.constant dense<0.000000e+00> : vector<13xf32>
    %37 = vector.multi_reduction <add>, %36, %cst_29 [0] : vector<16x13xf32> to vector<13xf32>
    %38 = vector.shape_cast %37 : vector<13xf32> to vector<1x13xf32>
    %cst_30 = arith.constant 1.600000e+01 : f32
    %39 = vector.broadcast %cst_30 : f32 to vector<1x13xf32>
    %40 = arith.divf %38, %39 : vector<1x13xf32>
    %41 = vector.extract_strided_slice %40 {offsets = [0, 0], sizes = [1, 5], strides = [1, 1]} : vector<1x13xf32> to vector<1x5xf32>
    %42 = vector.extract_strided_slice %40 {offsets = [0, 5], sizes = [1, 8], strides = [1, 1]} : vector<1x13xf32> to vector<1x8xf32>
    %43 = vector.extract_strided_slice %36 {offsets = [0, 0], sizes = [16, 5], strides = [1, 1]} : vector<16x13xf32> to vector<16x5xf32>
    %c0_31 = arith.constant 0 : index
    %c0_32 = arith.constant 0 : index
    %44 = vector.load %arg2[%c0_31, %c0_32] : memref<16x5xf32, #tpu.memory_space<vmem>>, vector<16x5xf32>
    %45 = arith.mulf %43, %44 : vector<16x5xf32>
    %cst_33 = arith.constant dense<0.000000e+00> : vector<16xf32>
    %46 = vector.multi_reduction <add>, %45, %cst_33 [1] : vector<16x5xf32> to vector<16xf32>
    %47 = vector.shape_cast %46 : vector<16xf32> to vector<16x1xf32>
    %cst_34 = arith.constant dense<0x7F800000> : vector<1xf32>
    %48 = vector.multi_reduction <minimumf>, %47, %cst_34 [0] : vector<16x1xf32> to vector<1xf32>
    %49 = vector.shape_cast %48 : vector<1xf32> to vector<1x1xf32>
    %cst_35 = arith.constant dense<0xFF800000> : vector<1xf32>
    %50 = vector.multi_reduction <maximumf>, %47, %cst_35 [0] : vector<16x1xf32> to vector<1xf32>
    %51 = vector.shape_cast %50 : vector<1xf32> to vector<1x1xf32>
    %52 = vector.broadcast %49 : vector<1x1xf32> to vector<16x1xf32>
    %53 = arith.subf %47, %52 : vector<16x1xf32>
    %54 = arith.subf %51, %49 : vector<1x1xf32>
    %cst_36 = arith.constant 9.99999997E-7 : f32
    %55 = vector.broadcast %cst_36 : f32 to vector<1x1xf32>
    %56 = arith.addf %54, %55 : vector<1x1xf32>
    %57 = tpu.reciprocal %56 {approx = true} : vector<1x1xf32> -> vector<1x1xf32>
    %58 = vector.broadcast %57 : vector<1x1xf32> to vector<16x1xf32>
    %59 = arith.mulf %53, %58 : vector<16x1xf32>
    %c0_37 = arith.constant 0 : index
    %c0_38 = arith.constant 0 : index
    %60 = vector.load %arg1[%c0_37, %c0_38] : memref<256x3xf32, #tpu.memory_space<vmem>>, vector<256x3xf32>
    %c0_39 = arith.constant 0 : index
    %c0_40 = arith.constant 0 : index
    %61 = vector.load %arg5[%c0_39, %c0_40] : memref<256x16xbf16, #tpu.memory_space<vmem>>, vector<256x16xbf16>
    %62 = arith.truncf %59 : vector<16x1xf32> to vector<16x1xbf16>
    %cst_41 = arith.constant dense<0.000000e+00> : vector<256x1xf32>
    %63 = tpu.matmul %61, %62, %cst_41 {dimension_numbers = #tpu.dot_dimension_numbers<[1], [0], [0], [1], [0, 0, 1, 1], [], []>} : vector<256x16xbf16>, vector<16x1xbf16>, vector<256x1xf32> -> vector<256x1xf32>
    %64 = vector.broadcast %63 : vector<256x1xf32> to vector<256x3xf32>
    %65 = arith.mulf %60, %64 : vector<256x3xf32>
    %66 = arith.truncf %65 : vector<256x3xf32> to vector<256x3xbf16>
    %c0_42 = arith.constant 0 : index
    %c0_43 = arith.constant 0 : index
    %67 = vector.load %arg8[%c0_42, %c0_43] : memref<3x16xbf16, #tpu.memory_space<vmem>>, vector<3x16xbf16>
    %cst_44 = arith.constant dense<0.000000e+00> : vector<256x16xf32>
    %68 = tpu.matmul %66, %67, %cst_44 {dimension_numbers = #tpu.dot_dimension_numbers<[1], [0], [0], [1], [0, 0, 1, 1], [], []>} : vector<256x3xbf16>, vector<3x16xbf16>, vector<256x16xf32> -> vector<256x16xf32>
    %c0_45 = arith.constant 0 : index
    %c0_46 = arith.constant 0 : index
    %69 = vector.load %arg9[%c0_45, %c0_46] : memref<1x16xf32, #tpu.memory_space<vmem>>, vector<1x16xf32>
    %70 = vector.broadcast %69 : vector<1x16xf32> to vector<256x16xf32>
    %71 = arith.addf %68, %70 : vector<256x16xf32>
    %cst_47 = arith.constant 0.000000e+00 : f32
    %72 = vector.broadcast %cst_47 : f32 to vector<256x16xf32>
    %73 = arith.maximumf %71, %72 : vector<256x16xf32>
    %c0_48 = arith.constant 0 : index
    %c0_49 = arith.constant 0 : index
    %74 = vector.load %arg3[%c0_48, %c0_49] : memref<64x256xbf16, #tpu.memory_space<vmem>>, vector<64x256xbf16>
    %75 = arith.truncf %73 : vector<256x16xf32> to vector<256x16xbf16>
    %cst_50 = arith.constant dense<0.000000e+00> : vector<64x16xf32>
    %76 = tpu.matmul %74, %75, %cst_50 {dimension_numbers = #tpu.dot_dimension_numbers<[1], [0], [0], [1], [0, 0, 1, 1], [], []>} : vector<64x256xbf16>, vector<256x16xbf16>, vector<64x16xf32> -> vector<64x16xf32>
    %77 = arith.truncf %76 : vector<64x16xf32> to vector<64x16xbf16>
    %c0_51 = arith.constant 0 : index
    %c0_52 = arith.constant 0 : index
    %78 = vector.load %arg16[%c0_51, %c0_52] : memref<16x32xbf16, #tpu.memory_space<vmem>>, vector<16x32xbf16>
    %cst_53 = arith.constant dense<0.000000e+00> : vector<64x32xf32>
    %79 = tpu.matmul %77, %78, %cst_53 {dimension_numbers = #tpu.dot_dimension_numbers<[1], [0], [0], [1], [0, 0, 1, 1], [], []>} : vector<64x16xbf16>, vector<16x32xbf16>, vector<64x32xf32> -> vector<64x32xf32>
    %c0_54 = arith.constant 0 : index
    %c0_55 = arith.constant 0 : index
    %80 = vector.load %arg17[%c0_54, %c0_55] : memref<1x32xf32, #tpu.memory_space<vmem>>, vector<1x32xf32>
    %81 = vector.broadcast %80 : vector<1x32xf32> to vector<64x32xf32>
    %82 = arith.addf %79, %81 : vector<64x32xf32>
    %cst_56 = arith.constant 0.000000e+00 : f32
    %83 = vector.broadcast %cst_56 : f32 to vector<64x32xf32>
    %84 = arith.maximumf %82, %83 : vector<64x32xf32>
    %c0_57 = arith.constant 0 : index
    %c0_58 = arith.constant 0 : index
    %85 = vector.load %arg4[%c0_57, %c0_58] : memref<16x64xbf16, #tpu.memory_space<vmem>>, vector<16x64xbf16>
    %86 = arith.truncf %84 : vector<64x32xf32> to vector<64x32xbf16>
    %cst_59 = arith.constant dense<0.000000e+00> : vector<16x32xf32>
    %87 = tpu.matmul %85, %86, %cst_59 {dimension_numbers = #tpu.dot_dimension_numbers<[1], [0], [0], [1], [0, 0, 1, 1], [], []>} : vector<16x64xbf16>, vector<64x32xbf16>, vector<16x32xf32> -> vector<16x32xf32>
    %88 = arith.truncf %87 : vector<16x32xf32> to vector<16x32xbf16>
    %c0_60 = arith.constant 0 : index
    %c0_61 = arith.constant 0 : index
    %89 = vector.load %arg18[%c0_60, %c0_61] : memref<32x32xbf16, #tpu.memory_space<vmem>>, vector<32x32xbf16>
    %cst_62 = arith.constant dense<0.000000e+00> : vector<16x32xf32>
    %90 = tpu.matmul %88, %89, %cst_62 {dimension_numbers = #tpu.dot_dimension_numbers<[1], [0], [0], [1], [0, 0, 1, 1], [], []>} : vector<16x32xbf16>, vector<32x32xbf16>, vector<16x32xf32> -> vector<16x32xf32>
    %c0_63 = arith.constant 0 : index
    %c0_64 = arith.constant 0 : index
    %91 = vector.load %arg19[%c0_63, %c0_64] : memref<1x32xf32, #tpu.memory_space<vmem>>, vector<1x32xf32>
    %92 = vector.broadcast %91 : vector<1x32xf32> to vector<16x32xf32>
    %93 = arith.addf %90, %92 : vector<16x32xf32>
    %cst_65 = arith.constant 0.000000e+00 : f32
    %94 = vector.broadcast %cst_65 : f32 to vector<16x32xf32>
    %95 = arith.maximumf %93, %94 : vector<16x32xf32>
    %96 = arith.truncf %95 : vector<16x32xf32> to vector<16x32xbf16>
    %c0_66 = arith.constant 0 : index
    %c0_67 = arith.constant 0 : index
    %97 = vector.load %arg20[%c0_66, %c0_67] : memref<32x5xbf16, #tpu.memory_space<vmem>>, vector<32x5xbf16>
    %cst_68 = arith.constant dense<0.000000e+00> : vector<16x5xf32>
    %98 = tpu.matmul %96, %97, %cst_68 {dimension_numbers = #tpu.dot_dimension_numbers<[1], [0], [0], [1], [0, 0, 1, 1], [], []>} : vector<16x32xbf16>, vector<32x5xbf16>, vector<16x5xf32> -> vector<16x5xf32>
    %c0_69 = arith.constant 0 : index
    %c0_70 = arith.constant 0 : index
    %99 = vector.load %arg21[%c0_69, %c0_70] : memref<1x5xf32, #tpu.memory_space<vmem>>, vector<1x5xf32>
    %100 = vector.broadcast %99 : vector<1x5xf32> to vector<16x5xf32>
    %101 = arith.addf %98, %100 : vector<16x5xf32>
    %cst_71 = arith.constant dense<0.000000e+00> : vector<5xf32>
    %102 = vector.multi_reduction <add>, %101, %cst_71 [0] : vector<16x5xf32> to vector<5xf32>
    %103 = vector.shape_cast %102 : vector<5xf32> to vector<1x5xf32>
    %cst_72 = arith.constant 1.600000e+01 : f32
    %104 = vector.broadcast %cst_72 : f32 to vector<1x5xf32>
    %105 = arith.divf %103, %104 : vector<1x5xf32>
    %c0_73 = arith.constant 0 : index
    %c0_74 = arith.constant 0 : index
    %106 = vector.load %arg2[%c0_73, %c0_74] : memref<16x5xf32, #tpu.memory_space<vmem>>, vector<16x5xf32>
    %107 = arith.mulf %101, %106 : vector<16x5xf32>
    %cst_75 = arith.constant dense<0.000000e+00> : vector<16xf32>
    %108 = vector.multi_reduction <add>, %107, %cst_75 [1] : vector<16x5xf32> to vector<16xf32>
    %109 = vector.shape_cast %108 : vector<16xf32> to vector<16x1xf32>
    %cst_76 = arith.constant dense<0x7F800000> : vector<1xf32>
    %110 = vector.multi_reduction <minimumf>, %109, %cst_76 [0] : vector<16x1xf32> to vector<1xf32>
    %111 = vector.shape_cast %110 : vector<1xf32> to vector<1x1xf32>
    %cst_77 = arith.constant dense<0xFF800000> : vector<1xf32>
    %112 = vector.multi_reduction <maximumf>, %109, %cst_77 [0] : vector<16x1xf32> to vector<1xf32>
    %113 = vector.shape_cast %112 : vector<1xf32> to vector<1x1xf32>
    %114 = vector.broadcast %111 : vector<1x1xf32> to vector<16x1xf32>
    %115 = arith.subf %109, %114 : vector<16x1xf32>
    %116 = arith.subf %113, %111 : vector<1x1xf32>
    %cst_78 = arith.constant 9.99999997E-7 : f32
    %117 = vector.broadcast %cst_78 : f32 to vector<1x1xf32>
    %118 = arith.addf %116, %117 : vector<1x1xf32>
    %119 = tpu.reciprocal %118 {approx = true} : vector<1x1xf32> -> vector<1x1xf32>
    %120 = vector.broadcast %119 : vector<1x1xf32> to vector<16x1xf32>
    %121 = arith.mulf %115, %120 : vector<16x1xf32>
    %cst_79 = arith.constant 5.000000e-01 : f32
    %122 = vector.broadcast %cst_79 : f32 to vector<16x1xf32>
    %123 = arith.cmpf ogt, %121, %122 : vector<16x1xf32>
    %124 = arith.extui %123 : vector<16x1xi1> to vector<16x1xi32>
    %125 = arith.sitofp %124 : vector<16x1xi32> to vector<16x1xf32>
    %c0_80 = arith.constant 0 : index
    %c0_81 = arith.constant 0 : index
    %126 = vector.load %arg1[%c0_80, %c0_81] : memref<256x3xf32, #tpu.memory_space<vmem>>, vector<256x3xf32>
    %c0_82 = arith.constant 0 : index
    %c0_83 = arith.constant 0 : index
    %127 = vector.load %arg5[%c0_82, %c0_83] : memref<256x16xbf16, #tpu.memory_space<vmem>>, vector<256x16xbf16>
    %128 = arith.truncf %125 : vector<16x1xf32> to vector<16x1xbf16>
    %cst_84 = arith.constant dense<0.000000e+00> : vector<256x1xf32>
    %129 = tpu.matmul %127, %128, %cst_84 {dimension_numbers = #tpu.dot_dimension_numbers<[1], [0], [0], [1], [0, 0, 1, 1], [], []>} : vector<256x16xbf16>, vector<16x1xbf16>, vector<256x1xf32> -> vector<256x1xf32>
    %130 = vector.broadcast %129 : vector<256x1xf32> to vector<256x3xf32>
    %131 = arith.mulf %126, %130 : vector<256x3xf32>
    %132 = arith.truncf %131 : vector<256x3xf32> to vector<256x3xbf16>
    %c0_85 = arith.constant 0 : index
    %c0_86 = arith.constant 0 : index
    %133 = vector.load %arg8[%c0_85, %c0_86] : memref<3x16xbf16, #tpu.memory_space<vmem>>, vector<3x16xbf16>
    %cst_87 = arith.constant dense<0.000000e+00> : vector<256x16xf32>
    %134 = tpu.matmul %132, %133, %cst_87 {dimension_numbers = #tpu.dot_dimension_numbers<[1], [0], [0], [1], [0, 0, 1, 1], [], []>} : vector<256x3xbf16>, vector<3x16xbf16>, vector<256x16xf32> -> vector<256x16xf32>
    %c0_88 = arith.constant 0 : index
    %c0_89 = arith.constant 0 : index
    %135 = vector.load %arg9[%c0_88, %c0_89] : memref<1x16xf32, #tpu.memory_space<vmem>>, vector<1x16xf32>
    %136 = vector.broadcast %135 : vector<1x16xf32> to vector<256x16xf32>
    %137 = arith.addf %134, %136 : vector<256x16xf32>
    %cst_90 = arith.constant 0.000000e+00 : f32
    %138 = vector.broadcast %cst_90 : f32 to vector<256x16xf32>
    %139 = arith.maximumf %137, %138 : vector<256x16xf32>
    %c0_91 = arith.constant 0 : index
    %c0_92 = arith.constant 0 : index
    %140 = vector.load %arg3[%c0_91, %c0_92] : memref<64x256xbf16, #tpu.memory_space<vmem>>, vector<64x256xbf16>
    %141 = arith.truncf %139 : vector<256x16xf32> to vector<256x16xbf16>
    %cst_93 = arith.constant dense<0.000000e+00> : vector<64x16xf32>
    %142 = tpu.matmul %140, %141, %cst_93 {dimension_numbers = #tpu.dot_dimension_numbers<[1], [0], [0], [1], [0, 0, 1, 1], [], []>} : vector<64x256xbf16>, vector<256x16xbf16>, vector<64x16xf32> -> vector<64x16xf32>
    %143 = arith.truncf %142 : vector<64x16xf32> to vector<64x16xbf16>
    %c0_94 = arith.constant 0 : index
    %c0_95 = arith.constant 0 : index
    %144 = vector.load %arg22[%c0_94, %c0_95] : memref<16x32xbf16, #tpu.memory_space<vmem>>, vector<16x32xbf16>
    %cst_96 = arith.constant dense<0.000000e+00> : vector<64x32xf32>
    %145 = tpu.matmul %143, %144, %cst_96 {dimension_numbers = #tpu.dot_dimension_numbers<[1], [0], [0], [1], [0, 0, 1, 1], [], []>} : vector<64x16xbf16>, vector<16x32xbf16>, vector<64x32xf32> -> vector<64x32xf32>
    %c0_97 = arith.constant 0 : index
    %c0_98 = arith.constant 0 : index
    %146 = vector.load %arg23[%c0_97, %c0_98] : memref<1x32xf32, #tpu.memory_space<vmem>>, vector<1x32xf32>
    %147 = vector.broadcast %146 : vector<1x32xf32> to vector<64x32xf32>
    %148 = arith.addf %145, %147 : vector<64x32xf32>
    %cst_99 = arith.constant 0.000000e+00 : f32
    %149 = vector.broadcast %cst_99 : f32 to vector<64x32xf32>
    %150 = arith.maximumf %148, %149 : vector<64x32xf32>
    %c0_100 = arith.constant 0 : index
    %c0_101 = arith.constant 0 : index
    %151 = vector.load %arg4[%c0_100, %c0_101] : memref<16x64xbf16, #tpu.memory_space<vmem>>, vector<16x64xbf16>
    %152 = arith.truncf %150 : vector<64x32xf32> to vector<64x32xbf16>
    %cst_102 = arith.constant dense<0.000000e+00> : vector<16x32xf32>
    %153 = tpu.matmul %151, %152, %cst_102 {dimension_numbers = #tpu.dot_dimension_numbers<[1], [0], [0], [1], [0, 0, 1, 1], [], []>} : vector<16x64xbf16>, vector<64x32xbf16>, vector<16x32xf32> -> vector<16x32xf32>
    %154 = arith.truncf %153 : vector<16x32xf32> to vector<16x32xbf16>
    %c0_103 = arith.constant 0 : index
    %c0_104 = arith.constant 0 : index
    %155 = vector.load %arg24[%c0_103, %c0_104] : memref<32x32xbf16, #tpu.memory_space<vmem>>, vector<32x32xbf16>
    %cst_105 = arith.constant dense<0.000000e+00> : vector<16x32xf32>
    %156 = tpu.matmul %154, %155, %cst_105 {dimension_numbers = #tpu.dot_dimension_numbers<[1], [0], [0], [1], [0, 0, 1, 1], [], []>} : vector<16x32xbf16>, vector<32x32xbf16>, vector<16x32xf32> -> vector<16x32xf32>
    %c0_106 = arith.constant 0 : index
    %c0_107 = arith.constant 0 : index
    %157 = vector.load %arg25[%c0_106, %c0_107] : memref<1x32xf32, #tpu.memory_space<vmem>>, vector<1x32xf32>
    %158 = vector.broadcast %157 : vector<1x32xf32> to vector<16x32xf32>
    %159 = arith.addf %156, %158 : vector<16x32xf32>
    %cst_108 = arith.constant 0.000000e+00 : f32
    %160 = vector.broadcast %cst_108 : f32 to vector<16x32xf32>
    %161 = arith.maximumf %159, %160 : vector<16x32xf32>
    %cst_109 = arith.constant dense<0.000000e+00> : vector<32xf32>
    %162 = vector.multi_reduction <add>, %161, %cst_109 [0] : vector<16x32xf32> to vector<32xf32>
    %163 = vector.shape_cast %162 : vector<32xf32> to vector<1x32xf32>
    %cst_110 = arith.constant 1.600000e+01 : f32
    %164 = vector.broadcast %cst_110 : f32 to vector<1x32xf32>
    %165 = arith.divf %163, %164 : vector<1x32xf32>
    %166 = arith.truncf %165 : vector<1x32xf32> to vector<1x32xbf16>
    %c0_111 = arith.constant 0 : index
    %c0_112 = arith.constant 0 : index
    %167 = vector.load %arg26[%c0_111, %c0_112] : memref<32x5xbf16, #tpu.memory_space<vmem>>, vector<32x5xbf16>
    %cst_113 = arith.constant dense<0.000000e+00> : vector<1x5xf32>
    %168 = tpu.matmul %166, %167, %cst_113 {dimension_numbers = #tpu.dot_dimension_numbers<[1], [0], [0], [1], [0, 0, 1, 1], [], []>} : vector<1x32xbf16>, vector<32x5xbf16>, vector<1x5xf32> -> vector<1x5xf32>
    %c0_114 = arith.constant 0 : index
    %c0_115 = arith.constant 0 : index
    %169 = vector.load %arg27[%c0_114, %c0_115] : memref<1x5xf32, #tpu.memory_space<vmem>>, vector<1x5xf32>
    %170 = arith.addf %168, %169 : vector<1x5xf32>
    %171 = arith.truncf %42 : vector<1x8xf32> to vector<1x8xbf16>
    %c0_116 = arith.constant 0 : index
    %c0_117 = arith.constant 0 : index
    %172 = vector.load %arg28[%c0_116, %c0_117] : memref<8x3xbf16, #tpu.memory_space<vmem>>, vector<8x3xbf16>
    %cst_118 = arith.constant dense<0.000000e+00> : vector<1x3xf32>
    %173 = tpu.matmul %171, %172, %cst_118 {dimension_numbers = #tpu.dot_dimension_numbers<[1], [0], [0], [1], [0, 0, 1, 1], [], []>} : vector<1x8xbf16>, vector<8x3xbf16>, vector<1x3xf32> -> vector<1x3xf32>
    %c0_119 = arith.constant 0 : index
    %c0_120 = arith.constant 0 : index
    %174 = vector.load %arg29[%c0_119, %c0_120] : memref<1x3xf32, #tpu.memory_space<vmem>>, vector<1x3xf32>
    %175 = arith.addf %173, %174 : vector<1x3xf32>
    %cst_121 = arith.constant 1.000000e-01 : f32
    %176 = vector.broadcast %cst_121 : f32 to vector<1x3xf32>
    %177 = arith.mulf %175, %176 : vector<1x3xf32>
    %cst_122 = arith.constant dense<0xFF800000> : vector<1xf32>
    %178 = vector.multi_reduction <maximumf>, %177, %cst_122 [1] : vector<1x3xf32> to vector<1xf32>
    %179 = vector.shape_cast %178 : vector<1xf32> to vector<1x1xf32>
    %180 = vector.broadcast %179 : vector<1x1xf32> to vector<1x3xf32>
    %181 = arith.subf %177, %180 : vector<1x3xf32>
    %182 = math.exp %181 : vector<1x3xf32>
    %cst_123 = arith.constant dense<0.000000e+00> : vector<1xf32>
    %183 = vector.multi_reduction <add>, %182, %cst_123 [1] : vector<1x3xf32> to vector<1xf32>
    %184 = vector.shape_cast %183 : vector<1xf32> to vector<1x1xf32>
    %185 = tpu.reciprocal %184 {approx = true} : vector<1x1xf32> -> vector<1x1xf32>
    %186 = vector.broadcast %185 : vector<1x1xf32> to vector<1x3xf32>
    %187 = arith.mulf %182, %186 : vector<1x3xf32>
    %188 = vector.extract_strided_slice %187 {offsets = [0, 0], sizes = [1, 1], strides = [1, 1]} : vector<1x3xf32> to vector<1x1xf32>
    %189 = vector.broadcast %188 : vector<1x1xf32> to vector<1x5xf32>
    %190 = arith.mulf %41, %189 : vector<1x5xf32>
    %191 = vector.extract_strided_slice %187 {offsets = [0, 1], sizes = [1, 1], strides = [1, 1]} : vector<1x3xf32> to vector<1x1xf32>
    %192 = vector.broadcast %191 : vector<1x1xf32> to vector<1x5xf32>
    %193 = arith.mulf %105, %192 : vector<1x5xf32>
    %194 = arith.addf %190, %193 : vector<1x5xf32>
    %195 = vector.extract_strided_slice %187 {offsets = [0, 2], sizes = [1, 1], strides = [1, 1]} : vector<1x3xf32> to vector<1x1xf32>
    %196 = vector.broadcast %195 : vector<1x1xf32> to vector<1x5xf32>
    %197 = arith.mulf %170, %196 : vector<1x5xf32>
    %198 = arith.addf %194, %197 : vector<1x5xf32>
    %199 = tpu.concatenate %41, %105, %170, %198, %187 in 1 : vector<1x5xf32>, vector<1x5xf32>, vector<1x5xf32>, vector<1x5xf32>, vector<1x3xf32> -> vector<1x23xf32>
    %200 = vector.shape_cast %199 : vector<1x23xf32> to vector<1x1x23xf32>
    %c0_124 = arith.constant 0 : index
    %c0_125 = arith.constant 0 : index
    %c0_126 = arith.constant 0 : index
    %201 = vector.load %arg30[%c0_124, %c0_125, %c0_126] : memref<1x1x23xf32, #tpu.memory_space<vmem>>, vector<1x1x23xf32>
    tpu.vector_store %arg30[%c0_124, %c0_125, %c0_126], %200 {strides = array<i32>} : memref<1x1x23xf32, #tpu.memory_space<vmem>>, vector<1x1x23xf32>,
    return
  }
  func.func @transform_0(%arg0: i32) -> (i32, i32) {
    %c0_i32 = arith.constant 0 : i32
    %c0_i32_0 = arith.constant 0 : i32
    return %arg0, %c0_i32 : i32, i32
  }
  func.func @transform_1(%arg0: i32) -> (i32, i32) {
    %c0_i32 = arith.constant 0 : i32
    %c0_i32_0 = arith.constant 0 : i32
    return %arg0, %c0_i32 : i32, i32
  }
  func.func @transform_2(%arg0: i32) -> (i32, i32) {
    %c0_i32 = arith.constant 0 : i32
    %c0_i32_0 = arith.constant 0 : i32
    %c0_i32_1 = arith.constant 0 : i32
    return %c0_i32, %c0_i32_0 : i32, i32
  }
  func.func @transform_3(%arg0: i32) -> (i32, i32) {
    %c0_i32 = arith.constant 0 : i32
    %c0_i32_0 = arith.constant 0 : i32
    %c0_i32_1 = arith.constant 0 : i32
    return %c0_i32, %c0_i32_0 : i32, i32
  }
  func.func @transform_4(%arg0: i32) -> (i32, i32) {
    %c0_i32 = arith.constant 0 : i32
    %c0_i32_0 = arith.constant 0 : i32
    %c0_i32_1 = arith.constant 0 : i32
    return %c0_i32, %c0_i32_0 : i32, i32
  }
  func.func @transform_5(%arg0: i32) -> (i32, i32) {
    %c0_i32 = arith.constant 0 : i32
    %c0_i32_0 = arith.constant 0 : i32
    %c0_i32_1 = arith.constant 0 : i32
    return %c0_i32, %c0_i32_0 : i32, i32
  }
  func.func @transform_6(%arg0: i32) -> (i32, i32) {
    %c0_i32 = arith.constant 0 : i32
    %c0_i32_0 = arith.constant 0 : i32
    %c0_i32_1 = arith.constant 0 : i32
    return %c0_i32, %c0_i32_0 : i32, i32
  }
  func.func @transform_7(%arg0: i32) -> (i32, i32) {
    %c0_i32 = arith.constant 0 : i32
    %c0_i32_0 = arith.constant 0 : i32
    %c0_i32_1 = arith.constant 0 : i32
    return %c0_i32, %c0_i32_0 : i32, i32
  }
  func.func @transform_8(%arg0: i32) -> (i32, i32) {
    %c0_i32 = arith.constant 0 : i32
    %c0_i32_0 = arith.constant 0 : i32
    %c0_i32_1 = arith.constant 0 : i32
    return %c0_i32, %c0_i32_0 : i32, i32
  }
  func.func @transform_9(%arg0: i32) -> (i32, i32) {
    %c0_i32 = arith.constant 0 : i32
    %c0_i32_0 = arith.constant 0 : i32
    %c0_i32_1 = arith.constant 0 : i32
    return %c0_i32, %c0_i32_0 : i32, i32
  }
  func.func @transform_10(%arg0: i32) -> (i32, i32) {
    %c0_i32 = arith.constant 0 : i32
    %c0_i32_0 = arith.constant 0 : i32
    %c0_i32_1 = arith.constant 0 : i32
    return %c0_i32, %c0_i32_0 : i32, i32
  }
  func.func @transform_11(%arg0: i32) -> (i32, i32) {
    %c0_i32 = arith.constant 0 : i32
    %c0_i32_0 = arith.constant 0 : i32
    %c0_i32_1 = arith.constant 0 : i32
    return %c0_i32, %c0_i32_0 : i32, i32
  }
  func.func @transform_12(%arg0: i32) -> (i32, i32) {
    %c0_i32 = arith.constant 0 : i32
    %c0_i32_0 = arith.constant 0 : i32
    %c0_i32_1 = arith.constant 0 : i32
    return %c0_i32, %c0_i32_0 : i32, i32
  }
  func.func @transform_13(%arg0: i32) -> (i32, i32) {
    %c0_i32 = arith.constant 0 : i32
    %c0_i32_0 = arith.constant 0 : i32
    %c0_i32_1 = arith.constant 0 : i32
    return %c0_i32, %c0_i32_0 : i32, i32
  }
  func.func @transform_14(%arg0: i32) -> (i32, i32) {
    %c0_i32 = arith.constant 0 : i32
    %c0_i32_0 = arith.constant 0 : i32
    %c0_i32_1 = arith.constant 0 : i32
    return %c0_i32, %c0_i32_0 : i32, i32
  }
  func.func @transform_15(%arg0: i32) -> (i32, i32) {
    %c0_i32 = arith.constant 0 : i32
    %c0_i32_0 = arith.constant 0 : i32
    %c0_i32_1 = arith.constant 0 : i32
    return %c0_i32, %c0_i32_0 : i32, i32
  }
  func.func @transform_16(%arg0: i32) -> (i32, i32) {
    %c0_i32 = arith.constant 0 : i32
    %c0_i32_0 = arith.constant 0 : i32
    %c0_i32_1 = arith.constant 0 : i32
    return %c0_i32, %c0_i32_0 : i32, i32
  }
  func.func @transform_17(%arg0: i32) -> (i32, i32) {
    %c0_i32 = arith.constant 0 : i32
    %c0_i32_0 = arith.constant 0 : i32
    %c0_i32_1 = arith.constant 0 : i32
    return %c0_i32, %c0_i32_0 : i32, i32
  }
  func.func @transform_18(%arg0: i32) -> (i32, i32) {
    %c0_i32 = arith.constant 0 : i32
    %c0_i32_0 = arith.constant 0 : i32
    %c0_i32_1 = arith.constant 0 : i32
    return %c0_i32, %c0_i32_0 : i32, i32
  }
  func.func @transform_19(%arg0: i32) -> (i32, i32) {
    %c0_i32 = arith.constant 0 : i32
    %c0_i32_0 = arith.constant 0 : i32
    %c0_i32_1 = arith.constant 0 : i32
    return %c0_i32, %c0_i32_0 : i32, i32
  }
  func.func @transform_20(%arg0: i32) -> (i32, i32) {
    %c0_i32 = arith.constant 0 : i32
    %c0_i32_0 = arith.constant 0 : i32
    %c0_i32_1 = arith.constant 0 : i32
    return %c0_i32, %c0_i32_0 : i32, i32
  }
  func.func @transform_21(%arg0: i32) -> (i32, i32) {
    %c0_i32 = arith.constant 0 : i32
    %c0_i32_0 = arith.constant 0 : i32
    %c0_i32_1 = arith.constant 0 : i32
    return %c0_i32, %c0_i32_0 : i32, i32
  }
  func.func @transform_22(%arg0: i32) -> (i32, i32) {
    %c0_i32 = arith.constant 0 : i32
    %c0_i32_0 = arith.constant 0 : i32
    %c0_i32_1 = arith.constant 0 : i32
    return %c0_i32, %c0_i32_0 : i32, i32
  }
  func.func @transform_23(%arg0: i32) -> (i32, i32) {
    %c0_i32 = arith.constant 0 : i32
    %c0_i32_0 = arith.constant 0 : i32
    %c0_i32_1 = arith.constant 0 : i32
    return %c0_i32, %c0_i32_0 : i32, i32
  }
  func.func @transform_24(%arg0: i32) -> (i32, i32) {
    %c0_i32 = arith.constant 0 : i32
    %c0_i32_0 = arith.constant 0 : i32
    %c0_i32_1 = arith.constant 0 : i32
    return %c0_i32, %c0_i32_0 : i32, i32
  }
  func.func @transform_25(%arg0: i32) -> (i32, i32) {
    %c0_i32 = arith.constant 0 : i32
    %c0_i32_0 = arith.constant 0 : i32
    %c0_i32_1 = arith.constant 0 : i32
    return %c0_i32, %c0_i32_0 : i32, i32
  }
  func.func @transform_26(%arg0: i32) -> (i32, i32) {
    %c0_i32 = arith.constant 0 : i32
    %c0_i32_0 = arith.constant 0 : i32
    %c0_i32_1 = arith.constant 0 : i32
    return %c0_i32, %c0_i32_0 : i32, i32
  }
  func.func @transform_27(%arg0: i32) -> (i32, i32) {
    %c0_i32 = arith.constant 0 : i32
    %c0_i32_0 = arith.constant 0 : i32
    %c0_i32_1 = arith.constant 0 : i32
    return %c0_i32, %c0_i32_0 : i32, i32
  }
  func.func @transform_28(%arg0: i32) -> (i32, i32) {
    %c0_i32 = arith.constant 0 : i32
    %c0_i32_0 = arith.constant 0 : i32
    %c0_i32_1 = arith.constant 0 : i32
    return %c0_i32, %c0_i32_0 : i32, i32
  }
  func.func @transform_29(%arg0: i32) -> (i32, i32, i32) {
    %c0_i32 = arith.constant 0 : i32
    %c0_i32_0 = arith.constant 0 : i32
    %c0_i32_1 = arith.constant 0 : i32
    return %arg0, %c0_i32, %c0_i32_0 : i32, i32, i32
  }
}

</mosaic_0001>

<llo_original>
// kernel: multibranch_forward.1
$region0: #{multibranch_forward.1}
  #allocation0 [shape = 'u32[]', space=smem, size = 0x4, offset = 0x4, fixed_abs, tag = 'smem constant byte address 0x4 - core index']
  #allocation1 [shape = 'u32[144,128]{1,0:T(1,128)}', space=vmem, size = 0x12000, scoped, tag = 'internal scratch']
  %s0 = inlined_call_operand.smem [shape: u32[30], index: -1, kind: input, shape index: {}]
  %s1 = sld [smem:[%s0]]
  %s2 = scalar_lea.smem %s0, 1
  %s3 = sld [smem:[%s2]]
  %s4 = scalar_lea.smem %s0, 2
  %s5 = sld [smem:[%s4]]
  %s6 = scalar_lea.smem %s0, 3
  %s7 = sld [smem:[%s6]]
  %s8 = scalar_lea.smem %s0, 4
  %s9 = sld [smem:[%s8]]
  %s10 = scalar_lea.smem %s0, 5
  %s11 = sld [smem:[%s10]]
  %s12 = scalar_lea.smem %s0, 6
  %s13 = sld [smem:[%s12]]
  %s14 = scalar_lea.smem %s0, 7
  %s15 = sld [smem:[%s14]]
  %s16 = scalar_lea.smem %s0, 8
  %s17 = sld [smem:[%s16]]
  %s18 = scalar_lea.smem %s0, 9
  %s19 = sld [smem:[%s18]]
  %s20 = scalar_lea.smem %s0, 10
  %s21 = sld [smem:[%s20]]
  %s22 = scalar_lea.smem %s0, 11
  %s23 = sld [smem:[%s22]]
  %s24 = scalar_lea.smem %s0, 12
  %s25 = sld [smem:[%s24]]
  %s26 = scalar_lea.smem %s0, 13
  %s27 = sld [smem:[%s26]]
  %s28 = scalar_lea.smem %s0, 14
  %s29 = sld [smem:[%s28]]
  %s30 = scalar_lea.smem %s0, 15
  %s31 = sld [smem:[%s30]]
  %s32 = scalar_lea.smem %s0, 16
  %s33 = sld [smem:[%s32]]
  %s34 = scalar_lea.smem %s0, 17
  %s35 = sld [smem:[%s34]]
  %s36 = scalar_lea.smem %s0, 18
  %s37 = sld [smem:[%s36]]
  %s38 = scalar_lea.smem %s0, 19
  %s39 = sld [smem:[%s38]]
  %s40 = scalar_lea.smem %s0, 20
  %s41 = sld [smem:[%s40]]
  %s42 = scalar_lea.smem %s0, 21
  %s43 = sld [smem:[%s42]]
  %s44 = scalar_lea.smem %s0, 22
  %s45 = sld [smem:[%s44]]
  %s46 = scalar_lea.smem %s0, 23
  %s47 = sld [smem:[%s46]]
  %s48 = scalar_lea.smem %s0, 24
  %s49 = sld [smem:[%s48]]
  %s50 = scalar_lea.smem %s0, 25
  %s51 = sld [smem:[%s50]]
  %s52 = scalar_lea.smem %s0, 26
  %s53 = sld [smem:[%s52]]
  %s54 = scalar_lea.smem %s0, 27
  %s55 = sld [smem:[%s54]]
  %s56 = scalar_lea.smem %s0, 28
  %s57 = sld [smem:[%s56]]
  %s58 = scalar_lea.smem %s0, 29
  %s59 = sld [smem:[%s58]]
  %s60 = sld [smem:[#allocation0]]
  $region149: #{multibranch_forward.1} parent=0
    _
  %s62 = ssub.s32 1, %s60
  %s63 = scalar_select 0, %s62, %s60
  loop: start=0, step=1, limit=4
  $region2: #{multibranch_forward.1} parent=0 // loop_pre_header
    _
  $region3: #{multibranch_forward.1} parent=0 // loop_header
    %s65 = sphi 0, %s69
    %p66 = scmp.ge.s32.totalorder %s65, 4
    %s75 = sphi 0, %s77
    %s78 = sphi 0, %s75
    %s79 = sphi 0, %s78
    %s95 = sphi 0, %s79
    %s101 = sphi 0, %s103
    %s104 = sphi 0, %s101
    %s105 = sphi 0, %s104
    %s121 = sphi 0, %s105
    %s125 = sphi 0, %s125
    %s127 = sphi 0, %s125
    %s128 = sphi 0, %s127
    %s142 = sphi 0, %s128
    %s146 = sphi 0, %s146
    %s148 = sphi 0, %s146
    %s149 = sphi 0, %s148
    %s163 = sphi 0, %s149
    %s167 = sphi 0, %s167
    %s169 = sphi 0, %s167
    %s170 = sphi 0, %s169
    %s184 = sphi 0, %s170
    %s188 = sphi 0, %s188
    %s190 = sphi 0, %s188
    %s191 = sphi 0, %s190
    %s205 = sphi 0, %s191
    %s209 = sphi 0, %s209
    %s211 = sphi 0, %s209
    %s212 = sphi 0, %s211
    %s226 = sphi 0, %s212
    %s230 = sphi 0, %s230
    %s232 = sphi 0, %s230
    %s233 = sphi 0, %s232
    %s247 = sphi 0, %s233
    %s251 = sphi 0, %s251
    %s253 = sphi 0, %s251
    %s254 = sphi 0, %s253
    %s268 = sphi 0, %s254
    %s272 = sphi 0, %s272
    %s274 = sphi 0, %s272
    %s275 = sphi 0, %s274
    %s289 = sphi 0, %s275
    %s293 = sphi 0, %s293
    %s295 = sphi 0, %s293
    %s296 = sphi 0, %s295
    %s310 = sphi 0, %s296
    %s314 = sphi 0, %s314
    %s316 = sphi 0, %s314
    %s317 = sphi 0, %s316
    %s331 = sphi 0, %s317
    %s335 = sphi 0, %s335
    %s337 = sphi 0, %s335
    %s338 = sphi 0, %s337
    %s352 = sphi 0, %s338
    %s356 = sphi 0, %s356
    %s358 = sphi 0, %s356
    %s359 = sphi 0, %s358
    %s373 = sphi 0, %s359
    %s377 = sphi 0, %s377
    %s379 = sphi 0, %s377
    %s380 = sphi 0, %s379
    %s394 = sphi 0, %s380
    %s398 = sphi 0, %s398
    %s400 = sphi 0, %s398
    %s401 = sphi 0, %s400
    %s415 = sphi 0, %s401
    %s419 = sphi 0, %s419
    %s421 = sphi 0, %s419
    %s422 = sphi 0, %s421
    %s436 = sphi 0, %s422
    %s440 = sphi 0, %s440
    %s442 = sphi 0, %s440
    %s443 = sphi 0, %s442
    %s457 = sphi 0, %s443
    %s461 = sphi 0, %s461
    %s463 = sphi 0, %s461
    %s464 = sphi 0, %s463
    %s478 = sphi 0, %s464
    %s482 = sphi 0, %s482
    %s484 = sphi 0, %s482
    %s485 = sphi 0, %s484
    %s499 = sphi 0, %s485
    %s503 = sphi 0, %s503
    %s505 = sphi 0, %s503
    %s506 = sphi 0, %s505
    %s520 = sphi 0, %s506
    %s524 = sphi 0, %s524
    %s526 = sphi 0, %s524
    %s527 = sphi 0, %s526
    %s541 = sphi 0, %s527
    %s545 = sphi 0, %s545
    %s547 = sphi 0, %s545
    %s548 = sphi 0, %s547
    %s562 = sphi 0, %s548
    %s566 = sphi 0, %s566
    %s568 = sphi 0, %s566
    %s569 = sphi 0, %s568
    %s583 = sphi 0, %s569
    %s587 = sphi 0, %s587
    %s589 = sphi 0, %s587
    %s590 = sphi 0, %s589
    %s604 = sphi 0, %s590
    %s608 = sphi 0, %s608
    %s610 = sphi 0, %s608
    %s611 = sphi 0, %s610
    %s625 = sphi 0, %s611
    %s629 = sphi 0, %s629
    %s631 = sphi 0, %s629
    %s632 = sphi 0, %s631
    %s646 = sphi 0, %s632
    %s650 = sphi 0, %s650
    %s652 = sphi 0, %s650
    %s653 = sphi 0, %s652
    %s667 = sphi 0, %s653
    %s671 = sphi 0, %s671
    %s673 = sphi 0, %s671
    %s674 = sphi 0, %s673
    %s688 = sphi 0, %s674
    %s694 = sphi 0, %s696
    %s697 = sphi 0, %s694
    %s698 = sphi 0, %s697
    %s714 = sphi 0, %s698
  $region4: #{multibranch_forward.1} parent=0 // loop_header_branch
    %68 = sbr.rel (%p66) target = $region8
  $region5: #{multibranch_forward.1} parent=0 // loop_body
    %s70 = ssub.s32 %s65, 1
    %s71 = ssub.s32 %s65, 2
    %s72 = sadd.s32 %s65, 1
    %s73 = ssub.s32 %s65, %s72
    %p74 = scmp.eq.s32.totalorder %s73, 0
    %s76 = sadd.s32 %s75, 1
    %s77 = scalar_select %p74, %s75, %s76
    %p80 = pneg %p74
    %p81 = scmp.eq.s32.totalorder %s65, 1
    %p82 = por %p80, %p81
    %p83 = scmp.ne.s32.totalorder %s75, %s78
    %p84 = scmp.eq.s32.totalorder %s65, 0
    %p85 = por %p83, %p84
    %p86 = scmp.ne.s32.totalorder %s75, %s78
    %p87 = scmp.eq.s32.totalorder %s70, 1
    %p88 = por %p86, %p87
    %p89 = scmp.ne.s32.totalorder %s78, %s79
    %p90 = scmp.eq.s32.totalorder %s70, 0
    %p91 = por %p89, %p90
    %p92 = scmp.ne.s32.totalorder %s78, %s79
    %p93 = scmp.eq.s32.totalorder %s71, 1
    %p94 = por %p92, %p93
    %p96 = scmp.ne.s32.totalorder %s79, %s95
    %p97 = scmp.eq.s32.totalorder %s71, 0
    %p98 = por %p96, %p97
    %s99 = ssub.s32 %s65, %s72
    %p100 = scmp.eq.s32.totalorder %s99, 0
    %s102 = sadd.s32 %s101, 1
    %s103 = scalar_select %p100, %s101, %s102
    %p106 = pneg %p100
    %p107 = scmp.eq.s32.totalorder %s65, 1
    %p108 = por %p106, %p107
    %p109 = scmp.ne.s32.totalorder %s101, %s104
    %p110 = scmp.eq.s32.totalorder %s65, 0
    %p111 = por %p109, %p110
    %p112 = scmp.ne.s32.totalorder %s101, %s104
    %p113 = scmp.eq.s32.totalorder %s70, 1
    %p114 = por %p112, %p113
    %p115 = scmp.ne.s32.totalorder %s104, %s105
    %p116 = scmp.eq.s32.totalorder %s70, 0
    %p117 = por %p115, %p116
    %p118 = scmp.ne.s32.totalorder %s104, %s105
    %p119 = scmp.eq.s32.totalorder %s71, 1
    %p120 = por %p118, %p119
    %p122 = scmp.ne.s32.totalorder %s105, %s121
    %p123 = scmp.eq.s32.totalorder %s71, 0
    %p124 = por %p122, %p123
    %s126 = sadd.s32 %s125, 1
    %p129 = scmp.eq.s32.totalorder %s65, 1
    %p130 = scmp.ne.s32.totalorder %s125, %s127
    %p131 = scmp.eq.s32.totalorder %s65, 0
    %p132 = por %p130, %p131
    %p133 = scmp.ne.s32.totalorder %s125, %s127
    %p134 = scmp.eq.s32.totalorder %s70, 1
    %p135 = por %p133, %p134
    %p136 = scmp.ne.s32.totalorder %s127, %s128
    %p137 = scmp.eq.s32.totalorder %s70, 0
    %p138 = por %p136, %p137
    %p139 = scmp.ne.s32.totalorder %s127, %s128
    %p140 = scmp.eq.s32.totalorder %s71, 1
    %p141 = por %p139, %p140
    %p143 = scmp.ne.s32.totalorder %s128, %s142
    %p144 = scmp.eq.s32.totalorder %s71, 0
    %p145 = por %p143, %p144
    %s147 = sadd.s32 %s146, 1
    %p150 = scmp.eq.s32.totalorder %s65, 1
    %p151 = scmp.ne.s32.totalorder %s146, %s148
    %p152 = scmp.eq.s32.totalorder %s65, 0
    %p153 = por %p151, %p152
    %p154 = scmp.ne.s32.totalorder %s146, %s148
    %p155 = scmp.eq.s32.totalorder %s70, 1
    %p156 = por %p154, %p155
    %p157 = scmp.ne.s32.totalorder %s148, %s149
    %p158 = scmp.eq.s32.totalorder %s70, 0
    %p159 = por %p157, %p158
    %p160 = scmp.ne.s32.totalorder %s148, %s149
    %p161 = scmp.eq.s32.totalorder %s71, 1
    %p162 = por %p160, %p161
    %p164 = scmp.ne.s32.totalorder %s149, %s163
    %p165 = scmp.eq.s32.totalorder %s71, 0
    %p166 = por %p164, %p165
    %s168 = sadd.s32 %s167, 1
    %p171 = scmp.eq.s32.totalorder %s65, 1
    %p172 = scmp.ne.s32.totalorder %s167, %s169
    %p173 = scmp.eq.s32.totalorder %s65, 0
    %p174 = por %p172, %p173
    %p175 = scmp.ne.s32.totalorder %s167, %s169
    %p176 = scmp.eq.s32.totalorder %s70, 1
    %p177 = por %p175, %p176
    %p178 = scmp.ne.s32.totalorder %s169, %s170
    %p179 = scmp.eq.s32.totalorder %s70, 0
    %p180 = por %p178, %p179
    %p181 = scmp.ne.s32.totalorder %s169, %s170
    %p182 = scmp.eq.s32.totalorder %s71, 1
    %p183 = por %p181, %p182
    %p185 = scmp.ne.s32.totalorder %s170, %s184
    %p186 = scmp.eq.s32.totalorder %s71, 0
    %p187 = por %p185, %p186
    %s189 = sadd.s32 %s188, 1
    %p192 = scmp.eq.s32.totalorder %s65, 1
    %p193 = scmp.ne.s32.totalorder %s188, %s190
    %p194 = scmp.eq.s32.totalorder %s65, 0
    %p195 = por %p193, %p194
    %p196 = scmp.ne.s32.totalorder %s188, %s190
    %p197 = scmp.eq.s32.totalorder %s70, 1
    %p198 = por %p196, %p197
    %p199 = scmp.ne.s32.totalorder %s190, %s191
    %p200 = scmp.eq.s32.totalorder %s70, 0
    %p201 = por %p199, %p200
    %p202 = scmp.ne.s32.totalorder %s190, %s191
    %p203 = scmp.eq.s32.totalorder %s71, 1
    %p204 = por %p202, %p203
    %p206 = scmp.ne.s32.totalorder %s191, %s205
    %p207 = scmp.eq.s32.totalorder %s71, 0
    %p208 = por %p206, %p207
    %s210 = sadd.s32 %s209, 1
    %p213 = scmp.eq.s32.totalorder %s65, 1
    %p214 = scmp.ne.s32.totalorder %s209, %s211
    %p215 = scmp.eq.s32.totalorder %s65, 0
    %p216 = por %p214, %p215
    %p217 = scmp.ne.s32.totalorder %s209, %s211
    %p218 = scmp.eq.s32.totalorder %s70, 1
    %p219 = por %p217, %p218
    %p220 = scmp.ne.s32.totalorder %s211, %s212
    %p221 = scmp.eq.s32.totalorder %s70, 0
    %p222 = por %p220, %p221
    %p223 = scmp.ne.s32.totalorder %s211, %s212
    %p224 = scmp.eq.s32.totalorder %s71, 1
    %p225 = por %p223, %p224
    %p227 = scmp.ne.s32.totalorder %s212, %s226
    %p228 = scmp.eq.s32.totalorder %s71, 0
    %p229 = por %p227, %p228
    %s231 = sadd.s32 %s230, 1
    %p234 = scmp.eq.s32.totalorder %s65, 1
    %p235 = scmp.ne.s32.totalorder %s230, %s232
    %p236 = scmp.eq.s32.totalorder %s65, 0
    %p237 = por %p235, %p236
    %p238 = scmp.ne.s32.totalorder %s230, %s232
    %p239 = scmp.eq.s32.totalorder %s70, 1
    %p240 = por %p238, %p239
    %p241 = scmp.ne.s32.totalorder %s232, %s233
    %p242 = scmp.eq.s32.totalorder %s70, 0
    %p243 = por %p241, %p242
    %p244 = scmp.ne.s32.totalorder %s232, %s233
    %p245 = scmp.eq.s32.totalorder %s71, 1
    %p246 = por %p244, %p245
    %p248 = scmp.ne.s32.totalorder %s233, %s247
    %p249 = scmp.eq.s32.totalorder %s71, 0
    %p250 = por %p248, %p249
    %s252 = sadd.s32 %s251, 1
    %p255 = scmp.eq.s32.totalorder %s65, 1
    %p256 = scmp.ne.s32.totalorder %s251, %s253
    %p257 = scmp.eq.s32.totalorder %s65, 0
    %p258 = por %p256, %p257
    %p259 = scmp.ne.s32.totalorder %s251, %s253
    %p260 = scmp.eq.s32.totalorder %s70, 1
    %p261 = por %p259, %p260
    %p262 = scmp.ne.s32.totalorder %s253, %s254
    %p263 = scmp.eq.s32.totalorder %s70, 0
    %p264 = por %p262, %p263
    %p265 = scmp.ne.s32.totalorder %s253, %s254
    %p266 = scmp.eq.s32.totalorder %s71, 1
    %p267 = por %p265, %p266
    %p269 = scmp.ne.s32.totalorder %s254, %s268
    %p270 = scmp.eq.s32.totalorder %s71, 0
    %p271 = por %p269, %p270
    %s273 = sadd.s32 %s272, 1
    %p276 = scmp.eq.s32.totalorder %s65, 1
    %p277 = scmp.ne.s32.totalorder %s272, %s274
    %p278 = scmp.eq.s32.totalorder %s65, 0
    %p279 = por %p277, %p278
    %p280 = scmp.ne.s32.totalorder %s272, %s274
    %p281 = scmp.eq.s32.totalorder %s70, 1
    %p282 = por %p280, %p281
    %p283 = scmp.ne.s32.totalorder %s274, %s275
    %p284 = scmp.eq.s32.totalorder %s70, 0
    %p285 = por %p283, %p284
    %p286 = scmp.ne.s32.totalorder %s274, %s275
    %p287 = scmp.eq.s32.totalorder %s71, 1
    %p288 = por %p286, %p287
    %p290 = scmp.ne.s32.totalorder %s275, %s289
    %p291 = scmp.eq.s32.totalorder %s71, 0
    %p292 = por %p290, %p291
    %s294 = sadd.s32 %s293, 1
    %p297 = scmp.eq.s32.totalorder %s65, 1
    %p298 = scmp.ne.s32.totalorder %s293, %s295
    %p299 = scmp.eq.s32.totalorder %s65, 0
    %p300 = por %p298, %p299
    %p301 = scmp.ne.s32.totalorder %s293, %s295
    %p302 = scmp.eq.s32.totalorder %s70, 1
    %p303 = por %p301, %p302
    %p304 = scmp.ne.s32.totalorder %s295, %s296
    %p305 = scmp.eq.s32.totalorder %s70, 0
    %p306 = por %p304, %p305
    %p307 = scmp.ne.s32.totalorder %s295, %s296
    %p308 = scmp.eq.s32.totalorder %s71, 1
    %p309 = por %p307, %p308
    %p311 = scmp.ne.s32.totalorder %s296, %s310
    %p312 = scmp.eq.s32.totalorder %s71, 0
    %p313 = por %p311, %p312
    %s315 = sadd.s32 %s314, 1
    %p318 = scmp.eq.s32.totalorder %s65, 1
    %p319 = scmp.ne.s32.totalorder %s314, %s316
    %p320 = scmp.eq.s32.totalorder %s65, 0
    %p321 = por %p319, %p320
    %p322 = scmp.ne.s32.totalorder %s314, %s316
    %p323 = scmp.eq.s32.totalorder %s70, 1
    %p324 = por %p322, %p323
    %p325 = scmp.ne.s32.totalorder %s316, %s317
    %p326 = scmp.eq.s32.totalorder %s70, 0
    %p327 = por %p325, %p326
    %p328 = scmp.ne.s32.totalorder %s316, %s317
    %p329 = scmp.eq.s32.totalorder %s71, 1
    %p330 = por %p328, %p329
    %p332 = scmp.ne.s32.totalorder %s317, %s331
    %p333 = scmp.eq.s32.totalorder %s71, 0
    %p334 = por %p332, %p333
    %s336 = sadd.s32 %s335, 1
    %p339 = scmp.eq.s32.totalorder %s65, 1
    %p340 = scmp.ne.s32.totalorder %s335, %s337
    %p341 = scmp.eq.s32.totalorder %s65, 0
    %p342 = por %p340, %p341
    %p343 = scmp.ne.s32.totalorder %s335, %s337
    %p344 = scmp.eq.s32.totalorder %s70, 1
    %p345 = por %p343, %p344
    %p346 = scmp.ne.s32.totalorder %s337, %s338
    %p347 = scmp.eq.s32.totalorder %s70, 0
    %p348 = por %p346, %p347
    %p349 = scmp.ne.s32.totalorder %s337, %s338
    %p350 = scmp.eq.s32.totalorder %s71, 1
    %p351 = por %p349, %p350
    %p353 = scmp.ne.s32.totalorder %s338, %s352
    %p354 = scmp.eq.s32.totalorder %s71, 0
    %p355 = por %p353, %p354
    %s357 = sadd.s32 %s356, 1
    %p360 = scmp.eq.s32.totalorder %s65, 1
    %p361 = scmp.ne.s32.totalorder %s356, %s358
    %p362 = scmp.eq.s32.totalorder %s65, 0
    %p363 = por %p361, %p362
    %p364 = scmp.ne.s32.totalorder %s356, %s358
    %p365 = scmp.eq.s32.totalorder %s70, 1
    %p366 = por %p364, %p365
    %p367 = scmp.ne.s32.totalorder %s358, %s359
    %p368 = scmp.eq.s32.totalorder %s70, 0
    %p369 = por %p367, %p368
    %p370 = scmp.ne.s32.totalorder %s358, %s359
    %p371 = scmp.eq.s32.totalorder %s71, 1
    %p372 = por %p370, %p371
    %p374 = scmp.ne.s32.totalorder %s359, %s373
    %p375 = scmp.eq.s32.totalorder %s71, 0
    %p376 = por %p374, %p375
    %s378 = sadd.s32 %s377, 1
    %p381 = scmp.eq.s32.totalorder %s65, 1
    %p382 = scmp.ne.s32.totalorder %s377, %s379
    %p383 = scmp.eq.s32.totalorder %s65, 0
    %p384 = por %p382, %p383
    %p385 = scmp.ne.s32.totalorder %s377, %s379
    %p386 = scmp.eq.s32.totalorder %s70, 1
    %p387 = por %p385, %p386
    %p388 = scmp.ne.s32.totalorder %s379, %s380
    %p389 = scmp.eq.s32.totalorder %s70, 0
    %p390 = por %p388, %p389
    %p391 = scmp.ne.s32.totalorder %s379, %s380
    %p392 = scmp.eq.s32.totalorder %s71, 1
    %p393 = por %p391, %p392
    %p395 = scmp.ne.s32.totalorder %s380, %s394
    %p396 = scmp.eq.s32.totalorder %s71, 0
    %p397 = por %p395, %p396
    %s399 = sadd.s32 %s398, 1
    %p402 = scmp.eq.s32.totalorder %s65, 1
    %p403 = scmp.ne.s32.totalorder %s398, %s400
    %p404 = scmp.eq.s32.totalorder %s65, 0
    %p405 = por %p403, %p404
    %p406 = scmp.ne.s32.totalorder %s398, %s400
    %p407 = scmp.eq.s32.totalorder %s70, 1
    %p408 = por %p406, %p407
    %p409 = scmp.ne.s32.totalorder %s400, %s401
    %p410 = scmp.eq.s32.totalorder %s70, 0
    %p411 = por %p409, %p410
    %p412 = scmp.ne.s32.totalorder %s400, %s401
    %p413 = scmp.eq.s32.totalorder %s71, 1
    %p414 = por %p412, %p413
    %p416 = scmp.ne.s32.totalorder %s401, %s415
    %p417 = scmp.eq.s32.totalorder %s71, 0
    %p418 = por %p416, %p417
    %s420 = sadd.s32 %s419, 1
    %p423 = scmp.eq.s32.totalorder %s65, 1
    %p424 = scmp.ne.s32.totalorder %s419, %s421
    %p425 = scmp.eq.s32.totalorder %s65, 0
    %p426 = por %p424, %p425
    %p427 = scmp.ne.s32.totalorder %s419, %s421
    %p428 = scmp.eq.s32.totalorder %s70, 1
    %p429 = por %p427, %p428
    %p430 = scmp.ne.s32.totalorder %s421, %s422
    %p431 = scmp.eq.s32.totalorder %s70, 0
    %p432 = por %p430, %p431
    %p433 = scmp.ne.s32.totalorder %s421, %s422
    %p434 = scmp.eq.s32.totalorder %s71, 1
    %p435 = por %p433, %p434
    %p437 = scmp.ne.s32.totalorder %s422, %s436
    %p438 = scmp.eq.s32.totalorder %s71, 0
    %p439 = por %p437, %p438
    %s441 = sadd.s32 %s440, 1
    %p444 = scmp.eq.s32.totalorder %s65, 1
    %p445 = scmp.ne.s32.totalorder %s440, %s442
    %p446 = scmp.eq.s32.totalorder %s65, 0
    %p447 = por %p445, %p446
    %p448 = scmp.ne.s32.totalorder %s440, %s442
    %p449 = scmp.eq.s32.totalorder %s70, 1
    %p450 = por %p448, %p449
    %p451 = scmp.ne.s32.totalorder %s442, %s443
    %p452 = scmp.eq.s32.totalorder %s70, 0
    %p453 = por %p451, %p452
    %p454 = scmp.ne.s32.totalorder %s442, %s443
    %p455 = scmp.eq.s32.totalorder %s71, 1
    %p456 = por %p454, %p455
    %p458 = scmp.ne.s32.totalorder %s443, %s457
    %p459 = scmp.eq.s32.totalorder %s71, 0
    %p460 = por %p458, %p459
    %s462 = sadd.s32 %s461, 1
    %p465 = scmp.eq.s32.totalorder %s65, 1
    %p466 = scmp.ne.s32.totalorder %s461, %s463
    %p467 = scmp.eq.s32.totalorder %s65, 0
    %p468 = por %p466, %p467
    %p469 = scmp.ne.s32.totalorder %s461, %s463
    %p470 = scmp.eq.s32.totalorder %s70, 1
    %p471 = por %p469, %p470
    %p472 = scmp.ne.s32.totalorder %s463, %s464
    %p473 = scmp.eq.s32.totalorder %s70, 0
    %p474 = por %p472, %p473
    %p475 = scmp.ne.s32.totalorder %s463, %s464
    %p476 = scmp.eq.s32.totalorder %s71, 1
    %p477 = por %p475, %p476
    %p479 = scmp.ne.s32.totalorder %s464, %s478
    %p480 = scmp.eq.s32.totalorder %s71, 0
    %p481 = por %p479, %p480
    %s483 = sadd.s32 %s482, 1
    %p486 = scmp.eq.s32.totalorder %s65, 1
    %p487 = scmp.ne.s32.totalorder %s482, %s484
    %p488 = scmp.eq.s32.totalorder %s65, 0
    %p489 = por %p487, %p488
    %p490 = scmp.ne.s32.totalorder %s482, %s484
    %p491 = scmp.eq.s32.totalorder %s70, 1
    %p492 = por %p490, %p491
    %p493 = scmp.ne.s32.totalorder %s484, %s485
    %p494 = scmp.eq.s32.totalorder %s70, 0
    %p495 = por %p493, %p494
    %p496 = scmp.ne.s32.totalorder %s484, %s485
    %p497 = scmp.eq.s32.totalorder %s71, 1
    %p498 = por %p496, %p497
    %p500 = scmp.ne.s32.totalorder %s485, %s499
    %p501 = scmp.eq.s32.totalorder %s71, 0
    %p502 = por %p500, %p501
    %s504 = sadd.s32 %s503, 1
    %p507 = scmp.eq.s32.totalorder %s65, 1
    %p508 = scmp.ne.s32.totalorder %s503, %s505
    %p509 = scmp.eq.s32.totalorder %s65, 0
    %p510 = por %p508, %p509
    %p511 = scmp.ne.s32.totalorder %s503, %s505
    %p512 = scmp.eq.s32.totalorder %s70, 1
    %p513 = por %p511, %p512
    %p514 = scmp.ne.s32.totalorder %s505, %s506
    %p515 = scmp.eq.s32.totalorder %s70, 0
    %p516 = por %p514, %p515
    %p517 = scmp.ne.s32.totalorder %s505, %s506
    %p518 = scmp.eq.s32.totalorder %s71, 1
    %p519 = por %p517, %p518
    %p521 = scmp.ne.s32.totalorder %s506, %s520
    %p522 = scmp.eq.s32.totalorder %s71, 0
    %p523 = por %p521, %p522
    %s525 = sadd.s32 %s524, 1
    %p528 = scmp.eq.s32.totalorder %s65, 1
    %p529 = scmp.ne.s32.totalorder %s524, %s526
    %p530 = scmp.eq.s32.totalorder %s65, 0
    %p531 = por %p529, %p530
    %p532 = scmp.ne.s32.totalorder %s524, %s526
    %p533 = scmp.eq.s32.totalorder %s70, 1
    %p534 = por %p532, %p533
    %p535 = scmp.ne.s32.totalorder %s526, %s527
    %p536 = scmp.eq.s32.totalorder %s70, 0
    %p537 = por %p535, %p536
    %p538 = scmp.ne.s32.totalorder %s526, %s527
    %p539 = scmp.eq.s32.totalorder %s71, 1
    %p540 = por %p538, %p539
    %p542 = scmp.ne.s32.totalorder %s527, %s541
    %p543 = scmp.eq.s32.totalorder %s71, 0
    %p544 = por %p542, %p543
    %s546 = sadd.s32 %s545, 1
    %p549 = scmp.eq.s32.totalorder %s65, 1
    %p550 = scmp.ne.s32.totalorder %s545, %s547
    %p551 = scmp.eq.s32.totalorder %s65, 0
    %p552 = por %p550, %p551
    %p553 = scmp.ne.s32.totalorder %s545, %s547
    %p554 = scmp.eq.s32.totalorder %s70, 1
    %p555 = por %p553, %p554
    %p556 = scmp.ne.s32.totalorder %s547, %s548
    %p557 = scmp.eq.s32.totalorder %s70, 0
    %p558 = por %p556, %p557
    %p559 = scmp.ne.s32.totalorder %s547, %s548
    %p560 = scmp.eq.s32.totalorder %s71, 1
    %p561 = por %p559, %p560
    %p563 = scmp.ne.s32.totalorder %s548, %s562
    %p564 = scmp.eq.s32.totalorder %s71, 0
    %p565 = por %p563, %p564
    %s567 = sadd.s32 %s566, 1
    %p570 = scmp.eq.s32.totalorder %s65, 1
    %p571 = scmp.ne.s32.totalorder %s566, %s568
    %p572 = scmp.eq.s32.totalorder %s65, 0
    %p573 = por %p571, %p572
    %p574 = scmp.ne.s32.totalorder %s566, %s568
    %p575 = scmp.eq.s32.totalorder %s70, 1
    %p576 = por %p574, %p575
    %p577 = scmp.ne.s32.totalorder %s568, %s569
    %p578 = scmp.eq.s32.totalorder %s70, 0
    %p579 = por %p577, %p578
    %p580 = scmp.ne.s32.totalorder %s568, %s569
    %p581 = scmp.eq.s32.totalorder %s71, 1
    %p582 = por %p580, %p581
    %p584 = scmp.ne.s32.totalorder %s569, %s583
    %p585 = scmp.eq.s32.totalorder %s71, 0
    %p586 = por %p584, %p585
    %s588 = sadd.s32 %s587, 1
    %p591 = scmp.eq.s32.totalorder %s65, 1
    %p592 = scmp.ne.s32.totalorder %s587, %s589
    %p593 = scmp.eq.s32.totalorder %s65, 0
    %p594 = por %p592, %p593
    %p595 = scmp.ne.s32.totalorder %s587, %s589
    %p596 = scmp.eq.s32.totalorder %s70, 1
    %p597 = por %p595, %p596
    %p598 = scmp.ne.s32.totalorder %s589, %s590
    %p599 = scmp.eq.s32.totalorder %s70, 0
    %p600 = por %p598, %p599
    %p601 = scmp.ne.s32.totalorder %s589, %s590
    %p602 = scmp.eq.s32.totalorder %s71, 1
    %p603 = por %p601, %p602
    %p605 = scmp.ne.s32.totalorder %s590, %s604
    %p606 = scmp.eq.s32.totalorder %s71, 0
    %p607 = por %p605, %p606
    %s609 = sadd.s32 %s608, 1
    %p612 = scmp.eq.s32.totalorder %s65, 1
    %p613 = scmp.ne.s32.totalorder %s608, %s610
    %p614 = scmp.eq.s32.totalorder %s65, 0
    %p615 = por %p613, %p614
    %p616 = scmp.ne.s32.totalorder %s608, %s610
    %p617 = scmp.eq.s32.totalorder %s70, 1
    %p618 = por %p616, %p617
    %p619 = scmp.ne.s32.totalorder %s610, %s611
    %p620 = scmp.eq.s32.totalorder %s70, 0
    %p621 = por %p619, %p620
    %p622 = scmp.ne.s32.totalorder %s610, %s611
    %p623 = scmp.eq.s32.totalorder %s71, 1
    %p624 = por %p622, %p623
    %p626 = scmp.ne.s32.totalorder %s611, %s625
    %p627 = scmp.eq.s32.totalorder %s71, 0
    %p628 = por %p626, %p627
    %s630 = sadd.s32 %s629, 1
    %p633 = scmp.eq.s32.totalorder %s65, 1
    %p634 = scmp.ne.s32.totalorder %s629, %s631
    %p635 = scmp.eq.s32.totalorder %s65, 0
    %p636 = por %p634, %p635
    %p637 = scmp.ne.s32.totalorder %s629, %s631
    %p638 = scmp.eq.s32.totalorder %s70, 1
    %p639 = por %p637, %p638
    %p640 = scmp.ne.s32.totalorder %s631, %s632
    %p641 = scmp.eq.s32.totalorder %s70, 0
    %p642 = por %p640, %p641
    %p643 = scmp.ne.s32.totalorder %s631, %s632
    %p644 = scmp.eq.s32.totalorder %s71, 1
    %p645 = por %p643, %p644
    %p647 = scmp.ne.s32.totalorder %s632, %s646
    %p648 = scmp.eq.s32.totalorder %s71, 0
    %p649 = por %p647, %p648
    %s651 = sadd.s32 %s650, 1
    %p654 = scmp.eq.s32.totalorder %s65, 1
    %p655 = scmp.ne.s32.totalorder %s650, %s652
    %p656 = scmp.eq.s32.totalorder %s65, 0
    %p657 = por %p655, %p656
    %p658 = scmp.ne.s32.totalorder %s650, %s652
    %p659 = scmp.eq.s32.totalorder %s70, 1
    %p660 = por %p658, %p659
    %p661 = scmp.ne.s32.totalorder %s652, %s653
    %p662 = scmp.eq.s32.totalorder %s70, 0
    %p663 = por %p661, %p662
    %p664 = scmp.ne.s32.totalorder %s652, %s653
    %p665 = scmp.eq.s32.totalorder %s71, 1
    %p666 = por %p664, %p665
    %p668 = scmp.ne.s32.totalorder %s653, %s667
    %p669 = scmp.eq.s32.totalorder %s71, 0
    %p670 = por %p668, %p669
    %s672 = sadd.s32 %s671, 1
    %p675 = scmp.eq.s32.totalorder %s65, 1
    %p676 = scmp.ne.s32.totalorder %s671, %s673
    %p677 = scmp.eq.s32.totalorder %s65, 0
    %p678 = por %p676, %p677
    %p679 = scmp.ne.s32.totalorder %s671, %s673
    %p680 = scmp.eq.s32.totalorder %s70, 1
    %p681 = por %p679, %p680
    %p682 = scmp.ne.s32.totalorder %s673, %s674
    %p683 = scmp.eq.s32.totalorder %s70, 0
    %p684 = por %p682, %p683
    %p685 = scmp.ne.s32.totalorder %s673, %s674
    %p686 = scmp.eq.s32.totalorder %s71, 1
    %p687 = por %p685, %p686
    %p689 = scmp.ne.s32.totalorder %s674, %s688
    %p690 = scmp.eq.s32.totalorder %s71, 0
    %p691 = por %p689, %p690
    %s692 = ssub.s32 %s65, %s72
    %p693 = scmp.eq.s32.totalorder %s692, 0
    %s695 = sadd.s32 %s694, 1
    %s696 = scalar_select %p693, %s694, %s695
    %p699 = pneg %p693
    %p700 = scmp.eq.s32.totalorder %s65, 1
    %p701 = por %p699, %p700
    %p702 = scmp.ne.s32.totalorder %s694, %s697
    %p703 = scmp.eq.s32.totalorder %s65, 0
    %p704 = por %p702, %p703
    %p705 = scmp.ne.s32.totalorder %s694, %s697
    %p706 = scmp.eq.s32.totalorder %s70, 1
    %p707 = por %p705, %p706
    %p708 = scmp.ne.s32.totalorder %s697, %s698
    %p709 = scmp.eq.s32.totalorder %s70, 0
    %p710 = por %p708, %p709
    %p711 = scmp.ne.s32.totalorder %s697, %s698
    %p712 = scmp.eq.s32.totalorder %s71, 1
    %p713 = por %p711, %p712
    %p715 = scmp.ne.s32.totalorder %s698, %s714
    %p716 = scmp.eq.s32.totalorder %s71, 0
    %p717 = por %p715, %p716
    %p718 = scmp.le.s32.totalorder 1, %s65
    %p719 = scmp.lt.s32.totalorder %s65, 3
    %p720 = pnand %p718, %p719
    %p721 = pneg %p720
    // Predicated region
    $region9: #{multibranch_forward.1} parent=5 // pred_check
      _
    $region10: #{multibranch_forward.1} parent=5 // pred_check_branch
      %723 = sbr.rel (%p720) target = $region12
    $region11: #{multibranch_forward.1} parent=5 // pred_region
      %s724 = ssub.s32 %s65, 1
      // Predicated region
      $region13: #{multibranch_forward.1} parent=11 // pred_check
        %p725 = pneg %p138
      $region14: #{multibranch_forward.1} parent=11 // pred_check_branch
        %727 = sbr.rel (%p725) target = $region16
      $region15: #{multibranch_forward.1} parent=11 // pred_region
        _
      $region16: #{multibranch_forward.1} parent=11 // pred_fallthru
        _
      // Predicated region
      $region17: #{multibranch_forward.1} parent=11 // pred_check
        %p728 = pneg %p159
      $region18: #{multibranch_forward.1} parent=11 // pred_check_branch
        %730 = sbr.rel (%p728) target = $region20
      $region19: #{multibranch_forward.1} parent=11 // pred_region
        _
      $region20: #{multibranch_forward.1} parent=11 // pred_fallthru
        _
      // Predicated region
      $region21: #{multibranch_forward.1} parent=11 // pred_check
        %p731 = pneg %p180
      $region22: #{multibranch_forward.1} parent=11 // pred_check_branch
        %733 = sbr.rel (%p731) target = $region24
      $region23: #{multibranch_forward.1} parent=11 // pred_region
        _
      $region24: #{multibranch_forward.1} parent=11 // pred_fallthru
        _
      // Predicated region
      $region25: #{multibranch_forward.1} parent=11 // pred_check
        %p734 = pneg %p201
      $region26: #{multibranch_forward.1} parent=11 // pred_check_branch
        %736 = sbr.rel (%p734) target = $region28
      $region27: #{multibranch_forward.1} parent=11 // pred_region
        _
      $region28: #{multibranch_forward.1} parent=11 // pred_fallthru
        _
      // Predicated region
      $region29: #{multibranch_forward.1} parent=11 // pred_check
        %p737 = pneg %p222
      $region30: #{multibranch_forward.1} parent=11 // pred_check_branch
        %739 = sbr.rel (%p737) target = $region32
      $region31: #{multibranch_forward.1} parent=11 // pred_region
        _
      $region32: #{multibranch_forward.1} parent=11 // pred_fallthru
        _
      // Predicated region
      $region33: #{multibranch_forward.1} parent=11 // pred_check
        %p740 = pneg %p243
      $region34: #{multibranch_forward.1} parent=11 // pred_check_branch
        %742 = sbr.rel (%p740) target = $region36
      $region35: #{multibranch_forward.1} parent=11 // pred_region
        _
      $region36: #{multibranch_forward.1} parent=11 // pred_fallthru
        _
      // Predicated region
      $region37: #{multibranch_forward.1} parent=11 // pred_check
        %p743 = pneg %p264
      $region38: #{multibranch_forward.1} parent=11 // pred_check_branch
        %745 = sbr.rel (%p743) target = $region40
      $region39: #{multibranch_forward.1} parent=11 // pred_region
        _
      $region40: #{multibranch_forward.1} parent=11 // pred_fallthru
        _
      // Predicated region
      $region41: #{multibranch_forward.1} parent=11 // pred_check
        %p746 = pneg %p285
      $region42: #{multibranch_forward.1} parent=11 // pred_check_branch
        %748 = sbr.rel (%p746) target = $region44
      $region43: #{multibranch_forward.1} parent=11 // pred_region
        _
      $region44: #{multibranch_forward.1} parent=11 // pred_fallthru
        _
      // Predicated region
      $region45: #{multibranch_forward.1} parent=11 // pred_check
        %p749 = pneg %p306
      $region46: #{multibranch_forward.1} parent=11 // pred_check_branch
        %751 = sbr.rel (%p749) target = $region48
      $region47: #{multibranch_forward.1} parent=11 // pred_region
        _
      $region48: #{multibranch_forward.1} parent=11 // pred_fallthru
        _
      // Predicated region
      $region49: #{multibranch_forward.1} parent=11 // pred_check
        %p752 = pneg %p327
      $region50: #{multibranch_forward.1} parent=11 // pred_check_branch
        %754 = sbr.rel (%p752) target = $region52
      $region51: #{multibranch_forward.1} parent=11 // pred_region
        _
      $region52: #{multibranch_forward.1} parent=11 // pred_fallthru
        _
      // Predicated region
      $region53: #{multibranch_forward.1} parent=11 // pred_check
        %p755 = pneg %p348
      $region54: #{multibranch_forward.1} parent=11 // pred_check_branch
        %757 = sbr.rel (%p755) target = $region56
      $region55: #{multibranch_forward.1} parent=11 // pred_region
        _
      $region56: #{multibranch_forward.1} parent=11 // pred_fallthru
        _
      // Predicated region
      $region57: #{multibranch_forward.1} parent=11 // pred_check
        %p758 = pneg %p369
      $region58: #{multibranch_forward.1} parent=11 // pred_check_branch
        %760 = sbr.rel (%p758) target = $region60
      $region59: #{multibranch_forward.1} parent=11 // pred_region
        _
      $region60: #{multibranch_forward.1} parent=11 // pred_fallthru
        _
      // Predicated region
      $region61: #{multibranch_forward.1} parent=11 // pred_check
        %p761 = pneg %p390
      $region62: #{multibranch_forward.1} parent=11 // pred_check_branch
        %763 = sbr.rel (%p761) target = $region64
      $region63: #{multibranch_forward.1} parent=11 // pred_region
        _
      $region64: #{multibranch_forward.1} parent=11 // pred_fallthru
        _
      // Predicated region
      $region65: #{multibranch_forward.1} parent=11 // pred_check
        %p764 = pneg %p411
      $region66: #{multibranch_forward.1} parent=11 // pred_check_branch
        %766 = sbr.rel (%p764) target = $region68
      $region67: #{multibranch_forward.1} parent=11 // pred_region
        _
      $region68: #{multibranch_forward.1} parent=11 // pred_fallthru
        _
      // Predicated region
      $region69: #{multibranch_forward.1} parent=11 // pred_check
        %p767 = pneg %p432
      $region70: #{multibranch_forward.1} parent=11 // pred_check_branch
        %769 = sbr.rel (%p767) target = $region72
      $region71: #{multibranch_forward.1} parent=11 // pred_region
        _
      $region72: #{multibranch_forward.1} parent=11 // pred_fallthru
        _
      // Predicated region
      $region73: #{multibranch_forward.1} parent=11 // pred_check
        %p770 = pneg %p453
      $region74: #{multibranch_forward.1} parent=11 // pred_check_branch
        %772 = sbr.rel (%p770) target = $region76
      $region75: #{multibranch_forward.1} parent=11 // pred_region
        _
      $region76: #{multibranch_forward.1} parent=11 // pred_fallthru
        _
      // Predicated region
      $region77: #{multibranch_forward.1} parent=11 // pred_check
        %p773 = pneg %p474
      $region78: #{multibranch_forward.1} parent=11 // pred_check_branch
        %775 = sbr.rel (%p773) target = $region80
      $region79: #{multibranch_forward.1} parent=11 // pred_region
        _
      $region80: #{multibranch_forward.1} parent=11 // pred_fallthru
        _
      // Predicated region
      $region81: #{multibranch_forward.1} parent=11 // pred_check
        %p776 = pneg %p495
      $region82: #{multibranch_forward.1} parent=11 // pred_check_branch
        %778 = sbr.rel (%p776) target = $region84
      $region83: #{multibranch_forward.1} parent=11 // pred_region
        _
      $region84: #{multibranch_forward.1} parent=11 // pred_fallthru
        _
      // Predicated region
      $region85: #{multibranch_forward.1} parent=11 // pred_check
        %p779 = pneg %p516
      $region86: #{multibranch_forward.1} parent=11 // pred_check_branch
        %781 = sbr.rel (%p779) target = $region88
      $region87: #{multibranch_forward.1} parent=11 // pred_region
        _
      $region88: #{multibranch_forward.1} parent=11 // pred_fallthru
        _
      // Predicated region
      $region89: #{multibranch_forward.1} parent=11 // pred_check
        %p782 = pneg %p537
      $region90: #{multibranch_forward.1} parent=11 // pred_check_branch
        %784 = sbr.rel (%p782) target = $region92
      $region91: #{multibranch_forward.1} parent=11 // pred_region
        _
      $region92: #{multibranch_forward.1} parent=11 // pred_fallthru
        _
      // Predicated region
      $region93: #{multibranch_forward.1} parent=11 // pred_check
        %p785 = pneg %p558
      $region94: #{multibranch_forward.1} parent=11 // pred_check_branch
        %787 = sbr.rel (%p785) target = $region96
      $region95: #{multibranch_forward.1} parent=11 // pred_region
        _
      $region96: #{multibranch_forward.1} parent=11 // pred_fallthru
        _
      // Predicated region
      $region97: #{multibranch_forward.1} parent=11 // pred_check
        %p788 = pneg %p579
      $region98: #{multibranch_forward.1} parent=11 // pred_check_branch
        %790 = sbr.rel (%p788) target = $region100
      $region99: #{multibranch_forward.1} parent=11 // pred_region
        _
      $region100: #{multibranch_forward.1} parent=11 // pred_fallthru
        _
      // Predicated region
      $region101: #{multibranch_forward.1} parent=11 // pred_check
        %p791 = pneg %p600
      $region102: #{multibranch_forward.1} parent=11 // pred_check_branch
        %793 = sbr.rel (%p791) target = $region104
      $region103: #{multibranch_forward.1} parent=11 // pred_region
        _
      $region104: #{multibranch_forward.1} parent=11 // pred_fallthru
        _
      // Predicated region
      $region105: #{multibranch_forward.1} parent=11 // pred_check
        %p794 = pneg %p621
      $region106: #{multibranch_forward.1} parent=11 // pred_check_branch
        %796 = sbr.rel (%p794) target = $region108
      $region107: #{multibranch_forward.1} parent=11 // pred_region
        _
      $region108: #{multibranch_forward.1} parent=11 // pred_fallthru
        _
      // Predicated region
      $region109: #{multibranch_forward.1} parent=11 // pred_check
        %p797 = pneg %p642
      $region110: #{multibranch_forward.1} parent=11 // pred_check_branch
        %799 = sbr.rel (%p797) target = $region112
      $region111: #{multibranch_forward.1} parent=11 // pred_region
        _
      $region112: #{multibranch_forward.1} parent=11 // pred_fallthru
        _
      // Predicated region
      $region113: #{multibranch_forward.1} parent=11 // pred_check
        %p800 = pneg %p663
      $region114: #{multibranch_forward.1} parent=11 // pred_check_branch
        %802 = sbr.rel (%p800) target = $region116
      $region115: #{multibranch_forward.1} parent=11 // pred_region
        _
      $region116: #{multibranch_forward.1} parent=11 // pred_fallthru
        _
      // Predicated region
      $region117: #{multibranch_forward.1} parent=11 // pred_check
        %p803 = pneg %p684
      $region118: #{multibranch_forward.1} parent=11 // pred_check_branch
        %805 = sbr.rel (%p803) target = $region120
      $region119: #{multibranch_forward.1} parent=11 // pred_region
        _
      $region120: #{multibranch_forward.1} parent=11 // pred_fallthru
        _
    $region12: #{multibranch_forward.1} parent=5 // pred_fallthru
      _
    %p806 = scmp.lt.s32.totalorder %s65, 2
    // Predicated region
    $region121: #{multibranch_forward.1} parent=5 // pred_check
      %p807 = pneg %p806
    $region122: #{multibranch_forward.1} parent=5 // pred_check_branch
      %809 = sbr.rel (%p807) target = $region124
    $region123: #{multibranch_forward.1} parent=5 // pred_region
      // Predicated region
      $region125: #{multibranch_forward.1} parent=123 // pred_check
        %p810 = pneg %p85
      $region126: #{multibranch_forward.1} parent=123 // pred_check_branch
        %812 = sbr.rel (%p810) target = $region128
      $region127: #{multibranch_forward.1} parent=123 // pred_region
        %s813 = smul.u32 32, %s65
        %p814 = scmp.lt.s32.totalorder %s813, 63
        %s815 = scalar_select %p814, %s813, 63
        %s816 = smul.addr %s815, 8
        %s817 = scalar_lea.vmem %s1, %s816
        %s818 = smul.u32 32, %s65
      $region128: #{multibranch_forward.1} parent=123 // pred_fallthru
        _
      // Predicated region
      $region129: #{multibranch_forward.1} parent=123 // pred_check
        %p819 = pneg %p111
      $region130: #{multibranch_forward.1} parent=123 // pred_check_branch
        %821 = sbr.rel (%p819) target = $region132
      $region131: #{multibranch_forward.1} parent=123 // pred_region
        %s822 = smul.u32 2, %s65
        %p823 = scmp.lt.s32.totalorder %s822, 3
        %s824 = scalar_select %p823, %s822, 3
        %s825 = smul.addr %s824, 8
        %s826 = scalar_lea.vmem %s3, %s825
        %s827 = smul.u32 2, %s65
      $region132: #{multibranch_forward.1} parent=123 // pred_fallthru
        _
    $region124: #{multibranch_forward.1} parent=5 // pred_fallthru
      _
    %p828 = scmp.le.s32.totalorder 1, %s65
    %p829 = scmp.lt.s32.totalorder %s65, 3
    %p830 = pnand %p828, %p829
    %p831 = pneg %p830
    // Predicated region
    $region133: #{multibranch_forward.1} parent=5 // pred_check
      _
    $region134: #{multibranch_forward.1} parent=5 // pred_check_branch
      %833 = sbr.rel (%p830) target = $region136
    $region135: #{multibranch_forward.1} parent=5 // pred_region
      %s834 = ssub.s32 %s65, 1
      %s835 = smul.u32 32, %s70
      %p836 = scmp.lt.s32.totalorder %s835, 63
      %s837 = scalar_select %p836, %s835, 63
      %s838 = smul.addr %s837, 8
      %s839 = scalar_lea.vmem %s1, %s838
      %p840 = pneg %p91
      %p841 = pneg %p88
      %s842 = smul.u32 2, %s70
      %p843 = scmp.lt.s32.totalorder %s842, 3
      %s844 = scalar_select %p843, %s842, 3
      %s845 = smul.addr %s844, 8
      %s846 = scalar_lea.vmem %s3, %s845
      %p847 = pneg %p117
      %p848 = pneg %p114
      %p849 = pneg %p138
      %p850 = pneg %p135
      %p851 = pneg %p159
      %p852 = pneg %p156
      %p853 = pneg %p180
      %p854 = pneg %p177
      %p855 = pneg %p201
      %p856 = pneg %p198
      %p857 = pneg %p222
      %p858 = pneg %p219
      %p859 = pneg %p243
      %p860 = pneg %p240
      %p861 = pneg %p264
      %p862 = pneg %p261
      %p863 = pneg %p285
      %p864 = pneg %p282
      %p865 = pneg %p306
      %p866 = pneg %p303
      %p867 = pneg %p327
      %p868 = pneg %p324
      %p869 = pneg %p348
      %p870 = pneg %p345
      %p871 = pneg %p369
      %p872 = pneg %p366
      %p873 = pneg %p390
      %p874 = pneg %p387
      %p875 = pneg %p411
      %p876 = pneg %p408
      %p877 = pneg %p432
      %p878 = pneg %p429
      %p879 = pneg %p453
      %p880 = pneg %p450
      %p881 = pneg %p474
      %p882 = pneg %p471
      %p883 = pneg %p495
      %p884 = pneg %p492
      %p885 = pneg %p516
      %p886 = pneg %p513
      %p887 = pneg %p537
      %p888 = pneg %p534
      %p889 = pneg %p558
      %p890 = pneg %p555
      %p891 = pneg %p579
      %p892 = pneg %p576
      %p893 = pneg %p600
      %p894 = pneg %p597
      %p895 = pneg %p621
      %p896 = pneg %p618
      %p897 = pneg %p642
      %p898 = pneg %p639
      %p899 = pneg %p663
      %p900 = pneg %p660
      %p901 = pneg %p684
      %p902 = pneg %p681
      %p903 = pneg %p710
      %p904 = pneg %p707
      %p905 = scmp.lt.s32.totalorder %s70, 1
      %s906 = scalar_select %p905, %s70, 1
      %s907 = scalar_lea.vmem %s59, %s906
      %s908 = smul.u32 32, %s70
      %p909 = scmp.lt.s32.totalorder %s908, 63
      %s910 = scalar_select %p909, %s908, 63
      %s911 = smul.addr %s910, 8
      %s912 = scalar_lea.vmem %s1, %s911
      %s913 = smul.u32 32, %s70
      %s914 = smul.u32 2, %s70
      %p915 = scmp.lt.s32.totalorder %s914, 3
      %s916 = scalar_select %p915, %s914, 3
      %s917 = smul.addr %s916, 8
      %s918 = scalar_lea.vmem %s3, %s917
      %s919 = smul.u32 2, %s70
      %p920 = scmp.lt.s32.totalorder %s70, 1
      %s921 = scalar_select %p920, %s70, 1
      %s922 = scalar_lea.vmem %s59, %s921
      %v924 = vld [vmem:[%s912] sm:$0xff]
      %v925 = vld [vmem:[%s912 + $0x8] sm:$0xff]
      %v926 = vld [vmem:[%s912 + $0x10] sm:$0xff]
      %v927 = vld [vmem:[%s912 + $0x18] sm:$0xff]
      %v928 = vld [vmem:[%s912 + $0x20] sm:$0xff]
      %v929 = vld [vmem:[%s912 + $0x28] sm:$0xff]
      %v930 = vld [vmem:[%s912 + $0x30] sm:$0xff]
      %v931 = vld [vmem:[%s912 + $0x38] sm:$0xff]
      %v932 = vld [vmem:[%s912 + $0x40] sm:$0xff]
      %v933 = vld [vmem:[%s912 + $0x48] sm:$0xff]
      %v934 = vld [vmem:[%s912 + $0x50] sm:$0xff]
      %v935 = vld [vmem:[%s912 + $0x58] sm:$0xff]
      %v936 = vld [vmem:[%s912 + $0x60] sm:$0xff]
      %v937 = vld [vmem:[%s912 + $0x68] sm:$0xff]
      %v938 = vld [vmem:[%s912 + $0x70] sm:$0xff]
      %v939 = vld [vmem:[%s912 + $0x78] sm:$0xff]
      %v940 = vld [vmem:[%s912 + $0x80] sm:$0xff]
      %v941 = vld [vmem:[%s912 + $0x88] sm:$0xff]
      %v942 = vld [vmem:[%s912 + $0x90] sm:$0xff]
      %v943 = vld [vmem:[%s912 + $0x98] sm:$0xff]
      %v944 = vld [vmem:[%s912 + $0xa0] sm:$0xff]
      %v945 = vld [vmem:[%s912 + $0xa8] sm:$0xff]
      %v946 = vld [vmem:[%s912 + $0xb0] sm:$0xff]
      %v947 = vld [vmem:[%s912 + $0xb8] sm:$0xff]
      %v948 = vld [vmem:[%s912 + $0xc0] sm:$0xff]
      %v949 = vld [vmem:[%s912 + $0xc8] sm:$0xff]
      %v950 = vld [vmem:[%s912 + $0xd0] sm:$0xff]
      %v951 = vld [vmem:[%s912 + $0xd8] sm:$0xff]
      %v952 = vld [vmem:[%s912 + $0xe0] sm:$0xff]
      %v953 = vld [vmem:[%s912 + $0xe8] sm:$0xff]
      %v954 = vld [vmem:[%s912 + $0xf0] sm:$0xff]
      %v955 = vld [vmem:[%s912 + $0xf8] sm:$0xff]
      %v956 = vpack.c.bf16 %v925, %v924
      %v957 = vpack.c.bf16 %v927, %v926
      %v958 = vpack.c.bf16 %v929, %v928
      %v959 = vpack.c.bf16 %v931, %v930
      %v960 = vpack.c.bf16 %v933, %v932
      %v961 = vpack.c.bf16 %v935, %v934
      %v962 = vpack.c.bf16 %v937, %v936
      %v963 = vpack.c.bf16 %v939, %v938
      %v964 = vpack.c.bf16 %v941, %v940
      %v965 = vpack.c.bf16 %v943, %v942
      %v966 = vpack.c.bf16 %v945, %v944
      %v967 = vpack.c.bf16 %v947, %v946
      %v968 = vpack.c.bf16 %v949, %v948
      %v969 = vpack.c.bf16 %v951, %v950
      %v970 = vpack.c.bf16 %v953, %v952
      %v971 = vpack.c.bf16 %v955, %v954
      %v972 = vld [vmem:[%s11] sm:$0x3]
      %v973 = vld [vmem:[%s13] sm:$0x1]
      %v975 = vlaneseq
      %v976 = vshrl.u32 %v975, 7
      %v977 = vsub.s32 0, %v976
      %v978 = vrot.slane %v973, %v977
      %vm980 = vcmask 23552
      %v982 = vsel %vm980, %v956, 0
      %v985 = vsel %vm980, %v957, 0
      %v988 = vsel %vm980, %v958, 0
      %v991 = vsel %vm980, %v959, 0
      %v994 = vsel %vm980, %v960, 0
      %v997 = vsel %vm980, %v961, 0
      %v1000 = vsel %vm980, %v962, 0
      %v1003 = vsel %vm980, %v963, 0
      %v1006 = vsel %vm980, %v964, 0
      %v1009 = vsel %vm980, %v965, 0
      %v1012 = vsel %vm980, %v966, 0
      %v1015 = vsel %vm980, %v967, 0
      %v1018 = vsel %vm980, %v968, 0
      %v1021 = vsel %vm980, %v969, 0
      %v1024 = vsel %vm980, %v970, 0
      %v1027 = vsel %vm980, %v971, 0
      %vm1029 = vcmask 1040384
      %vm1030 = vcmask 1041408
      %v1031 = vsel %vm1029, 4294967295, 65535
      %v1032 = vsel %vm1030, %v1031, 0
      %v1034 = vand.u32 %v972, %v1032
      %1036 = vmatprep.subr.bf16.mxu0 0
      %1037 = vmatpush1.bf16.msra.mxu0 0
      %1038 = vmatprep.subr.bf16.mxu0 0
      %1039 = vmatpush1.bf16.msra.mxu0 0
      %1040 = vmatprep.subr.bf16.mxu0 0
      %1041 = vmatpush1.bf16.msra.mxu0 0
      %1042 = vmatprep.subr.bf16.mxu0 0
      %1043 = vmatpush1.bf16.msra.mxu0 0
      %1044 = vmatprep.subr.bf16.mxu0 0
      %1045 = vmatpush1.bf16.msra.mxu0 0
      %1046 = vmatprep.subr.bf16.mxu0 0
      %1047 = vmatpush1.bf16.msra.mxu0 0
      %1048 = vmatprep.subr.bf16.mxu0 0
      %1049 = vmatpush1.bf16.msra.mxu0 0
      %1050 = vmatprep.subr.bf16.mxu0 0
      %1051 = vmatpush1.bf16.msra.mxu0 %v1034
      %1052 = vmatprep.subr.bf16.mxu0 0
      %1053 = vmatpush2.bf16.msra.mxu0 0
      %1054 = vmatprep.subr.bf16.mxu0 0
      %1055 = vmatpush2.bf16.msra.mxu0 0
      %1056 = vmatprep.subr.bf16.mxu0 0
      %1057 = vmatpush2.bf16.msra.mxu0 0
      %1058 = vmatprep.subr.bf16.mxu0 0
      %1059 = vmatpush2.bf16.msra.mxu0 0
      %1060 = vmatprep.subr.bf16.mxu0 0
      %1061 = vmatpush2.bf16.msra.mxu0 0
      %1062 = vmatprep.subr.bf16.mxu0 0
      %1063 = vmatpush2.bf16.msra.mxu0 0
      %1064 = vmatprep.subr.bf16.mxu0 0
      %1065 = vmatpush2.bf16.msra.mxu0 0
      %1066 = vmatprep.subr.bf16.mxu0 0
      %1067 = vmatpush2.bf16.msra.mxu0 0
      %1068 = vmatprep.mubr.bf16.mxu0 0
      %1069 = vmatmul.mubr.bf16.gmra.mxu0 %v982
      %v1070 = vpop.f32.mrf.mxu0
      %v1071 = vadd.f32 %v978, %v1070
      %v1072 = vpop.f32.mrf.mxu0
      %v1073 = vpop.f32.mrf.mxu0
      %v1074 = vadd.f32 %v978, %v1073
      %v1075 = vpop.f32.mrf.mxu0
      %1076 = vmatprep.mubr.bf16.mxu0 0
      %1077 = vmatmul.mubr.bf16.gmra.mxu0 %v985
      %v1078 = vpop.f32.mrf.mxu0
      %v1079 = vadd.f32 %v978, %v1078
      %v1080 = vpop.f32.mrf.mxu0
      %v1081 = vpop.f32.mrf.mxu0
      %v1082 = vadd.f32 %v978, %v1081
      %v1083 = vpop.f32.mrf.mxu0
      %1084 = vmatprep.mubr.bf16.mxu0 0
      %1085 = vmatmul.mubr.bf16.gmra.mxu0 %v988
      %v1086 = vpop.f32.mrf.mxu0
      %v1087 = vadd.f32 %v978, %v1086
      %v1088 = vpop.f32.mrf.mxu0
      %v1089 = vpop.f32.mrf.mxu0
      %v1090 = vadd.f32 %v978, %v1089
      %v1091 = vpop.f32.mrf.mxu0
      %1092 = vmatprep.mubr.bf16.mxu0 0
      %1093 = vmatmul.mubr.bf16.gmra.mxu0 %v991
      %v1094 = vpop.f32.mrf.mxu0
      %v1095 = vadd.f32 %v978, %v1094
      %v1096 = vpop.f32.mrf.mxu0
      %v1097 = vpop.f32.mrf.mxu0
      %v1098 = vadd.f32 %v978, %v1097
      %v1099 = vpop.f32.mrf.mxu0
      %1100 = vmatprep.mubr.bf16.mxu0 0
      %1101 = vmatmul.mubr.bf16.gmra.mxu0 %v994
      %v1102 = vpop.f32.mrf.mxu0
      %v1103 = vadd.f32 %v978, %v1102
      %v1104 = vpop.f32.mrf.mxu0
      %v1105 = vpop.f32.mrf.mxu0
      %v1106 = vadd.f32 %v978, %v1105
      %v1107 = vpop.f32.mrf.mxu0
      %1108 = vmatprep.mubr.bf16.mxu0 0
      %1109 = vmatmul.mubr.bf16.gmra.mxu0 %v997
      %v1110 = vpop.f32.mrf.mxu0
      %v1111 = vadd.f32 %v978, %v1110
      %v1112 = vpop.f32.mrf.mxu0
      %v1113 = vpop.f32.mrf.mxu0
      %v1114 = vadd.f32 %v978, %v1113
      %v1115 = vpop.f32.mrf.mxu0
      %1116 = vmatprep.mubr.bf16.mxu0 0
      %1117 = vmatmul.mubr.bf16.gmra.mxu0 %v1000
      %v1118 = vpop.f32.mrf.mxu0
      %v1119 = vadd.f32 %v978, %v1118
      %v1120 = vpop.f32.mrf.mxu0
      %v1121 = vpop.f32.mrf.mxu0
      %v1122 = vadd.f32 %v978, %v1121
      %v1123 = vpop.f32.mrf.mxu0
      %1124 = vmatprep.mubr.bf16.mxu0 0
      %1125 = vmatmul.mubr.bf16.gmra.mxu0 %v1003
      %v1126 = vpop.f32.mrf.mxu0
      %v1127 = vadd.f32 %v978, %v1126
      %v1128 = vpop.f32.mrf.mxu0
      %v1129 = vpop.f32.mrf.mxu0
      %v1130 = vadd.f32 %v978, %v1129
      %v1131 = vpop.f32.mrf.mxu0
      %1132 = vmatprep.mubr.bf16.mxu0 0
      %1133 = vmatmul.mubr.bf16.gmra.mxu0 %v1006
      %v1134 = vpop.f32.mrf.mxu0
      %v1135 = vadd.f32 %v978, %v1134
      %v1136 = vpop.f32.mrf.mxu0
      %v1137 = vpop.f32.mrf.mxu0
      %v1138 = vadd.f32 %v978, %v1137
      %v1139 = vpop.f32.mrf.mxu0
      %1140 = vmatprep.mubr.bf16.mxu0 0
      %1141 = vmatmul.mubr.bf16.gmra.mxu0 %v1009
      %v1142 = vpop.f32.mrf.mxu0
      %v1143 = vadd.f32 %v978, %v1142
      %v1144 = vpop.f32.mrf.mxu0
      %v1145 = vpop.f32.mrf.mxu0
      %v1146 = vadd.f32 %v978, %v1145
      %v1147 = vpop.f32.mrf.mxu0
      %1148 = vmatprep.mubr.bf16.mxu0 0
      %1149 = vmatmul.mubr.bf16.gmra.mxu0 %v1012
      %v1150 = vpop.f32.mrf.mxu0
      %v1151 = vadd.f32 %v978, %v1150
      %v1152 = vpop.f32.mrf.mxu0
      %v1153 = vpop.f32.mrf.mxu0
      %v1154 = vadd.f32 %v978, %v1153
      %v1155 = vpop.f32.mrf.mxu0
      %1156 = vmatprep.mubr.bf16.mxu0 0
      %1157 = vmatmul.mubr.bf16.gmra.mxu0 %v1015
      %v1158 = vpop.f32.mrf.mxu0
      %v1159 = vadd.f32 %v978, %v1158
      %v1160 = vpop.f32.mrf.mxu0
      %v1161 = vpop.f32.mrf.mxu0
      %v1162 = vadd.f32 %v978, %v1161
      %v1163 = vpop.f32.mrf.mxu0
      %1164 = vmatprep.mubr.bf16.mxu0 0
      %1165 = vmatmul.mubr.bf16.gmra.mxu0 %v1018
      %v1166 = vpop.f32.mrf.mxu0
      %v1167 = vadd.f32 %v978, %v1166
      %v1168 = vpop.f32.mrf.mxu0
      %v1169 = vpop.f32.mrf.mxu0
      %v1170 = vadd.f32 %v978, %v1169
      %v1171 = vpop.f32.mrf.mxu0
      %1172 = vmatprep.mubr.bf16.mxu0 0
      %1173 = vmatmul.mubr.bf16.gmra.mxu0 %v1021
      %v1174 = vpop.f32.mrf.mxu0
      %v1175 = vadd.f32 %v978, %v1174
      %v1176 = vpop.f32.mrf.mxu0
      %v1177 = vpop.f32.mrf.mxu0
      %v1178 = vadd.f32 %v978, %v1177
      %v1179 = vpop.f32.mrf.mxu0
      %1180 = vmatprep.mubr.bf16.mxu0 0
      %1181 = vmatmul.mubr.bf16.gmra.mxu0 %v1024
      %v1182 = vpop.f32.mrf.mxu0
      %v1183 = vadd.f32 %v978, %v1182
      %v1184 = vpop.f32.mrf.mxu0
      %v1185 = vpop.f32.mrf.mxu0
      %v1186 = vadd.f32 %v978, %v1185
      %v1187 = vpop.f32.mrf.mxu0
      %1188 = vmatprep.mubr.bf16.mxu0 0
      %1189 = vmatmul.mubr.bf16.gmra.mxu0 %v1027
      %v1190 = vpop.f32.mrf.mxu0
      %v1191 = vadd.f32 %v978, %v1190
      %v1192 = vpop.f32.mrf.mxu0
      %v1193 = vpop.f32.mrf.mxu0
      %v1194 = vadd.f32 %v978, %v1193
      %v1195 = vpop.f32.mrf.mxu0
      %1196 = vdwg.mxu0
      %v1197 = vmax.f32 %v1071, 0.0
      %v1198 = vmax.f32 %v1074, 0.0
      %v1199 = vmax.f32 %v1079, 0.0
      %v1200 = vmax.f32 %v1082, 0.0
      %v1201 = vmax.f32 %v1087, 0.0
      %v1202 = vmax.f32 %v1090, 0.0
      %v1203 = vmax.f32 %v1095, 0.0
      %v1204 = vmax.f32 %v1098, 0.0
      %v1205 = vmax.f32 %v1103, 0.0
      %v1206 = vmax.f32 %v1106, 0.0
      %v1207 = vmax.f32 %v1111, 0.0
      %v1208 = vmax.f32 %v1114, 0.0
      %v1209 = vmax.f32 %v1119, 0.0
      %v1210 = vmax.f32 %v1122, 0.0
      %v1211 = vmax.f32 %v1127, 0.0
      %v1212 = vmax.f32 %v1130, 0.0
      %v1213 = vmax.f32 %v1135, 0.0
      %v1214 = vmax.f32 %v1138, 0.0
      %v1215 = vmax.f32 %v1143, 0.0
      %v1216 = vmax.f32 %v1146, 0.0
      %v1217 = vmax.f32 %v1151, 0.0
      %v1218 = vmax.f32 %v1154, 0.0
      %v1219 = vmax.f32 %v1159, 0.0
      %v1220 = vmax.f32 %v1162, 0.0
      %v1221 = vmax.f32 %v1167, 0.0
      %v1222 = vmax.f32 %v1170, 0.0
      %v1223 = vmax.f32 %v1175, 0.0
      %v1224 = vmax.f32 %v1178, 0.0
      %v1225 = vmax.f32 %v1183, 0.0
      %v1226 = vmax.f32 %v1186, 0.0
      %v1227 = vmax.f32 %v1191, 0.0
      %v1228 = vmax.f32 %v1194, 0.0
      %v1229 = vld [vmem:[%s5] sm:$0xff]
      %v1230 = vld [vmem:[%s5 + $0x8] sm:$0xff]
      %v1231 = vld [vmem:[%s5 + $0x10] sm:$0xff]
      %v1232 = vld [vmem:[%s5 + $0x18] sm:$0xff]
      %v1233 = vld [vmem:[%s5 + $0x20] sm:$0xff]
      %v1234 = vld [vmem:[%s5 + $0x28] sm:$0xff]
      %v1235 = vld [vmem:[%s5 + $0x30] sm:$0xff]
      %v1236 = vld [vmem:[%s5 + $0x38] sm:$0xff]
      %v1237 = vpack.c.bf16 %v1198, %v1197
      %v1238 = vpack.c.bf16 %v1200, %v1199
      %v1239 = vpack.c.bf16 %v1202, %v1201
      %v1240 = vpack.c.bf16 %v1204, %v1203
      %v1241 = vpack.c.bf16 %v1206, %v1205
      %v1242 = vpack.c.bf16 %v1208, %v1207
      %v1243 = vpack.c.bf16 %v1210, %v1209
      %v1244 = vpack.c.bf16 %v1212, %v1211
      %v1245 = vpack.c.bf16 %v1214, %v1213
      %v1246 = vpack.c.bf16 %v1216, %v1215
      %v1247 = vpack.c.bf16 %v1218, %v1217
      %v1248 = vpack.c.bf16 %v1220, %v1219
      %v1249 = vpack.c.bf16 %v1222, %v1221
      %v1250 = vpack.c.bf16 %v1224, %v1223
      %v1251 = vpack.c.bf16 %v1226, %v1225
      %v1252 = vpack.c.bf16 %v1228, %v1227
      %v1261 = vunpack.c.l.b16 %v1229
      %v1262 = vunpack.c.h.b16 %v1229
      %v1263 = vunpack.c.l.b16 %v1230
      %v1264 = vunpack.c.h.b16 %v1230
      %v1265 = vunpack.c.l.b16 %v1231
      %v1266 = vunpack.c.h.b16 %v1231
      %v1267 = vunpack.c.l.b16 %v1232
      %v1268 = vunpack.c.h.b16 %v1232
      %v1269 = vunpack.c.l.b16 %v1233
      %v1270 = vunpack.c.h.b16 %v1233
      %v1271 = vunpack.c.l.b16 %v1234
      %v1272 = vunpack.c.h.b16 %v1234
      %v1273 = vunpack.c.l.b16 %v1235
      %v1274 = vunpack.c.h.b16 %v1235
      %v1275 = vunpack.c.l.b16 %v1236
      %v1276 = vunpack.c.h.b16 %v1236
      %v1277 = vpack.c.b16 %v1263, %v1261
      %v1278 = vpack.c.b16 %v1264, %v1262
      %v1279 = vpack.c.b16 %v1267, %v1265
      %v1280 = vpack.c.b16 %v1268, %v1266
      %v1281 = vpack.c.b16 %v1271, %v1269
      %v1282 = vpack.c.b16 %v1272, %v1270
      %v1283 = vpack.c.b16 %v1275, %v1273
      %v1284 = vpack.c.b16 %v1276, %v1274
      %1293 = vmatprep.subr.bf16.mxu0 0
      %1294 = vmatpush1.bf16.msra.mxu0 %v1244
      %1295 = vmatprep.subr.bf16.mxu0 0
      %1296 = vmatpush1.bf16.msra.mxu0 %v1243
      %1297 = vmatprep.subr.bf16.mxu0 0
      %1298 = vmatpush1.bf16.msra.mxu0 %v1242
      %1299 = vmatprep.subr.bf16.mxu0 0
      %1300 = vmatpush1.bf16.msra.mxu0 %v1241
      %1301 = vmatprep.subr.bf16.mxu0 0
      %1302 = vmatpush1.bf16.msra.mxu0 %v1240
      %1303 = vmatprep.subr.bf16.mxu0 0
      %1304 = vmatpush1.bf16.msra.mxu0 %v1239
      %1305 = vmatprep.subr.bf16.mxu0 0
      %1306 = vmatpush1.bf16.msra.mxu0 %v1238
      %1307 = vmatprep.subr.bf16.mxu0 0
      %1308 = vmatpush1.bf16.msra.mxu0 %v1237
      %1309 = vmatprep.subr.bf16.mxu0 0
      %1310 = vmatpush2.bf16.msra.mxu0 %v1252
      %1311 = vmatprep.subr.bf16.mxu0 0
      %1312 = vmatpush2.bf16.msra.mxu0 %v1251
      %1313 = vmatprep.subr.bf16.mxu0 0
      %1314 = vmatpush2.bf16.msra.mxu0 %v1250
      %1315 = vmatprep.subr.bf16.mxu0 0
      %1316 = vmatpush2.bf16.msra.mxu0 %v1249
      %1317 = vmatprep.subr.bf16.mxu0 0
      %1318 = vmatpush2.bf16.msra.mxu0 %v1248
      %1319 = vmatprep.subr.bf16.mxu0 0
      %1320 = vmatpush2.bf16.msra.mxu0 %v1247
      %1321 = vmatprep.subr.bf16.mxu0 0
      %1322 = vmatpush2.bf16.msra.mxu0 %v1246
      %1323 = vmatprep.subr.bf16.mxu0 0
      %1324 = vmatpush2.bf16.msra.mxu0 %v1245
      %1325 = vmatprep.mubr.bf16.mxu0 %v1278
      %1326 = vmatmul.mubr.bf16.gmra.mxu0 %v1277
      %v1327 = vpop.f32.mrf.mxu0
      %v1328 = vadd.f32 0.0, %v1327
      %v1329 = vpop.f32.mrf.mxu0
      %v1330 = vpop.f32.mrf.mxu0
      %v1331 = vadd.f32 0.0, %v1330
      %v1332 = vpop.f32.mrf.mxu0
      %1333 = vmatprep.mubr.bf16.mxu0 %v1280
      %1334 = vmatmul.mubr.bf16.gmra.mxu0 %v1279
      %v1335 = vpop.f32.mrf.mxu0
      %v1336 = vadd.f32 0.0, %v1335
      %v1337 = vpop.f32.mrf.mxu0
      %v1338 = vpop.f32.mrf.mxu0
      %v1339 = vadd.f32 0.0, %v1338
      %v1340 = vpop.f32.mrf.mxu0
      %1341 = vmatprep.mubr.bf16.mxu0 %v1282
      %1342 = vmatmul.mubr.bf16.gmra.mxu0 %v1281
      %v1343 = vpop.f32.mrf.mxu0
      %v1344 = vadd.f32 0.0, %v1343
      %v1345 = vpop.f32.mrf.mxu0
      %v1346 = vpop.f32.mrf.mxu0
      %v1347 = vadd.f32 0.0, %v1346
      %v1348 = vpop.f32.mrf.mxu0
      %1349 = vmatprep.mubr.bf16.mxu0 %v1284
      %1350 = vmatmul.mubr.bf16.gmra.mxu0 %v1283
      %v1351 = vpop.f32.mrf.mxu0
      %v1352 = vadd.f32 0.0, %v1351
      %v1353 = vpop.f32.mrf.mxu0
      %v1354 = vpop.f32.mrf.mxu0
      %v1355 = vadd.f32 0.0, %v1354
      %v1356 = vpop.f32.mrf.mxu0
      %1357 = vdwg.mxu0
      %v1358 = vpack.c.bf16 %v1331, %v1328
      %v1359 = vpack.c.bf16 %v1339, %v1336
      %v1360 = vpack.c.bf16 %v1347, %v1344
      %v1361 = vpack.c.bf16 %v1355, %v1352
      %v1362 = vld [vmem:[%s19] sm:$0xf]
      %v1363 = vld [vmem:[%s19 + $0x4] sm:$0xf]
      %v1364 = vld [vmem:[%s19 + $0x8] sm:$0xf]
      %v1365 = vld [vmem:[%s19 + $0xc] sm:$0xf]
      %v1366 = vld [vmem:[%s21] sm:$0x1]
      %v1368 = vlaneseq
      %v1369 = vshrl.u32 %v1368, 7
      %v1370 = vsub.s32 0, %v1369
      %v1371 = vrot.slane %v1366, %v1370
      %v1377 = vunpack.c.l.b16 %v1362
      %v1378 = vunpack.c.l.b16 %v1363
      %v1379 = vunpack.c.l.b16 %v1364
      %v1380 = vunpack.c.l.b16 %v1365
      %v1381 = vpack.c.b16 %v1378, %v1377
      %v1382 = vpack.c.b16 %v1380, %v1379
      %vm1385 = vcmask 261120
      %v1387 = vsel %vm1385, %v1358, 0
      %v1390 = vsel %vm1385, %v1359, 0
      %v1393 = vsel %vm1385, %v1360, 0
      %v1396 = vsel %vm1385, %v1361, 0
      %1398 = vmatprep.subr.bf16.mxu0 0
      %1399 = vmatpush1.bf16.msra.mxu0 0
      %1400 = vmatprep.subr.bf16.mxu0 0
      %1401 = vmatpush1.bf16.msra.mxu0 0
      %1402 = vmatprep.subr.bf16.mxu0 0
      %1403 = vmatpush1.bf16.msra.mxu0 0
      %1404 = vmatprep.subr.bf16.mxu0 0
      %1405 = vmatpush1.bf16.msra.mxu0 0
      %1406 = vmatprep.subr.bf16.mxu0 0
      %1407 = vmatpush1.bf16.msra.mxu0 0
      %1408 = vmatprep.subr.bf16.mxu0 0
      %1409 = vmatpush1.bf16.msra.mxu0 0
      %1410 = vmatprep.subr.bf16.mxu0 0
      %1411 = vmatpush1.bf16.msra.mxu0 %v1382
      %1412 = vmatprep.subr.bf16.mxu0 0
      %1413 = vmatpush1.bf16.msra.mxu0 %v1381
      %1414 = vmatprep.subr.bf16.mxu0 0
      %1415 = vmatpush2.bf16.msra.mxu0 0
      %1416 = vmatprep.subr.bf16.mxu0 0
      %1417 = vmatpush2.bf16.msra.mxu0 0
      %1418 = vmatprep.subr.bf16.mxu0 0
      %1419 = vmatpush2.bf16.msra.mxu0 0
      %1420 = vmatprep.subr.bf16.mxu0 0
      %1421 = vmatpush2.bf16.msra.mxu0 0
      %1422 = vmatprep.subr.bf16.mxu0 0
      %1423 = vmatpush2.bf16.msra.mxu0 0
      %1424 = vmatprep.subr.bf16.mxu0 0
      %1425 = vmatpush2.bf16.msra.mxu0 0
      %1426 = vmatprep.subr.bf16.mxu0 0
      %1427 = vmatpush2.bf16.msra.mxu0 0
      %1428 = vmatprep.subr.bf16.mxu0 0
      %1429 = vmatpush2.bf16.msra.mxu0 0
      %1430 = vmatprep.mubr.bf16.mxu0 0
      %1431 = vmatmul.mubr.bf16.gmra.mxu0 %v1387
      %v1432 = vpop.f32.mrf.mxu0
      %v1433 = vadd.f32 %v1371, %v1432
      %v1434 = vpop.f32.mrf.mxu0
      %v1435 = vpop.f32.mrf.mxu0
      %v1436 = vadd.f32 %v1371, %v1435
      %v1437 = vpop.f32.mrf.mxu0
      %1438 = vmatprep.mubr.bf16.mxu0 0
      %1439 = vmatmul.mubr.bf16.gmra.mxu0 %v1390
      %v1440 = vpop.f32.mrf.mxu0
      %v1441 = vadd.f32 %v1371, %v1440
      %v1442 = vpop.f32.mrf.mxu0
      %v1443 = vpop.f32.mrf.mxu0
      %v1444 = vadd.f32 %v1371, %v1443
      %v1445 = vpop.f32.mrf.mxu0
      %1446 = vmatprep.mubr.bf16.mxu0 0
      %1447 = vmatmul.mubr.bf16.gmra.mxu0 %v1393
      %v1448 = vpop.f32.mrf.mxu0
      %v1449 = vadd.f32 %v1371, %v1448
      %v1450 = vpop.f32.mrf.mxu0
      %v1451 = vpop.f32.mrf.mxu0
      %v1452 = vadd.f32 %v1371, %v1451
      %v1453 = vpop.f32.mrf.mxu0
      %1454 = vmatprep.mubr.bf16.mxu0 0
      %1455 = vmatmul.mubr.bf16.gmra.mxu0 %v1396
      %v1456 = vpop.f32.mrf.mxu0
      %v1457 = vadd.f32 %v1371, %v1456
      %v1458 = vpop.f32.mrf.mxu0
      %v1459 = vpop.f32.mrf.mxu0
      %v1460 = vadd.f32 %v1371, %v1459
      %v1461 = vpop.f32.mrf.mxu0
      %1462 = vdwg.mxu0
      %v1463 = vmax.f32 %v1433, 0.0
      %v1464 = vmax.f32 %v1436, 0.0
      %v1465 = vmax.f32 %v1441, 0.0
      %v1466 = vmax.f32 %v1444, 0.0
      %v1467 = vmax.f32 %v1449, 0.0
      %v1468 = vmax.f32 %v1452, 0.0
      %v1469 = vmax.f32 %v1457, 0.0
      %v1470 = vmax.f32 %v1460, 0.0
      %v1471 = vld [vmem:[%s7] sm:$0xf]
      %v1472 = vld [vmem:[%s7 + $0x4] sm:$0xf]
      %v1473 = vpack.c.bf16 %v1464, %v1463
      %v1474 = vpack.c.bf16 %v1466, %v1465
      %v1475 = vpack.c.bf16 %v1468, %v1467
      %v1476 = vpack.c.bf16 %v1470, %v1469
      %v1479 = vunpack.c.l.b16 %v1471
      %v1480 = vunpack.c.l.b16 %v1472
      %v1481 = vpack.c.b16 %v1480, %v1479
      %vm1482 = vcmask 523264
      %v1484 = vsel %vm1482, %v1481, 0
      %1486 = vmatprep.subr.bf16.mxu0 0
      %1487 = vmatpush1.bf16.msra.mxu0 0
      %1488 = vmatprep.subr.bf16.mxu0 0
      %1489 = vmatpush1.bf16.msra.mxu0 0
      %1490 = vmatprep.subr.bf16.mxu0 0
      %1491 = vmatpush1.bf16.msra.mxu0 0
      %1492 = vmatprep.subr.bf16.mxu0 0
      %1493 = vmatpush1.bf16.msra.mxu0 0
      %1494 = vmatprep.subr.bf16.mxu0 0
      %1495 = vmatpush1.bf16.msra.mxu0 %v1476
      %1496 = vmatprep.subr.bf16.mxu0 0
      %1497 = vmatpush1.bf16.msra.mxu0 %v1475
      %1498 = vmatprep.subr.bf16.mxu0 0
      %1499 = vmatpush1.bf16.msra.mxu0 %v1474
      %1500 = vmatprep.subr.bf16.mxu0 0
      %1501 = vmatpush1.bf16.msra.mxu0 %v1473
      %1502 = vmatprep.subr.bf16.mxu0 0
      %1503 = vmatpush2.bf16.msra.mxu0 0
      %1504 = vmatprep.subr.bf16.mxu0 0
      %1505 = vmatpush2.bf16.msra.mxu0 0
      %1506 = vmatprep.subr.bf16.mxu0 0
      %1507 = vmatpush2.bf16.msra.mxu0 0
      %1508 = vmatprep.subr.bf16.mxu0 0
      %1509 = vmatpush2.bf16.msra.mxu0 0
      %1510 = vmatprep.subr.bf16.mxu0 0
      %1511 = vmatpush2.bf16.msra.mxu0 0
      %1512 = vmatprep.subr.bf16.mxu0 0
      %1513 = vmatpush2.bf16.msra.mxu0 0
      %1514 = vmatprep.subr.bf16.mxu0 0
      %1515 = vmatpush2.bf16.msra.mxu0 0
      %1516 = vmatprep.subr.bf16.mxu0 0
      %1517 = vmatpush2.bf16.msra.mxu0 0
      %1518 = vmatprep.mubr.bf16.mxu0 0
      %1519 = vmatmul.mubr.bf16.gmra.mxu0 %v1484
      %v1520 = vpop.f32.mrf.mxu0
      %v1521 = vadd.f32 0.0, %v1520
      %v1522 = vpop.f32.mrf.mxu0
      %v1523 = vpop.f32.mrf.mxu0
      %v1524 = vadd.f32 0.0, %v1523
      %v1525 = vpop.f32.mrf.mxu0
      %1526 = vdwg.mxu0
      %v1527 = vpack.c.bf16 %v1524, %v1521
      %v1528 = vld [vmem:[%s23] sm:$0xf]
      %v1529 = vld [vmem:[%s23 + $0x4] sm:$0xf]
      %v1530 = vld [vmem:[%s23 + $0x8] sm:$0xf]
      %v1531 = vld [vmem:[%s23 + $0xc] sm:$0xf]
      %v1532 = vld [vmem:[%s23 + $0x10] sm:$0xf]
      %v1533 = vld [vmem:[%s23 + $0x14] sm:$0xf]
      %v1534 = vld [vmem:[%s23 + $0x18] sm:$0xf]
      %v1535 = vld [vmem:[%s23 + $0x1c] sm:$0xf]
      %v1536 = vld [vmem:[%s25] sm:$0x1]
      %v1538 = vlaneseq
      %v1539 = vshrl.u32 %v1538, 7
      %v1540 = vsub.s32 0, %v1539
      %v1541 = vrot.slane %v1536, %v1540
      %v1551 = vunpack.c.l.b16 %v1528
      %v1552 = vunpack.c.l.b16 %v1529
      %v1553 = vunpack.c.l.b16 %v1530
      %v1554 = vunpack.c.l.b16 %v1531
      %v1555 = vunpack.c.l.b16 %v1532
      %v1556 = vunpack.c.l.b16 %v1533
      %v1557 = vunpack.c.l.b16 %v1534
      %v1558 = vunpack.c.l.b16 %v1535
      %v1559 = vpack.c.b16 %v1552, %v1551
      %v1560 = vpack.c.b16 %v1554, %v1553
      %v1561 = vpack.c.b16 %v1556, %v1555
      %v1562 = vpack.c.b16 %v1558, %v1557
      %v1568 = vsel %vm1482, %v1527, 0
      %1570 = vmatprep.subr.bf16.mxu0 0
      %1571 = vmatpush1.bf16.msra.mxu0 0
      %1572 = vmatprep.subr.bf16.mxu0 0
      %1573 = vmatpush1.bf16.msra.mxu0 0
      %1574 = vmatprep.subr.bf16.mxu0 0
      %1575 = vmatpush1.bf16.msra.mxu0 0
      %1576 = vmatprep.subr.bf16.mxu0 0
      %1577 = vmatpush1.bf16.msra.mxu0 0
      %1578 = vmatprep.subr.bf16.mxu0 0
      %1579 = vmatpush1.bf16.msra.mxu0 %v1562
      %1580 = vmatprep.subr.bf16.mxu0 0
      %1581 = vmatpush1.bf16.msra.mxu0 %v1561
      %1582 = vmatprep.subr.bf16.mxu0 0
      %1583 = vmatpush1.bf16.msra.mxu0 %v1560
      %1584 = vmatprep.subr.bf16.mxu0 0
      %1585 = vmatpush1.bf16.msra.mxu0 %v1559
      %1586 = vmatprep.subr.bf16.mxu0 0
      %1587 = vmatpush2.bf16.msra.mxu0 0
      %1588 = vmatprep.subr.bf16.mxu0 0
      %1589 = vmatpush2.bf16.msra.mxu0 0
      %1590 = vmatprep.subr.bf16.mxu0 0
      %1591 = vmatpush2.bf16.msra.mxu0 0
      %1592 = vmatprep.subr.bf16.mxu0 0
      %1593 = vmatpush2.bf16.msra.mxu0 0
      %1594 = vmatprep.subr.bf16.mxu0 0
      %1595 = vmatpush2.bf16.msra.mxu0 0
      %1596 = vmatprep.subr.bf16.mxu0 0
      %1597 = vmatpush2.bf16.msra.mxu0 0
      %1598 = vmatprep.subr.bf16.mxu0 0
      %1599 = vmatpush2.bf16.msra.mxu0 0
      %1600 = vmatprep.subr.bf16.mxu0 0
      %1601 = vmatpush2.bf16.msra.mxu0 0
      %1602 = vmatprep.mubr.bf16.mxu0 0
      %1603 = vmatmul.mubr.bf16.gmra.mxu0 %v1568
      %v1604 = vpop.f32.mrf.mxu0
      %v1605 = vadd.f32 %v1541, %v1604
      %v1606 = vpop.f32.mrf.mxu0
      %v1607 = vpop.f32.mrf.mxu0
      %v1608 = vadd.f32 %v1541, %v1607
      %v1609 = vpop.f32.mrf.mxu0
      %1610 = vdwg.mxu0
      %v1611 = vmax.f32 %v1605, 0.0
      %v1612 = vmax.f32 %v1608, 0.0
      %v1613 = vpack.c.bf16 %v1612, %v1611
      %v1614 = vld [vmem:[%s27] sm:$0xf]
      %v1615 = vld [vmem:[%s27 + $0x4] sm:$0xf]
      %v1616 = vld [vmem:[%s27 + $0x8] sm:$0xf]
      %v1617 = vld [vmem:[%s27 + $0xc] sm:$0xf]
      %v1618 = vld [vmem:[%s27 + $0x10] sm:$0xf]
      %v1619 = vld [vmem:[%s27 + $0x14] sm:$0xf]
      %v1620 = vld [vmem:[%s27 + $0x18] sm:$0xf]
      %v1621 = vld [vmem:[%s27 + $0x1c] sm:$0xf]
      %v1622 = vld [vmem:[%s29] sm:$0x1]
      %v1624 = vlaneseq
      %v1625 = vshrl.u32 %v1624, 7
      %v1626 = vsub.s32 0, %v1625
      %v1627 = vrot.slane %v1622, %v1626
      %v1637 = vunpack.c.l.b16 %v1614
      %v1638 = vunpack.c.l.b16 %v1615
      %v1639 = vunpack.c.l.b16 %v1616
      %v1640 = vunpack.c.l.b16 %v1617
      %v1641 = vunpack.c.l.b16 %v1618
      %v1642 = vunpack.c.l.b16 %v1619
      %v1643 = vunpack.c.l.b16 %v1620
      %v1644 = vunpack.c.l.b16 %v1621
      %v1645 = vpack.c.b16 %v1638, %v1637
      %v1646 = vpack.c.b16 %v1640, %v1639
      %v1647 = vpack.c.b16 %v1642, %v1641
      %v1648 = vpack.c.b16 %v1644, %v1643
      %v1654 = vsel %vm1482, %v1613, 0
      %1656 = vmatprep.subr.bf16.mxu0 0
      %1657 = vmatpush1.bf16.msra.mxu0 0
      %1658 = vmatprep.subr.bf16.mxu0 0
      %1659 = vmatpush1.bf16.msra.mxu0 0
      %1660 = vmatprep.subr.bf16.mxu0 0
      %1661 = vmatpush1.bf16.msra.mxu0 0
      %1662 = vmatprep.subr.bf16.mxu0 0
      %1663 = vmatpush1.bf16.msra.mxu0 0
      %1664 = vmatprep.subr.bf16.mxu0 0
      %1665 = vmatpush1.bf16.msra.mxu0 %v1648
      %1666 = vmatprep.subr.bf16.mxu0 0
      %1667 = vmatpush1.bf16.msra.mxu0 %v1647
      %1668 = vmatprep.subr.bf16.mxu0 0
      %1669 = vmatpush1.bf16.msra.mxu0 %v1646
      %1670 = vmatprep.subr.bf16.mxu0 0
      %1671 = vmatpush1.bf16.msra.mxu0 %v1645
      %1672 = vmatprep.subr.bf16.mxu0 0
      %1673 = vmatpush2.bf16.msra.mxu0 0
      %1674 = vmatprep.subr.bf16.mxu0 0
      %1675 = vmatpush2.bf16.msra.mxu0 0
      %1676 = vmatprep.subr.bf16.mxu0 0
      %1677 = vmatpush2.bf16.msra.mxu0 0
      %1678 = vmatprep.subr.bf16.mxu0 0
      %1679 = vmatpush2.bf16.msra.mxu0 0
      %1680 = vmatprep.subr.bf16.mxu0 0
      %1681 = vmatpush2.bf16.msra.mxu0 0
      %1682 = vmatprep.subr.bf16.mxu0 0
      %1683 = vmatpush2.bf16.msra.mxu0 0
      %1684 = vmatprep.subr.bf16.mxu0 0
      %1685 = vmatpush2.bf16.msra.mxu0 0
      %1686 = vmatprep.subr.bf16.mxu0 0
      %1687 = vmatpush2.bf16.msra.mxu0 0
      %1688 = vmatprep.mubr.bf16.mxu0 0
      %1689 = vmatmul.mubr.bf16.gmra.mxu0 %v1654
      %v1690 = vpop.f32.mrf.mxu0
      %v1691 = vadd.f32 %v1627, %v1690
      %v1692 = vpop.f32.mrf.mxu0
      %v1693 = vpop.f32.mrf.mxu0
      %v1694 = vadd.f32 %v1627, %v1693
      %v1695 = vpop.f32.mrf.mxu0
      %1696 = vdwg.mxu0
      %vm1697 = vcmask 105472
      %v1698 = vsel %vm1697, %v1691, 0.0
      %v1699 = vsel %vm1697, %v1694, 0.0
      %v1700 = vadd.f32 %v1698, %v1699
      %v1701 = vrot.slane %v1700, 4
      %v1702 = vadd.f32 %v1700, %v1701
      %v1703 = vrot.slane %v1702, 2
      %v1704 = vadd.f32 %v1702, %v1703
      %v1705 = vrot.slane %v1704, 1
      %v1706 = vadd.f32 %v1704, %v1705
      %v1707 = vrcp.pop 16.0
      %v1708 = vmul.f32 %v1706, %v1707
      %v1709 = vld [vmem:[%s918] sm:$0xff]
      %v1710 = vld [vmem:[%s918 + $0x8] sm:$0xff]
      %v1711 = vmul.f32 %v1691, %v1709
      %v1712 = vmul.f32 %v1694, %v1710
      %vm1713 = vcmask 39936
      %v1714 = vsel %vm1713, %v1711, 0.0
      %1715 = vadd.xlane.f32.xlu0 %v1714
      %v1716 = vpop.xlane.xlu0 %1715
      %v1717 = vsel %vm1713, %v1712, 0.0
      %1718 = vadd.xlane.f32.xlu0 %v1717
      %v1719 = vpop.xlane.xlu0 %1718
      %v1720 = vmin.f32 %v1716, %v1719
      %v1721 = vrot.slane %v1720, 4
      %v1722 = vmin.f32 %v1720, %v1721
      %v1723 = vrot.slane %v1722, 2
      %v1724 = vmin.f32 %v1722, %v1723
      %v1725 = vrot.slane %v1724, 1
      %v1726 = vmin.f32 %v1724, %v1725
      %v1727 = vmax.f32 %v1716, %v1719
      %v1728 = vrot.slane %v1727, 4
      %v1729 = vmax.f32 %v1727, %v1728
      %v1730 = vrot.slane %v1729, 2
      %v1731 = vmax.f32 %v1729, %v1730
      %v1732 = vrot.slane %v1731, 1
      %v1733 = vmax.f32 %v1731, %v1732
      %v1734 = vsub.f32 %v1716, %v1726
      %v1735 = vsub.f32 %v1719, %v1726
      %v1736 = vsub.f32 %v1733, %v1726
      %v1737 = vadd.f32 %v1736, 1e-06
      %v1738 = vrcp.pop %v1737
      %v1739 = vmul.f32 %v1734, %v1738
      %v1740 = vmul.f32 %v1735, %v1738
      %v1741 = vld [vmem:[%s9] sm:$0xf]
      %v1742 = vld [vmem:[%s9 + $0x4] sm:$0xf]
      %v1743 = vld [vmem:[%s9 + $0x8] sm:$0xf]
      %v1744 = vld [vmem:[%s9 + $0xc] sm:$0xf]
      %v1745 = vld [vmem:[%s9 + $0x10] sm:$0xf]
      %v1746 = vld [vmem:[%s9 + $0x14] sm:$0xf]
      %v1747 = vld [vmem:[%s9 + $0x18] sm:$0xf]
      %v1748 = vld [vmem:[%s9 + $0x1c] sm:$0xf]
      %v1749 = vld [vmem:[%s9 + $0x20] sm:$0xf]
      %v1750 = vld [vmem:[%s9 + $0x24] sm:$0xf]
      %v1751 = vld [vmem:[%s9 + $0x28] sm:$0xf]
      %v1752 = vld [vmem:[%s9 + $0x2c] sm:$0xf]
      %v1753 = vld [vmem:[%s9 + $0x30] sm:$0xf]
      %v1754 = vld [vmem:[%s9 + $0x34] sm:$0xf]
      %v1755 = vld [vmem:[%s9 + $0x38] sm:$0xf]
      %v1756 = vld [vmem:[%s9 + $0x3c] sm:$0xf]
      %v1757 = vld [vmem:[%s9 + $0x40] sm:$0xf]
      %v1758 = vld [vmem:[%s9 + $0x44] sm:$0xf]
      %v1759 = vld [vmem:[%s9 + $0x48] sm:$0xf]
      %v1760 = vld [vmem:[%s9 + $0x4c] sm:$0xf]
      %v1761 = vld [vmem:[%s9 + $0x50] sm:$0xf]
      %v1762 = vld [vmem:[%s9 + $0x54] sm:$0xf]
      %v1763 = vld [vmem:[%s9 + $0x58] sm:$0xf]
      %v1764 = vld [vmem:[%s9 + $0x5c] sm:$0xf]
      %v1765 = vld [vmem:[%s9 + $0x60] sm:$0xf]
      %v1766 = vld [vmem:[%s9 + $0x64] sm:$0xf]
      %v1767 = vld [vmem:[%s9 + $0x68] sm:$0xf]
      %v1768 = vld [vmem:[%s9 + $0x6c] sm:$0xf]
      %v1769 = vld [vmem:[%s9 + $0x70] sm:$0xf]
      %v1770 = vld [vmem:[%s9 + $0x74] sm:$0xf]
      %v1771 = vld [vmem:[%s9 + $0x78] sm:$0xf]
      %v1772 = vld [vmem:[%s9 + $0x7c] sm:$0xf]
      %v1773 = vpack.c.bf16 %v1740, %v1739
      %v1806 = vunpack.c.l.b16 %v1741
      %v1807 = vunpack.c.l.b16 %v1742
      %v1808 = vunpack.c.l.b16 %v1743
      %v1809 = vunpack.c.l.b16 %v1744
      %v1810 = vunpack.c.l.b16 %v1745
      %v1811 = vunpack.c.l.b16 %v1746
      %v1812 = vunpack.c.l.b16 %v1747
      %v1813 = vunpack.c.l.b16 %v1748
      %v1814 = vunpack.c.l.b16 %v1749
      %v1815 = vunpack.c.l.b16 %v1750
      %v1816 = vunpack.c.l.b16 %v1751
      %v1817 = vunpack.c.l.b16 %v1752
      %v1818 = vunpack.c.l.b16 %v1753
      %v1819 = vunpack.c.l.b16 %v1754
      %v1820 = vunpack.c.l.b16 %v1755
      %v1821 = vunpack.c.l.b16 %v1756
      %v1822 = vunpack.c.l.b16 %v1757
      %v1823 = vunpack.c.l.b16 %v1758
      %v1824 = vunpack.c.l.b16 %v1759
      %v1825 = vunpack.c.l.b16 %v1760
      %v1826 = vunpack.c.l.b16 %v1761
      %v1827 = vunpack.c.l.b16 %v1762
      %v1828 = vunpack.c.l.b16 %v1763
      %v1829 = vunpack.c.l.b16 %v1764
      %v1830 = vunpack.c.l.b16 %v1765
      %v1831 = vunpack.c.l.b16 %v1766
      %v1832 = vunpack.c.l.b16 %v1767
      %v1833 = vunpack.c.l.b16 %v1768
      %v1834 = vunpack.c.l.b16 %v1769
      %v1835 = vunpack.c.l.b16 %v1770
      %v1836 = vunpack.c.l.b16 %v1771
      %v1837 = vunpack.c.l.b16 %v1772
      %v1838 = vpack.c.b16 %v1807, %v1806
      %v1839 = vpack.c.b16 %v1809, %v1808
      %v1840 = vpack.c.b16 %v1811, %v1810
      %v1841 = vpack.c.b16 %v1813, %v1812
      %v1842 = vpack.c.b16 %v1815, %v1814
      %v1843 = vpack.c.b16 %v1817, %v1816
      %v1844 = vpack.c.b16 %v1819, %v1818
      %v1845 = vpack.c.b16 %v1821, %v1820
      %v1846 = vpack.c.b16 %v1823, %v1822
      %v1847 = vpack.c.b16 %v1825, %v1824
      %v1848 = vpack.c.b16 %v1827, %v1826
      %v1849 = vpack.c.b16 %v1829, %v1828
      %v1850 = vpack.c.b16 %v1831, %v1830
      %v1851 = vpack.c.b16 %v1833, %v1832
      %v1852 = vpack.c.b16 %v1835, %v1834
      %v1853 = vpack.c.b16 %v1837, %v1836
      %vm1854 = vcmask 130048
      %v1856 = vsel %vm1854, %v1838, 0
      %v1859 = vsel %vm1854, %v1839, 0
      %v1862 = vsel %vm1854, %v1840, 0
      %v1865 = vsel %vm1854, %v1841, 0
      %v1868 = vsel %vm1854, %v1842, 0
      %v1871 = vsel %vm1854, %v1843, 0
      %v1874 = vsel %vm1854, %v1844, 0
      %v1877 = vsel %vm1854, %v1845, 0
      %v1880 = vsel %vm1854, %v1846, 0
      %v1883 = vsel %vm1854, %v1847, 0
      %v1886 = vsel %vm1854, %v1848, 0
      %v1889 = vsel %vm1854, %v1849, 0
      %v1892 = vsel %vm1854, %v1850, 0
      %v1895 = vsel %vm1854, %v1851, 0
      %v1898 = vsel %vm1854, %v1852, 0
      %v1901 = vsel %vm1854, %v1853, 0
      %1903 = vmatprep.subr.bf16.mxu0 0
      %1904 = vmatpush1.bf16.msra.mxu0 0
      %1905 = vmatprep.subr.bf16.mxu0 0
      %1906 = vmatpush1.bf16.msra.mxu0 0
      %1907 = vmatprep.subr.bf16.mxu0 0
      %1908 = vmatpush1.bf16.msra.mxu0 0
      %1909 = vmatprep.subr.bf16.mxu0 0
      %1910 = vmatpush1.bf16.msra.mxu0 0
      %1911 = vmatprep.subr.bf16.mxu0 0
      %1912 = vmatpush1.bf16.msra.mxu0 0
      %1913 = vmatprep.subr.bf16.mxu0 0
      %1914 = vmatpush1.bf16.msra.mxu0 0
      %1915 = vmatprep.subr.bf16.mxu0 0
      %1916 = vmatpush1.bf16.msra.mxu0 0
      %1917 = vmatprep.subr.bf16.mxu0 0
      %1918 = vmatpush1.bf16.msra.mxu0 %v1773
      %1919 = vmatprep.subr.bf16.mxu0 0
      %1920 = vmatpush2.bf16.msra.mxu0 0
      %1921 = vmatprep.subr.bf16.mxu0 0
      %1922 = vmatpush2.bf16.msra.mxu0 0
      %1923 = vmatprep.subr.bf16.mxu0 0
      %1924 = vmatpush2.bf16.msra.mxu0 0
      %1925 = vmatprep.subr.bf16.mxu0 0
      %1926 = vmatpush2.bf16.msra.mxu0 0
      %1927 = vmatprep.subr.bf16.mxu0 0
      %1928 = vmatpush2.bf16.msra.mxu0 0
      %1929 = vmatprep.subr.bf16.mxu0 0
      %1930 = vmatpush2.bf16.msra.mxu0 0
      %1931 = vmatprep.subr.bf16.mxu0 0
      %1932 = vmatpush2.bf16.msra.mxu0 0
      %1933 = vmatprep.subr.bf16.mxu0 0
      %1934 = vmatpush2.bf16.msra.mxu0 0
      %1935 = vmatprep.mubr.bf16.mxu0 0
      %1936 = vmatmul.mubr.bf16.gmra.mxu0 %v1856
      %v1937 = vpop.f32.mrf.mxu0
      %v1938 = vadd.f32 0.0, %v1937
      %v1939 = vpop.f32.mrf.mxu0
      %v1940 = vpop.f32.mrf.mxu0
      %v1941 = vadd.f32 0.0, %v1940
      %v1942 = vpop.f32.mrf.mxu0
      %1943 = vmatprep.mubr.bf16.mxu0 0
      %1944 = vmatmul.mubr.bf16.gmra.mxu0 %v1859
      %v1945 = vpop.f32.mrf.mxu0
      %v1946 = vadd.f32 0.0, %v1945
      %v1947 = vpop.f32.mrf.mxu0
      %v1948 = vpop.f32.mrf.mxu0
      %v1949 = vadd.f32 0.0, %v1948
      %v1950 = vpop.f32.mrf.mxu0
      %1951 = vmatprep.mubr.bf16.mxu0 0
      %1952 = vmatmul.mubr.bf16.gmra.mxu0 %v1862
      %v1953 = vpop.f32.mrf.mxu0
      %v1954 = vadd.f32 0.0, %v1953
      %v1955 = vpop.f32.mrf.mxu0
      %v1956 = vpop.f32.mrf.mxu0
      %v1957 = vadd.f32 0.0, %v1956
      %v1958 = vpop.f32.mrf.mxu0
      %1959 = vmatprep.mubr.bf16.mxu0 0
      %1960 = vmatmul.mubr.bf16.gmra.mxu0 %v1865
      %v1961 = vpop.f32.mrf.mxu0
      %v1962 = vadd.f32 0.0, %v1961
      %v1963 = vpop.f32.mrf.mxu0
      %v1964 = vpop.f32.mrf.mxu0
      %v1965 = vadd.f32 0.0, %v1964
      %v1966 = vpop.f32.mrf.mxu0
      %1967 = vmatprep.mubr.bf16.mxu0 0
      %1968 = vmatmul.mubr.bf16.gmra.mxu0 %v1868
      %v1969 = vpop.f32.mrf.mxu0
      %v1970 = vadd.f32 0.0, %v1969
      %v1971 = vpop.f32.mrf.mxu0
      %v1972 = vpop.f32.mrf.mxu0
      %v1973 = vadd.f32 0.0, %v1972
      %v1974 = vpop.f32.mrf.mxu0
      %1975 = vmatprep.mubr.bf16.mxu0 0
      %1976 = vmatmul.mubr.bf16.gmra.mxu0 %v1871
      %v1977 = vpop.f32.mrf.mxu0
      %v1978 = vadd.f32 0.0, %v1977
      %v1979 = vpop.f32.mrf.mxu0
      %v1980 = vpop.f32.mrf.mxu0
      %v1981 = vadd.f32 0.0, %v1980
      %v1982 = vpop.f32.mrf.mxu0
      %1983 = vmatprep.mubr.bf16.mxu0 0
      %1984 = vmatmul.mubr.bf16.gmra.mxu0 %v1874
      %v1985 = vpop.f32.mrf.mxu0
      %v1986 = vadd.f32 0.0, %v1985
      %v1987 = vpop.f32.mrf.mxu0
      %v1988 = vpop.f32.mrf.mxu0
      %v1989 = vadd.f32 0.0, %v1988
      %v1990 = vpop.f32.mrf.mxu0
      %1991 = vmatprep.mubr.bf16.mxu0 0
      %1992 = vmatmul.mubr.bf16.gmra.mxu0 %v1877
      %v1993 = vpop.f32.mrf.mxu0
      %v1994 = vadd.f32 0.0, %v1993
      %v1995 = vpop.f32.mrf.mxu0
      %v1996 = vpop.f32.mrf.mxu0
      %v1997 = vadd.f32 0.0, %v1996
      %v1998 = vpop.f32.mrf.mxu0
      %1999 = vmatprep.mubr.bf16.mxu0 0
      %2000 = vmatmul.mubr.bf16.gmra.mxu0 %v1880
      %v2001 = vpop.f32.mrf.mxu0
      %v2002 = vadd.f32 0.0, %v2001
      %v2003 = vpop.f32.mrf.mxu0
      %v2004 = vpop.f32.mrf.mxu0
      %v2005 = vadd.f32 0.0, %v2004
      %v2006 = vpop.f32.mrf.mxu0
      %2007 = vmatprep.mubr.bf16.mxu0 0
      %2008 = vmatmul.mubr.bf16.gmra.mxu0 %v1883
      %v2009 = vpop.f32.mrf.mxu0
      %v2010 = vadd.f32 0.0, %v2009
      %v2011 = vpop.f32.mrf.mxu0
      %v2012 = vpop.f32.mrf.mxu0
      %v2013 = vadd.f32 0.0, %v2012
      %v2014 = vpop.f32.mrf.mxu0
      %2015 = vmatprep.mubr.bf16.mxu0 0
      %2016 = vmatmul.mubr.bf16.gmra.mxu0 %v1886
      %v2017 = vpop.f32.mrf.mxu0
      %v2018 = vadd.f32 0.0, %v2017
      %v2019 = vpop.f32.mrf.mxu0
      %v2020 = vpop.f32.mrf.mxu0
      %v2021 = vadd.f32 0.0, %v2020
      %v2022 = vpop.f32.mrf.mxu0
      %2023 = vmatprep.mubr.bf16.mxu0 0
      %2024 = vmatmul.mubr.bf16.gmra.mxu0 %v1889
      %v2025 = vpop.f32.mrf.mxu0
      %v2026 = vadd.f32 0.0, %v2025
      %v2027 = vpop.f32.mrf.mxu0
      %v2028 = vpop.f32.mrf.mxu0
      %v2029 = vadd.f32 0.0, %v2028
      %v2030 = vpop.f32.mrf.mxu0
      %2031 = vmatprep.mubr.bf16.mxu0 0
      %2032 = vmatmul.mubr.bf16.gmra.mxu0 %v1892
      %v2033 = vpop.f32.mrf.mxu0
      %v2034 = vadd.f32 0.0, %v2033
      %v2035 = vpop.f32.mrf.mxu0
      %v2036 = vpop.f32.mrf.mxu0
      %v2037 = vadd.f32 0.0, %v2036
      %v2038 = vpop.f32.mrf.mxu0
      %2039 = vmatprep.mubr.bf16.mxu0 0
      %2040 = vmatmul.mubr.bf16.gmra.mxu0 %v1895
      %v2041 = vpop.f32.mrf.mxu0
      %v2042 = vadd.f32 0.0, %v2041
      %v2043 = vpop.f32.mrf.mxu0
      %v2044 = vpop.f32.mrf.mxu0
      %v2045 = vadd.f32 0.0, %v2044
      %v2046 = vpop.f32.mrf.mxu0
      %2047 = vmatprep.mubr.bf16.mxu0 0
      %2048 = vmatmul.mubr.bf16.gmra.mxu0 %v1898
      %v2049 = vpop.f32.mrf.mxu0
      %v2050 = vadd.f32 0.0, %v2049
      %v2051 = vpop.f32.mrf.mxu0
      %v2052 = vpop.f32.mrf.mxu0
      %v2053 = vadd.f32 0.0, %v2052
      %v2054 = vpop.f32.mrf.mxu0
      %2055 = vmatprep.mubr.bf16.mxu0 0
      %2056 = vmatmul.mubr.bf16.gmra.mxu0 %v1901
      %v2057 = vpop.f32.mrf.mxu0
      %v2058 = vadd.f32 0.0, %v2057
      %v2059 = vpop.f32.mrf.mxu0
      %v2060 = vpop.f32.mrf.mxu0
      %v2061 = vadd.f32 0.0, %v2060
      %v2062 = vpop.f32.mrf.mxu0
      %2063 = vdwg.mxu0
      %2065 = vset.pattern.permute.xlu0 0
      %2066 = vperm.xlu0 %2065, %v1938
      %v2067 = vpop.permute.xlu0 %2066
      %2070 = vset.pattern.permute.xlu0 0
      %2071 = vperm.xlu0 %2070, %v1941
      %v2072 = vpop.permute.xlu0 %2071
      %2075 = vset.pattern.permute.xlu0 0
      %2076 = vperm.xlu0 %2075, %v1946
      %v2077 = vpop.permute.xlu0 %2076
      %2080 = vset.pattern.permute.xlu0 0
      %2081 = vperm.xlu0 %2080, %v1949
      %v2082 = vpop.permute.xlu0 %2081
      %2085 = vset.pattern.permute.xlu0 0
      %2086 = vperm.xlu0 %2085, %v1954
      %v2087 = vpop.permute.xlu0 %2086
      %2090 = vset.pattern.permute.xlu0 0
      %2091 = vperm.xlu0 %2090, %v1957
      %v2092 = vpop.permute.xlu0 %2091
      %2095 = vset.pattern.permute.xlu0 0
      %2096 = vperm.xlu0 %2095, %v1962
      %v2097 = vpop.permute.xlu0 %2096
      %2100 = vset.pattern.permute.xlu0 0
      %2101 = vperm.xlu0 %2100, %v1965
      %v2102 = vpop.permute.xlu0 %2101
      %2105 = vset.pattern.permute.xlu0 0
      %2106 = vperm.xlu0 %2105, %v1970
      %v2107 = vpop.permute.xlu0 %2106
      %2110 = vset.pattern.permute.xlu0 0
      %2111 = vperm.xlu0 %2110, %v1973
      %v2112 = vpop.permute.xlu0 %2111
      %2115 = vset.pattern.permute.xlu0 0
      %2116 = vperm.xlu0 %2115, %v1978
      %v2117 = vpop.permute.xlu0 %2116
      %2120 = vset.pattern.permute.xlu0 0
      %2121 = vperm.xlu0 %2120, %v1981
      %v2122 = vpop.permute.xlu0 %2121
      %2125 = vset.pattern.permute.xlu0 0
      %2126 = vperm.xlu0 %2125, %v1986
      %v2127 = vpop.permute.xlu0 %2126
      %2130 = vset.pattern.permute.xlu0 0
      %2131 = vperm.xlu0 %2130, %v1989
      %v2132 = vpop.permute.xlu0 %2131
      %2135 = vset.pattern.permute.xlu0 0
      %2136 = vperm.xlu0 %2135, %v1994
      %v2137 = vpop.permute.xlu0 %2136
      %2140 = vset.pattern.permute.xlu0 0
      %2141 = vperm.xlu0 %2140, %v1997
      %v2142 = vpop.permute.xlu0 %2141
      %2145 = vset.pattern.permute.xlu0 0
      %2146 = vperm.xlu0 %2145, %v2002
      %v2147 = vpop.permute.xlu0 %2146
      %2150 = vset.pattern.permute.xlu0 0
      %2151 = vperm.xlu0 %2150, %v2005
      %v2152 = vpop.permute.xlu0 %2151
      %2155 = vset.pattern.permute.xlu0 0
      %2156 = vperm.xlu0 %2155, %v2010
      %v2157 = vpop.permute.xlu0 %2156
      %2160 = vset.pattern.permute.xlu0 0
      %2161 = vperm.xlu0 %2160, %v2013
      %v2162 = vpop.permute.xlu0 %2161
      %2165 = vset.pattern.permute.xlu0 0
      %2166 = vperm.xlu0 %2165, %v2018
      %v2167 = vpop.permute.xlu0 %2166
      %2170 = vset.pattern.permute.xlu0 0
      %2171 = vperm.xlu0 %2170, %v2021
      %v2172 = vpop.permute.xlu0 %2171
      %2175 = vset.pattern.permute.xlu0 0
      %2176 = vperm.xlu0 %2175, %v2026
      %v2177 = vpop.permute.xlu0 %2176
      %2180 = vset.pattern.permute.xlu0 0
      %2181 = vperm.xlu0 %2180, %v2029
      %v2182 = vpop.permute.xlu0 %2181
      %2185 = vset.pattern.permute.xlu0 0
      %2186 = vperm.xlu0 %2185, %v2034
      %v2187 = vpop.permute.xlu0 %2186
      %2190 = vset.pattern.permute.xlu0 0
      %2191 = vperm.xlu0 %2190, %v2037
      %v2192 = vpop.permute.xlu0 %2191
      %2195 = vset.pattern.permute.xlu0 0
      %2196 = vperm.xlu0 %2195, %v2042
      %v2197 = vpop.permute.xlu0 %2196
      %2200 = vset.pattern.permute.xlu0 0
      %2201 = vperm.xlu0 %2200, %v2045
      %v2202 = vpop.permute.xlu0 %2201
      %2205 = vset.pattern.permute.xlu0 0
      %2206 = vperm.xlu0 %2205, %v2050
      %v2207 = vpop.permute.xlu0 %2206
      %2210 = vset.pattern.permute.xlu0 0
      %2211 = vperm.xlu0 %2210, %v2053
      %v2212 = vpop.permute.xlu0 %2211
      %2215 = vset.pattern.permute.xlu0 0
      %2216 = vperm.xlu0 %2215, %v2058
      %v2217 = vpop.permute.xlu0 %2216
      %2220 = vset.pattern.permute.xlu0 0
      %2221 = vperm.xlu0 %2220, %v2061
      %v2222 = vpop.permute.xlu0 %2221
      %v2224 = vmul.f32 %v924, %v2067
      %v2225 = vmul.f32 %v925, %v2072
      %v2226 = vmul.f32 %v926, %v2077
      %v2227 = vmul.f32 %v927, %v2082
      %v2228 = vmul.f32 %v928, %v2087
      %v2229 = vmul.f32 %v929, %v2092
      %v2230 = vmul.f32 %v930, %v2097
      %v2231 = vmul.f32 %v931, %v2102
      %v2232 = vmul.f32 %v932, %v2107
      %v2233 = vmul.f32 %v933, %v2112
      %v2234 = vmul.f32 %v934, %v2117
      %v2235 = vmul.f32 %v935, %v2122
      %v2236 = vmul.f32 %v936, %v2127
      %v2237 = vmul.f32 %v937, %v2132
      %v2238 = vmul.f32 %v938, %v2137
      %v2239 = vmul.f32 %v939, %v2142
      %v2240 = vmul.f32 %v940, %v2147
      %v2241 = vmul.f32 %v941, %v2152
      %v2242 = vmul.f32 %v942, %v2157
      %v2243 = vmul.f32 %v943, %v2162
      %v2244 = vmul.f32 %v944, %v2167
      %v2245 = vmul.f32 %v945, %v2172
      %v2246 = vmul.f32 %v946, %v2177
      %v2247 = vmul.f32 %v947, %v2182
      %v2248 = vmul.f32 %v948, %v2187
      %v2249 = vmul.f32 %v949, %v2192
      %v2250 = vmul.f32 %v950, %v2197
      %v2251 = vmul.f32 %v951, %v2202
      %v2252 = vmul.f32 %v952, %v2207
      %v2253 = vmul.f32 %v953, %v2212
      %v2254 = vmul.f32 %v954, %v2217
      %v2255 = vmul.f32 %v955, %v2222
      %v2256 = vpack.c.bf16 %v2225, %v2224
      %v2257 = vpack.c.bf16 %v2227, %v2226
      %v2258 = vpack.c.bf16 %v2229, %v2228
      %v2259 = vpack.c.bf16 %v2231, %v2230
      %v2260 = vpack.c.bf16 %v2233, %v2232
      %v2261 = vpack.c.bf16 %v2235, %v2234
      %v2262 = vpack.c.bf16 %v2237, %v2236
      %v2263 = vpack.c.bf16 %v2239, %v2238
      %v2264 = vpack.c.bf16 %v2241, %v2240
      %v2265 = vpack.c.bf16 %v2243, %v2242
      %v2266 = vpack.c.bf16 %v2245, %v2244
      %v2267 = vpack.c.bf16 %v2247, %v2246
      %v2268 = vpack.c.bf16 %v2249, %v2248
      %v2269 = vpack.c.bf16 %v2251, %v2250
      %v2270 = vpack.c.bf16 %v2253, %v2252
      %v2271 = vpack.c.bf16 %v2255, %v2254
      %v2272 = vld [vmem:[%s15] sm:$0x3]
      %v2273 = vld [vmem:[%s17] sm:$0x1]
      %v2275 = vlaneseq
      %v2276 = vshrl.u32 %v2275, 7
      %v2277 = vsub.s32 0, %v2276
      %v2278 = vrot.slane %v2273, %v2277
      %v2281 = vsel %vm980, %v2256, 0
      %v2284 = vsel %vm980, %v2257, 0
      %v2287 = vsel %vm980, %v2258, 0
      %v2290 = vsel %vm980, %v2259, 0
      %v2293 = vsel %vm980, %v2260, 0
      %v2296 = vsel %vm980, %v2261, 0
      %v2299 = vsel %vm980, %v2262, 0
      %v2302 = vsel %vm980, %v2263, 0
      %v2305 = vsel %vm980, %v2264, 0
      %v2308 = vsel %vm980, %v2265, 0
      %v2311 = vsel %vm980, %v2266, 0
      %v2314 = vsel %vm980, %v2267, 0
      %v2317 = vsel %vm980, %v2268, 0
      %v2320 = vsel %vm980, %v2269, 0
      %v2323 = vsel %vm980, %v2270, 0
      %v2326 = vsel %vm980, %v2271, 0
      %v2329 = vand.u32 %v2272, %v1032
      %2331 = vmatprep.subr.bf16.mxu0 0
      %2332 = vmatpush1.bf16.msra.mxu0 0
      %2333 = vmatprep.subr.bf16.mxu0 0
      %2334 = vmatpush1.bf16.msra.mxu0 0
      %2335 = vmatprep.subr.bf16.mxu0 0
      %2336 = vmatpush1.bf16.msra.mxu0 0
      %2337 = vmatprep.subr.bf16.mxu0 0
      %2338 = vmatpush1.bf16.msra.mxu0 0
      %2339 = vmatprep.subr.bf16.mxu0 0
      %2340 = vmatpush1.bf16.msra.mxu0 0
      %2341 = vmatprep.subr.bf16.mxu0 0
      %2342 = vmatpush1.bf16.msra.mxu0 0
      %2343 = vmatprep.subr.bf16.mxu0 0
      %2344 = vmatpush1.bf16.msra.mxu0 0
      %2345 = vmatprep.subr.bf16.mxu0 0
      %2346 = vmatpush1.bf16.msra.mxu0 %v2329
      %2347 = vmatprep.subr.bf16.mxu0 0
      %2348 = vmatpush2.bf16.msra.mxu0 0
      %2349 = vmatprep.subr.bf16.mxu0 0
      %2350 = vmatpush2.bf16.msra.mxu0 0
      %2351 = vmatprep.subr.bf16.mxu0 0
      %2352 = vmatpush2.bf16.msra.mxu0 0
      %2353 = vmatprep.subr.bf16.mxu0 0
      %2354 = vmatpush2.bf16.msra.mxu0 0
      %2355 = vmatprep.subr.bf16.mxu0 0
      %2356 = vmatpush2.bf16.msra.mxu0 0
      %2357 = vmatprep.subr.bf16.mxu0 0
      %2358 = vmatpush2.bf16.msra.mxu0 0
      %2359 = vmatprep.subr.bf16.mxu0 0
      %2360 = vmatpush2.bf16.msra.mxu0 0
      %2361 = vmatprep.subr.bf16.mxu0 0
      %2362 = vmatpush2.bf16.msra.mxu0 0
      %2363 = vmatprep.mubr.bf16.mxu0 0
      %2364 = vmatmul.mubr.bf16.gmra.mxu0 %v2281
      %v2365 = vpop.f32.mrf.mxu0
      %v2366 = vadd.f32 %v2278, %v2365
      %v2367 = vpop.f32.mrf.mxu0
      %v2368 = vpop.f32.mrf.mxu0
      %v2369 = vadd.f32 %v2278, %v2368
      %v2370 = vpop.f32.mrf.mxu0
      %2371 = vmatprep.mubr.bf16.mxu0 0
      %2372 = vmatmul.mubr.bf16.gmra.mxu0 %v2284
      %v2373 = vpop.f32.mrf.mxu0
      %v2374 = vadd.f32 %v2278, %v2373
      %v2375 = vpop.f32.mrf.mxu0
      %v2376 = vpop.f32.mrf.mxu0
      %v2377 = vadd.f32 %v2278, %v2376
      %v2378 = vpop.f32.mrf.mxu0
      %2379 = vmatprep.mubr.bf16.mxu0 0
      %2380 = vmatmul.mubr.bf16.gmra.mxu0 %v2287
      %v2381 = vpop.f32.mrf.mxu0
      %v2382 = vadd.f32 %v2278, %v2381
      %v2383 = vpop.f32.mrf.mxu0
      %v2384 = vpop.f32.mrf.mxu0
      %v2385 = vadd.f32 %v2278, %v2384
      %v2386 = vpop.f32.mrf.mxu0
      %2387 = vmatprep.mubr.bf16.mxu0 0
      %2388 = vmatmul.mubr.bf16.gmra.mxu0 %v2290
      %v2389 = vpop.f32.mrf.mxu0
      %v2390 = vadd.f32 %v2278, %v2389
      %v2391 = vpop.f32.mrf.mxu0
      %v2392 = vpop.f32.mrf.mxu0
      %v2393 = vadd.f32 %v2278, %v2392
      %v2394 = vpop.f32.mrf.mxu0
      %2395 = vmatprep.mubr.bf16.mxu0 0
      %2396 = vmatmul.mubr.bf16.gmra.mxu0 %v2293
      %v2397 = vpop.f32.mrf.mxu0
      %v2398 = vadd.f32 %v2278, %v2397
      %v2399 = vpop.f32.mrf.mxu0
      %v2400 = vpop.f32.mrf.mxu0
      %v2401 = vadd.f32 %v2278, %v2400
      %v2402 = vpop.f32.mrf.mxu0
      %2403 = vmatprep.mubr.bf16.mxu0 0
      %2404 = vmatmul.mubr.bf16.gmra.mxu0 %v2296
      %v2405 = vpop.f32.mrf.mxu0
      %v2406 = vadd.f32 %v2278, %v2405
      %v2407 = vpop.f32.mrf.mxu0
      %v2408 = vpop.f32.mrf.mxu0
      %v2409 = vadd.f32 %v2278, %v2408
      %v2410 = vpop.f32.mrf.mxu0
      %2411 = vmatprep.mubr.bf16.mxu0 0
      %2412 = vmatmul.mubr.bf16.gmra.mxu0 %v2299
      %v2413 = vpop.f32.mrf.mxu0
      %v2414 = vadd.f32 %v2278, %v2413
      %v2415 = vpop.f32.mrf.mxu0
      %v2416 = vpop.f32.mrf.mxu0
      %v2417 = vadd.f32 %v2278, %v2416
      %v2418 = vpop.f32.mrf.mxu0
      %2419 = vmatprep.mubr.bf16.mxu0 0
      %2420 = vmatmul.mubr.bf16.gmra.mxu0 %v2302
      %v2421 = vpop.f32.mrf.mxu0
      %v2422 = vadd.f32 %v2278, %v2421
      %v2423 = vpop.f32.mrf.mxu0
      %v2424 = vpop.f32.mrf.mxu0
      %v2425 = vadd.f32 %v2278, %v2424
      %v2426 = vpop.f32.mrf.mxu0
      %2427 = vmatprep.mubr.bf16.mxu0 0
      %2428 = vmatmul.mubr.bf16.gmra.mxu0 %v2305
      %v2429 = vpop.f32.mrf.mxu0
      %v2430 = vadd.f32 %v2278, %v2429
      %v2431 = vpop.f32.mrf.mxu0
      %v2432 = vpop.f32.mrf.mxu0
      %v2433 = vadd.f32 %v2278, %v2432
      %v2434 = vpop.f32.mrf.mxu0
      %2435 = vmatprep.mubr.bf16.mxu0 0
      %2436 = vmatmul.mubr.bf16.gmra.mxu0 %v2308
      %v2437 = vpop.f32.mrf.mxu0
      %v2438 = vadd.f32 %v2278, %v2437
      %v2439 = vpop.f32.mrf.mxu0
      %v2440 = vpop.f32.mrf.mxu0
      %v2441 = vadd.f32 %v2278, %v2440
      %v2442 = vpop.f32.mrf.mxu0
      %2443 = vmatprep.mubr.bf16.mxu0 0
      %2444 = vmatmul.mubr.bf16.gmra.mxu0 %v2311
      %v2445 = vpop.f32.mrf.mxu0
      %v2446 = vadd.f32 %v2278, %v2445
      %v2447 = vpop.f32.mrf.mxu0
      %v2448 = vpop.f32.mrf.mxu0
      %v2449 = vadd.f32 %v2278, %v2448
      %v2450 = vpop.f32.mrf.mxu0
      %2451 = vmatprep.mubr.bf16.mxu0 0
      %2452 = vmatmul.mubr.bf16.gmra.mxu0 %v2314
      %v2453 = vpop.f32.mrf.mxu0
      %v2454 = vadd.f32 %v2278, %v2453
      %v2455 = vpop.f32.mrf.mxu0
      %v2456 = vpop.f32.mrf.mxu0
      %v2457 = vadd.f32 %v2278, %v2456
      %v2458 = vpop.f32.mrf.mxu0
      %2459 = vmatprep.mubr.bf16.mxu0 0
      %2460 = vmatmul.mubr.bf16.gmra.mxu0 %v2317
      %v2461 = vpop.f32.mrf.mxu0
      %v2462 = vadd.f32 %v2278, %v2461
      %v2463 = vpop.f32.mrf.mxu0
      %v2464 = vpop.f32.mrf.mxu0
      %v2465 = vadd.f32 %v2278, %v2464
      %v2466 = vpop.f32.mrf.mxu0
      %2467 = vmatprep.mubr.bf16.mxu0 0
      %2468 = vmatmul.mubr.bf16.gmra.mxu0 %v2320
      %v2469 = vpop.f32.mrf.mxu0
      %v2470 = vadd.f32 %v2278, %v2469
      %v2471 = vpop.f32.mrf.mxu0
      %v2472 = vpop.f32.mrf.mxu0
      %v2473 = vadd.f32 %v2278, %v2472
      %v2474 = vpop.f32.mrf.mxu0
      %2475 = vmatprep.mubr.bf16.mxu0 0
      %2476 = vmatmul.mubr.bf16.gmra.mxu0 %v2323
      %v2477 = vpop.f32.mrf.mxu0
      %v2478 = vadd.f32 %v2278, %v2477
      %v2479 = vpop.f32.mrf.mxu0
      %v2480 = vpop.f32.mrf.mxu0
      %v2481 = vadd.f32 %v2278, %v2480
      %v2482 = vpop.f32.mrf.mxu0
      %2483 = vmatprep.mubr.bf16.mxu0 0
      %2484 = vmatmul.mubr.bf16.gmra.mxu0 %v2326
      %v2485 = vpop.f32.mrf.mxu0
      %v2486 = vadd.f32 %v2278, %v2485
      %v2487 = vpop.f32.mrf.mxu0
      %v2488 = vpop.f32.mrf.mxu0
      %v2489 = vadd.f32 %v2278, %v2488
      %v2490 = vpop.f32.mrf.mxu0
      %2491 = vdwg.mxu0
      %v2492 = vmax.f32 %v2366, 0.0
      %v2493 = vmax.f32 %v2369, 0.0
      %v2494 = vmax.f32 %v2374, 0.0
      %v2495 = vmax.f32 %v2377, 0.0
      %v2496 = vmax.f32 %v2382, 0.0
      %v2497 = vmax.f32 %v2385, 0.0
      %v2498 = vmax.f32 %v2390, 0.0
      %v2499 = vmax.f32 %v2393, 0.0
      %v2500 = vmax.f32 %v2398, 0.0
      %v2501 = vmax.f32 %v2401, 0.0
      %v2502 = vmax.f32 %v2406, 0.0
      %v2503 = vmax.f32 %v2409, 0.0
      %v2504 = vmax.f32 %v2414, 0.0
      %v2505 = vmax.f32 %v2417, 0.0
      %v2506 = vmax.f32 %v2422, 0.0
      %v2507 = vmax.f32 %v2425, 0.0
      %v2508 = vmax.f32 %v2430, 0.0
      %v2509 = vmax.f32 %v2433, 0.0
      %v2510 = vmax.f32 %v2438, 0.0
      %v2511 = vmax.f32 %v2441, 0.0
      %v2512 = vmax.f32 %v2446, 0.0
      %v2513 = vmax.f32 %v2449, 0.0
      %v2514 = vmax.f32 %v2454, 0.0
      %v2515 = vmax.f32 %v2457, 0.0
      %v2516 = vmax.f32 %v2462, 0.0
      %v2517 = vmax.f32 %v2465, 0.0
      %v2518 = vmax.f32 %v2470, 0.0
      %v2519 = vmax.f32 %v2473, 0.0
      %v2520 = vmax.f32 %v2478, 0.0
      %v2521 = vmax.f32 %v2481, 0.0
      %v2522 = vmax.f32 %v2486, 0.0
      %v2523 = vmax.f32 %v2489, 0.0
      %v2524 = vpack.c.bf16 %v2493, %v2492
      %v2525 = vpack.c.bf16 %v2495, %v2494
      %v2526 = vpack.c.bf16 %v2497, %v2496
      %v2527 = vpack.c.bf16 %v2499, %v2498
      %v2528 = vpack.c.bf16 %v2501, %v2500
      %v2529 = vpack.c.bf16 %v2503, %v2502
      %v2530 = vpack.c.bf16 %v2505, %v2504
      %v2531 = vpack.c.bf16 %v2507, %v2506
      %v2532 = vpack.c.bf16 %v2509, %v2508
      %v2533 = vpack.c.bf16 %v2511, %v2510
      %v2534 = vpack.c.bf16 %v2513, %v2512
      %v2535 = vpack.c.bf16 %v2515, %v2514
      %v2536 = vpack.c.bf16 %v2517, %v2516
      %v2537 = vpack.c.bf16 %v2519, %v2518
      %v2538 = vpack.c.bf16 %v2521, %v2520
      %v2539 = vpack.c.bf16 %v2523, %v2522
      %2540 = vmatprep.subr.bf16.mxu0 0
      %2541 = vmatpush1.bf16.msra.mxu0 %v2531
      %2542 = vmatprep.subr.bf16.mxu0 0
      %2543 = vmatpush1.bf16.msra.mxu0 %v2530
      %2544 = vmatprep.subr.bf16.mxu0 0
      %2545 = vmatpush1.bf16.msra.mxu0 %v2529
      %2546 = vmatprep.subr.bf16.mxu0 0
      %2547 = vmatpush1.bf16.msra.mxu0 %v2528
      %2548 = vmatprep.subr.bf16.mxu0 0
      %2549 = vmatpush1.bf16.msra.mxu0 %v2527
      %2550 = vmatprep.subr.bf16.mxu0 0
      %2551 = vmatpush1.bf16.msra.mxu0 %v2526
      %2552 = vmatprep.subr.bf16.mxu0 0
      %2553 = vmatpush1.bf16.msra.mxu0 %v2525
      %2554 = vmatprep.subr.bf16.mxu0 0
      %2555 = vmatpush1.bf16.msra.mxu0 %v2524
      %2556 = vmatprep.subr.bf16.mxu0 0
      %2557 = vmatpush2.bf16.msra.mxu0 %v2539
      %2558 = vmatprep.subr.bf16.mxu0 0
      %2559 = vmatpush2.bf16.msra.mxu0 %v2538
      %2560 = vmatprep.subr.bf16.mxu0 0
      %2561 = vmatpush2.bf16.msra.mxu0 %v2537
      %2562 = vmatprep.subr.bf16.mxu0 0
      %2563 = vmatpush2.bf16.msra.mxu0 %v2536
      %2564 = vmatprep.subr.bf16.mxu0 0
      %2565 = vmatpush2.bf16.msra.mxu0 %v2535
      %2566 = vmatprep.subr.bf16.mxu0 0
      %2567 = vmatpush2.bf16.msra.mxu0 %v2534
      %2568 = vmatprep.subr.bf16.mxu0 0
      %2569 = vmatpush2.bf16.msra.mxu0 %v2533
      %2570 = vmatprep.subr.bf16.mxu0 0
      %2571 = vmatpush2.bf16.msra.mxu0 %v2532
      %2572 = vmatprep.mubr.bf16.mxu0 %v1278
      %2573 = vmatmul.mubr.bf16.gmra.mxu0 %v1277
      %v2574 = vpop.f32.mrf.mxu0
      %v2575 = vadd.f32 0.0, %v2574
      %v2576 = vpop.f32.mrf.mxu0
      %v2577 = vpop.f32.mrf.mxu0
      %v2578 = vadd.f32 0.0, %v2577
      %v2579 = vpop.f32.mrf.mxu0
      %2580 = vmatprep.mubr.bf16.mxu0 %v1280
      %2581 = vmatmul.mubr.bf16.gmra.mxu0 %v1279
      %v2582 = vpop.f32.mrf.mxu0
      %v2583 = vadd.f32 0.0, %v2582
      %v2584 = vpop.f32.mrf.mxu0
      %v2585 = vpop.f32.mrf.mxu0
      %v2586 = vadd.f32 0.0, %v2585
      %v2587 = vpop.f32.mrf.mxu0
      %2588 = vmatprep.mubr.bf16.mxu0 %v1282
      %2589 = vmatmul.mubr.bf16.gmra.mxu0 %v1281
      %v2590 = vpop.f32.mrf.mxu0
      %v2591 = vadd.f32 0.0, %v2590
      %v2592 = vpop.f32.mrf.mxu0
      %v2593 = vpop.f32.mrf.mxu0
      %v2594 = vadd.f32 0.0, %v2593
      %v2595 = vpop.f32.mrf.mxu0
      %2596 = vmatprep.mubr.bf16.mxu0 %v1284
      %2597 = vmatmul.mubr.bf16.gmra.mxu0 %v1283
      %v2598 = vpop.f32.mrf.mxu0
      %v2599 = vadd.f32 0.0, %v2598
      %v2600 = vpop.f32.mrf.mxu0
      %v2601 = vpop.f32.mrf.mxu0
      %v2602 = vadd.f32 0.0, %v2601
      %v2603 = vpop.f32.mrf.mxu0
      %2604 = vdwg.mxu0
      %v2605 = vpack.c.bf16 %v2578, %v2575
      %v2606 = vpack.c.bf16 %v2586, %v2583
      %v2607 = vpack.c.bf16 %v2594, %v2591
      %v2608 = vpack.c.bf16 %v2602, %v2599
      %v2609 = vld [vmem:[%s31] sm:$0xf]
      %v2610 = vld [vmem:[%s31 + $0x4] sm:$0xf]
      %v2611 = vld [vmem:[%s33] sm:$0x1]
      %v2613 = vlaneseq
      %v2614 = vshrl.u32 %v2613, 7
      %v2615 = vsub.s32 0, %v2614
      %v2616 = vrot.slane %v2611, %v2615
      %v2620 = vunpack.c.l.b16 %v2609
      %v2621 = vunpack.c.l.b16 %v2610
      %v2622 = vpack.c.b16 %v2621, %v2620
      %v2625 = vsel %vm1854, %v2605, 0
      %v2628 = vsel %vm1854, %v2606, 0
      %v2631 = vsel %vm1854, %v2607, 0
      %v2634 = vsel %vm1854, %v2608, 0
      %2636 = vmatprep.subr.bf16.mxu0 0
      %2637 = vmatpush1.bf16.msra.mxu0 0
      %2638 = vmatprep.subr.bf16.mxu0 0
      %2639 = vmatpush1.bf16.msra.mxu0 0
      %2640 = vmatprep.subr.bf16.mxu0 0
      %2641 = vmatpush1.bf16.msra.mxu0 0
      %2642 = vmatprep.subr.bf16.mxu0 0
      %2643 = vmatpush1.bf16.msra.mxu0 0
      %2644 = vmatprep.subr.bf16.mxu0 0
      %2645 = vmatpush1.bf16.msra.mxu0 0
      %2646 = vmatprep.subr.bf16.mxu0 0
      %2647 = vmatpush1.bf16.msra.mxu0 0
      %2648 = vmatprep.subr.bf16.mxu0 0
      %2649 = vmatpush1.bf16.msra.mxu0 0
      %2650 = vmatprep.subr.bf16.mxu0 0
      %2651 = vmatpush1.bf16.msra.mxu0 %v2622
      %2652 = vmatprep.subr.bf16.mxu0 0
      %2653 = vmatpush2.bf16.msra.mxu0 0
      %2654 = vmatprep.subr.bf16.mxu0 0
      %2655 = vmatpush2.bf16.msra.mxu0 0
      %2656 = vmatprep.subr.bf16.mxu0 0
      %2657 = vmatpush2.bf16.msra.mxu0 0
      %2658 = vmatprep.subr.bf16.mxu0 0
      %2659 = vmatpush2.bf16.msra.mxu0 0
      %2660 = vmatprep.subr.bf16.mxu0 0
      %2661 = vmatpush2.bf16.msra.mxu0 0
      %2662 = vmatprep.subr.bf16.mxu0 0
      %2663 = vmatpush2.bf16.msra.mxu0 0
      %2664 = vmatprep.subr.bf16.mxu0 0
      %2665 = vmatpush2.bf16.msra.mxu0 0
      %2666 = vmatprep.subr.bf16.mxu0 0
      %2667 = vmatpush2.bf16.msra.mxu0 0
      %2668 = vmatprep.mubr.bf16.mxu0 0
      %2669 = vmatmul.mubr.bf16.gmra.mxu0 %v2625
      %v2670 = vpop.f32.mrf.mxu0
      %v2671 = vadd.f32 %v2616, %v2670
      %v2672 = vpop.f32.mrf.mxu0
      %v2673 = vpop.f32.mrf.mxu0
      %v2674 = vadd.f32 %v2616, %v2673
      %v2675 = vpop.f32.mrf.mxu0
      %2676 = vmatprep.mubr.bf16.mxu0 0
      %2677 = vmatmul.mubr.bf16.gmra.mxu0 %v2628
      %v2678 = vpop.f32.mrf.mxu0
      %v2679 = vadd.f32 %v2616, %v2678
      %v2680 = vpop.f32.mrf.mxu0
      %v2681 = vpop.f32.mrf.mxu0
      %v2682 = vadd.f32 %v2616, %v2681
      %v2683 = vpop.f32.mrf.mxu0
      %2684 = vmatprep.mubr.bf16.mxu0 0
      %2685 = vmatmul.mubr.bf16.gmra.mxu0 %v2631
      %v2686 = vpop.f32.mrf.mxu0
      %v2687 = vadd.f32 %v2616, %v2686
      %v2688 = vpop.f32.mrf.mxu0
      %v2689 = vpop.f32.mrf.mxu0
      %v2690 = vadd.f32 %v2616, %v2689
      %v2691 = vpop.f32.mrf.mxu0
      %2692 = vmatprep.mubr.bf16.mxu0 0
      %2693 = vmatmul.mubr.bf16.gmra.mxu0 %v2634
      %v2694 = vpop.f32.mrf.mxu0
      %v2695 = vadd.f32 %v2616, %v2694
      %v2696 = vpop.f32.mrf.mxu0
      %v2697 = vpop.f32.mrf.mxu0
      %v2698 = vadd.f32 %v2616, %v2697
      %v2699 = vpop.f32.mrf.mxu0
      %2700 = vdwg.mxu0
      %v2701 = vmax.f32 %v2671, 0.0
      %v2702 = vmax.f32 %v2674, 0.0
      %v2703 = vmax.f32 %v2679, 0.0
      %v2704 = vmax.f32 %v2682, 0.0
      %v2705 = vmax.f32 %v2687, 0.0
      %v2706 = vmax.f32 %v2690, 0.0
      %v2707 = vmax.f32 %v2695, 0.0
      %v2708 = vmax.f32 %v2698, 0.0
      %v2709 = vpack.c.bf16 %v2702, %v2701
      %v2710 = vpack.c.bf16 %v2704, %v2703
      %v2711 = vpack.c.bf16 %v2706, %v2705
      %v2712 = vpack.c.bf16 %v2708, %v2707
      %2713 = vmatprep.subr.bf16.mxu0 0
      %2714 = vmatpush1.bf16.msra.mxu0 0
      %2715 = vmatprep.subr.bf16.mxu0 0
      %2716 = vmatpush1.bf16.msra.mxu0 0
      %2717 = vmatprep.subr.bf16.mxu0 0
      %2718 = vmatpush1.bf16.msra.mxu0 0
      %2719 = vmatprep.subr.bf16.mxu0 0
      %2720 = vmatpush1.bf16.msra.mxu0 0
      %2721 = vmatprep.subr.bf16.mxu0 0
      %2722 = vmatpush1.bf16.msra.mxu0 %v2712
      %2723 = vmatprep.subr.bf16.mxu0 0
      %2724 = vmatpush1.bf16.msra.mxu0 %v2711
      %2725 = vmatprep.subr.bf16.mxu0 0
      %2726 = vmatpush1.bf16.msra.mxu0 %v2710
      %2727 = vmatprep.subr.bf16.mxu0 0
      %2728 = vmatpush1.bf16.msra.mxu0 %v2709
      %2729 = vmatprep.subr.bf16.mxu0 0
      %2730 = vmatpush2.bf16.msra.mxu0 0
      %2731 = vmatprep.subr.bf16.mxu0 0
      %2732 = vmatpush2.bf16.msra.mxu0 0
      %2733 = vmatprep.subr.bf16.mxu0 0
      %2734 = vmatpush2.bf16.msra.mxu0 0
      %2735 = vmatprep.subr.bf16.mxu0 0
      %2736 = vmatpush2.bf16.msra.mxu0 0
      %2737 = vmatprep.subr.bf16.mxu0 0
      %2738 = vmatpush2.bf16.msra.mxu0 0
      %2739 = vmatprep.subr.bf16.mxu0 0
      %2740 = vmatpush2.bf16.msra.mxu0 0
      %2741 = vmatprep.subr.bf16.mxu0 0
      %2742 = vmatpush2.bf16.msra.mxu0 0
      %2743 = vmatprep.subr.bf16.mxu0 0
      %2744 = vmatpush2.bf16.msra.mxu0 0
      %2745 = vmatprep.mubr.bf16.mxu0 0
      %2746 = vmatmul.mubr.bf16.gmra.mxu0 %v1484
      %v2747 = vpop.f32.mrf.mxu0
      %v2748 = vadd.f32 0.0, %v2747
      %v2749 = vpop.f32.mrf.mxu0
      %v2750 = vpop.f32.mrf.mxu0
      %v2751 = vadd.f32 0.0, %v2750
      %v2752 = vpop.f32.mrf.mxu0
      %2753 = vdwg.mxu0
      %v2754 = vpack.c.bf16 %v2751, %v2748
      %v2755 = vld [vmem:[%s35] sm:$0xf]
      %v2756 = vld [vmem:[%s35 + $0x4] sm:$0xf]
      %v2757 = vld [vmem:[%s35 + $0x8] sm:$0xf]
      %v2758 = vld [vmem:[%s35 + $0xc] sm:$0xf]
      %v2759 = vld [vmem:[%s37] sm:$0x1]
      %v2761 = vlaneseq
      %v2762 = vshrl.u32 %v2761, 7
      %v2763 = vsub.s32 0, %v2762
      %v2764 = vrot.slane %v2759, %v2763
      %v2770 = vunpack.c.l.b16 %v2755
      %v2771 = vunpack.c.l.b16 %v2756
      %v2772 = vunpack.c.l.b16 %v2757
      %v2773 = vunpack.c.l.b16 %v2758
      %v2774 = vpack.c.b16 %v2771, %v2770
      %v2775 = vpack.c.b16 %v2773, %v2772
      %v2779 = vsel %vm1385, %v2754, 0
      %2781 = vmatprep.subr.bf16.mxu0 0
      %2782 = vmatpush1.bf16.msra.mxu0 0
      %2783 = vmatprep.subr.bf16.mxu0 0
      %2784 = vmatpush1.bf16.msra.mxu0 0
      %2785 = vmatprep.subr.bf16.mxu0 0
      %2786 = vmatpush1.bf16.msra.mxu0 0
      %2787 = vmatprep.subr.bf16.mxu0 0
      %2788 = vmatpush1.bf16.msra.mxu0 0
      %2789 = vmatprep.subr.bf16.mxu0 0
      %2790 = vmatpush1.bf16.msra.mxu0 0
      %2791 = vmatprep.subr.bf16.mxu0 0
      %2792 = vmatpush1.bf16.msra.mxu0 0
      %2793 = vmatprep.subr.bf16.mxu0 0
      %2794 = vmatpush1.bf16.msra.mxu0 %v2775
      %2795 = vmatprep.subr.bf16.mxu0 0
      %2796 = vmatpush1.bf16.msra.mxu0 %v2774
      %2797 = vmatprep.subr.bf16.mxu0 0
      %2798 = vmatpush2.bf16.msra.mxu0 0
      %2799 = vmatprep.subr.bf16.mxu0 0
      %2800 = vmatpush2.bf16.msra.mxu0 0
      %2801 = vmatprep.subr.bf16.mxu0 0
      %2802 = vmatpush2.bf16.msra.mxu0 0
      %2803 = vmatprep.subr.bf16.mxu0 0
      %2804 = vmatpush2.bf16.msra.mxu0 0
      %2805 = vmatprep.subr.bf16.mxu0 0
      %2806 = vmatpush2.bf16.msra.mxu0 0
      %2807 = vmatprep.subr.bf16.mxu0 0
      %2808 = vmatpush2.bf16.msra.mxu0 0
      %2809 = vmatprep.subr.bf16.mxu0 0
      %2810 = vmatpush2.bf16.msra.mxu0 0
      %2811 = vmatprep.subr.bf16.mxu0 0
      %2812 = vmatpush2.bf16.msra.mxu0 0
      %2813 = vmatprep.mubr.bf16.mxu0 0
      %2814 = vmatmul.mubr.bf16.gmra.mxu0 %v2779
      %v2815 = vpop.f32.mrf.mxu0
      %v2816 = vadd.f32 %v2764, %v2815
      %v2817 = vpop.f32.mrf.mxu0
      %v2818 = vpop.f32.mrf.mxu0
      %v2819 = vadd.f32 %v2764, %v2818
      %v2820 = vpop.f32.mrf.mxu0
      %2821 = vdwg.mxu0
      %v2822 = vmax.f32 %v2816, 0.0
      %v2823 = vmax.f32 %v2819, 0.0
      %v2824 = vpack.c.bf16 %v2823, %v2822
      %v2825 = vld [vmem:[%s39] sm:$0xf]
      %v2826 = vld [vmem:[%s39 + $0x4] sm:$0xf]
      %v2827 = vld [vmem:[%s39 + $0x8] sm:$0xf]
      %v2828 = vld [vmem:[%s39 + $0xc] sm:$0xf]
      %v2829 = vld [vmem:[%s41] sm:$0x1]
      %v2831 = vlaneseq
      %v2832 = vshrl.u32 %v2831, 7
      %v2833 = vsub.s32 0, %v2832
      %v2834 = vrot.slane %v2829, %v2833
      %v2840 = vunpack.c.l.b16 %v2825
      %v2841 = vunpack.c.l.b16 %v2826
      %v2842 = vunpack.c.l.b16 %v2827
      %v2843 = vunpack.c.l.b16 %v2828
      %v2844 = vpack.c.b16 %v2841, %v2840
      %v2845 = vpack.c.b16 %v2843, %v2842
      %v2849 = vsel %vm1385, %v2824, 0
      %2851 = vmatprep.subr.bf16.mxu0 0
      %2852 = vmatpush1.bf16.msra.mxu0 0
      %2853 = vmatprep.subr.bf16.mxu0 0
      %2854 = vmatpush1.bf16.msra.mxu0 0
      %2855 = vmatprep.subr.bf16.mxu0 0
      %2856 = vmatpush1.bf16.msra.mxu0 0
      %2857 = vmatprep.subr.bf16.mxu0 0
      %2858 = vmatpush1.bf16.msra.mxu0 0
      %2859 = vmatprep.subr.bf16.mxu0 0
      %2860 = vmatpush1.bf16.msra.mxu0 0
      %2861 = vmatprep.subr.bf16.mxu0 0
      %2862 = vmatpush1.bf16.msra.mxu0 0
      %2863 = vmatprep.subr.bf16.mxu0 0
      %2864 = vmatpush1.bf16.msra.mxu0 %v2845
      %2865 = vmatprep.subr.bf16.mxu0 0
      %2866 = vmatpush1.bf16.msra.mxu0 %v2844
      %2867 = vmatprep.subr.bf16.mxu0 0
      %2868 = vmatpush2.bf16.msra.mxu0 0
      %2869 = vmatprep.subr.bf16.mxu0 0
      %2870 = vmatpush2.bf16.msra.mxu0 0
      %2871 = vmatprep.subr.bf16.mxu0 0
      %2872 = vmatpush2.bf16.msra.mxu0 0
      %2873 = vmatprep.subr.bf16.mxu0 0
      %2874 = vmatpush2.bf16.msra.mxu0 0
      %2875 = vmatprep.subr.bf16.mxu0 0
      %2876 = vmatpush2.bf16.msra.mxu0 0
      %2877 = vmatprep.subr.bf16.mxu0 0
      %2878 = vmatpush2.bf16.msra.mxu0 0
      %2879 = vmatprep.subr.bf16.mxu0 0
      %2880 = vmatpush2.bf16.msra.mxu0 0
      %2881 = vmatprep.subr.bf16.mxu0 0
      %2882 = vmatpush2.bf16.msra.mxu0 0
      %2883 = vmatprep.mubr.bf16.mxu0 0
      %2884 = vmatmul.mubr.bf16.gmra.mxu0 %v2849
      %v2885 = vpop.f32.mrf.mxu0
      %v2886 = vadd.f32 %v2834, %v2885
      %v2887 = vpop.f32.mrf.mxu0
      %v2888 = vpop.f32.mrf.mxu0
      %v2889 = vadd.f32 %v2834, %v2888
      %v2890 = vpop.f32.mrf.mxu0
      %2891 = vdwg.mxu0
      %v2892 = vsel %vm1713, %v2886, 0.0
      %v2893 = vsel %vm1713, %v2889, 0.0
      %v2894 = vadd.f32 %v2892, %v2893
      %v2895 = vrot.slane %v2894, 4
      %v2896 = vadd.f32 %v2894, %v2895
      %v2897 = vrot.slane %v2896, 2
      %v2898 = vadd.f32 %v2896, %v2897
      %v2899 = vrot.slane %v2898, 1
      %v2900 = vadd.f32 %v2898, %v2899
      %v2901 = vmul.f32 %v2900, %v1707
      %v2902 = vmul.f32 %v2886, %v1709
      %v2903 = vmul.f32 %v2889, %v1710
      %v2904 = vsel %vm1713, %v2902, 0.0
      %2905 = vadd.xlane.f32.xlu0 %v2904
      %v2906 = vpop.xlane.xlu0 %2905
      %v2907 = vsel %vm1713, %v2903, 0.0
      %2908 = vadd.xlane.f32.xlu0 %v2907
      %v2909 = vpop.xlane.xlu0 %2908
      %v2910 = vmin.f32 %v2906, %v2909
      %v2911 = vrot.slane %v2910, 4
      %v2912 = vmin.f32 %v2910, %v2911
      %v2913 = vrot.slane %v2912, 2
      %v2914 = vmin.f32 %v2912, %v2913
      %v2915 = vrot.slane %v2914, 1
      %v2916 = vmin.f32 %v2914, %v2915
      %v2917 = vmax.f32 %v2906, %v2909
      %v2918 = vrot.slane %v2917, 4
      %v2919 = vmax.f32 %v2917, %v2918
      %v2920 = vrot.slane %v2919, 2
      %v2921 = vmax.f32 %v2919, %v2920
      %v2922 = vrot.slane %v2921, 1
      %v2923 = vmax.f32 %v2921, %v2922
      %v2924 = vsub.f32 %v2906, %v2916
      %v2925 = vsub.f32 %v2909, %v2916
      %v2926 = vsub.f32 %v2923, %v2916
      %v2927 = vadd.f32 %v2926, 1e-06
      %v2928 = vrcp.pop %v2927
      %v2929 = vmul.f32 %v2924, %v2928
      %v2930 = vmul.f32 %v2925, %v2928
      %vm2931 = vcmp.gt.f32.partialorder %v2929, 0.5
      %vm2932 = vcmp.gt.f32.partialorder %v2930, 0.5
      %v2933 = vsel %vm2931, 1, 0
      %v2934 = vsel %vm2932, 1, 0
      %v2935 = vcvt.s32.f32 %v2933
      %v2936 = vcvt.s32.f32 %v2934
      %v2937 = vpack.c.bf16 %v2936, %v2935
      %2938 = vmatprep.subr.bf16.mxu0 0
      %2939 = vmatpush1.bf16.msra.mxu0 0
      %2940 = vmatprep.subr.bf16.mxu0 0
      %2941 = vmatpush1.bf16.msra.mxu0 0
      %2942 = vmatprep.subr.bf16.mxu0 0
      %2943 = vmatpush1.bf16.msra.mxu0 0
      %2944 = vmatprep.subr.bf16.mxu0 0
      %2945 = vmatpush1.bf16.msra.mxu0 0
      %2946 = vmatprep.subr.bf16.mxu0 0
      %2947 = vmatpush1.bf16.msra.mxu0 0
      %2948 = vmatprep.subr.bf16.mxu0 0
      %2949 = vmatpush1.bf16.msra.mxu0 0
      %2950 = vmatprep.subr.bf16.mxu0 0
      %2951 = vmatpush1.bf16.msra.mxu0 0
      %2952 = vmatprep.subr.bf16.mxu0 0
      %2953 = vmatpush1.bf16.msra.mxu0 %v2937
      %2954 = vmatprep.subr.bf16.mxu0 0
      %2955 = vmatpush2.bf16.msra.mxu0 0
      %2956 = vmatprep.subr.bf16.mxu0 0
      %2957 = vmatpush2.bf16.msra.mxu0 0
      %2958 = vmatprep.subr.bf16.mxu0 0
      %2959 = vmatpush2.bf16.msra.mxu0 0
      %2960 = vmatprep.subr.bf16.mxu0 0
      %2961 = vmatpush2.bf16.msra.mxu0 0
      %2962 = vmatprep.subr.bf16.mxu0 0
      %2963 = vmatpush2.bf16.msra.mxu0 0
      %2964 = vmatprep.subr.bf16.mxu0 0
      %2965 = vmatpush2.bf16.msra.mxu0 0
      %2966 = vmatprep.subr.bf16.mxu0 0
      %2967 = vmatpush2.bf16.msra.mxu0 0
      %2968 = vmatprep.subr.bf16.mxu0 0
      %2969 = vmatpush2.bf16.msra.mxu0 0
      %2970 = vmatprep.mubr.bf16.mxu0 0
      %2971 = vmatmul.mubr.bf16.gmra.mxu0 %v1856
      %v2972 = vpop.f32.mrf.mxu0
      %v2973 = vadd.f32 0.0, %v2972
      %v2974 = vpop.f32.mrf.mxu0
      %v2975 = vpop.f32.mrf.mxu0
      %v2976 = vadd.f32 0.0, %v2975
      %v2977 = vpop.f32.mrf.mxu0
      %2978 = vmatprep.mubr.bf16.mxu0 0
      %2979 = vmatmul.mubr.bf16.gmra.mxu0 %v1859
      %v2980 = vpop.f32.mrf.mxu0
      %v2981 = vadd.f32 0.0, %v2980
      %v2982 = vpop.f32.mrf.mxu0
      %v2983 = vpop.f32.mrf.mxu0
      %v2984 = vadd.f32 0.0, %v2983
      %v2985 = vpop.f32.mrf.mxu0
      %2986 = vmatprep.mubr.bf16.mxu0 0
      %2987 = vmatmul.mubr.bf16.gmra.mxu0 %v1862
      %v2988 = vpop.f32.mrf.mxu0
      %v2989 = vadd.f32 0.0, %v2988
      %v2990 = vpop.f32.mrf.mxu0
      %v2991 = vpop.f32.mrf.mxu0
      %v2992 = vadd.f32 0.0, %v2991
      %v2993 = vpop.f32.mrf.mxu0
      %2994 = vmatprep.mubr.bf16.mxu0 0
      %2995 = vmatmul.mubr.bf16.gmra.mxu0 %v1865
      %v2996 = vpop.f32.mrf.mxu0
      %v2997 = vadd.f32 0.0, %v2996
      %v2998 = vpop.f32.mrf.mxu0
      %v2999 = vpop.f32.mrf.mxu0
      %v3000 = vadd.f32 0.0, %v2999
      %v3001 = vpop.f32.mrf.mxu0
      %3002 = vmatprep.mubr.bf16.mxu0 0
      %3003 = vmatmul.mubr.bf16.gmra.mxu0 %v1868
      %v3004 = vpop.f32.mrf.mxu0
      %v3005 = vadd.f32 0.0, %v3004
      %v3006 = vpop.f32.mrf.mxu0
      %v3007 = vpop.f32.mrf.mxu0
      %v3008 = vadd.f32 0.0, %v3007
      %v3009 = vpop.f32.mrf.mxu0
      %3010 = vmatprep.mubr.bf16.mxu0 0
      %3011 = vmatmul.mubr.bf16.gmra.mxu0 %v1871
      %v3012 = vpop.f32.mrf.mxu0
      %v3013 = vadd.f32 0.0, %v3012
      %v3014 = vpop.f32.mrf.mxu0
      %v3015 = vpop.f32.mrf.mxu0
      %v3016 = vadd.f32 0.0, %v3015
      %v3017 = vpop.f32.mrf.mxu0
      %3018 = vmatprep.mubr.bf16.mxu0 0
      %3019 = vmatmul.mubr.bf16.gmra.mxu0 %v1874
      %v3020 = vpop.f32.mrf.mxu0
      %v3021 = vadd.f32 0.0, %v3020
      %v3022 = vpop.f32.mrf.mxu0
      %v3023 = vpop.f32.mrf.mxu0
      %v3024 = vadd.f32 0.0, %v3023
      %v3025 = vpop.f32.mrf.mxu0
      %3026 = vmatprep.mubr.bf16.mxu0 0
      %3027 = vmatmul.mubr.bf16.gmra.mxu0 %v1877
      %v3028 = vpop.f32.mrf.mxu0
      %v3029 = vadd.f32 0.0, %v3028
      %v3030 = vpop.f32.mrf.mxu0
      %v3031 = vpop.f32.mrf.mxu0
      %v3032 = vadd.f32 0.0, %v3031
      %v3033 = vpop.f32.mrf.mxu0
      %3034 = vmatprep.mubr.bf16.mxu0 0
      %3035 = vmatmul.mubr.bf16.gmra.mxu0 %v1880
      %v3036 = vpop.f32.mrf.mxu0
      %v3037 = vadd.f32 0.0, %v3036
      %v3038 = vpop.f32.mrf.mxu0
      %v3039 = vpop.f32.mrf.mxu0
      %v3040 = vadd.f32 0.0, %v3039
      %v3041 = vpop.f32.mrf.mxu0
      %3042 = vmatprep.mubr.bf16.mxu0 0
      %3043 = vmatmul.mubr.bf16.gmra.mxu0 %v1883
      %v3044 = vpop.f32.mrf.mxu0
      %v3045 = vadd.f32 0.0, %v3044
      %v3046 = vpop.f32.mrf.mxu0
      %v3047 = vpop.f32.mrf.mxu0
      %v3048 = vadd.f32 0.0, %v3047
      %v3049 = vpop.f32.mrf.mxu0
      %3050 = vmatprep.mubr.bf16.mxu0 0
      %3051 = vmatmul.mubr.bf16.gmra.mxu0 %v1886
      %v3052 = vpop.f32.mrf.mxu0
      %v3053 = vadd.f32 0.0, %v3052
      %v3054 = vpop.f32.mrf.mxu0
      %v3055 = vpop.f32.mrf.mxu0
      %v3056 = vadd.f32 0.0, %v3055
      %v3057 = vpop.f32.mrf.mxu0
      %3058 = vmatprep.mubr.bf16.mxu0 0
      %3059 = vmatmul.mubr.bf16.gmra.mxu0 %v1889
      %v3060 = vpop.f32.mrf.mxu0
      %v3061 = vadd.f32 0.0, %v3060
      %v3062 = vpop.f32.mrf.mxu0
      %v3063 = vpop.f32.mrf.mxu0
      %v3064 = vadd.f32 0.0, %v3063
      %v3065 = vpop.f32.mrf.mxu0
      %3066 = vmatprep.mubr.bf16.mxu0 0
      %3067 = vmatmul.mubr.bf16.gmra.mxu0 %v1892
      %v3068 = vpop.f32.mrf.mxu0
      %v3069 = vadd.f32 0.0, %v3068
      %v3070 = vpop.f32.mrf.mxu0
      %v3071 = vpop.f32.mrf.mxu0
      %v3072 = vadd.f32 0.0, %v3071
      %v3073 = vpop.f32.mrf.mxu0
      %3074 = vmatprep.mubr.bf16.mxu0 0
      %3075 = vmatmul.mubr.bf16.gmra.mxu0 %v1895
      %v3076 = vpop.f32.mrf.mxu0
      %v3077 = vadd.f32 0.0, %v3076
      %v3078 = vpop.f32.mrf.mxu0
      %v3079 = vpop.f32.mrf.mxu0
      %v3080 = vadd.f32 0.0, %v3079
      %v3081 = vpop.f32.mrf.mxu0
      %3082 = vmatprep.mubr.bf16.mxu0 0
      %3083 = vmatmul.mubr.bf16.gmra.mxu0 %v1898
      %v3084 = vpop.f32.mrf.mxu0
      %v3085 = vadd.f32 0.0, %v3084
      %v3086 = vpop.f32.mrf.mxu0
      %v3087 = vpop.f32.mrf.mxu0
      %v3088 = vadd.f32 0.0, %v3087
      %v3089 = vpop.f32.mrf.mxu0
      %3090 = vmatprep.mubr.bf16.mxu0 0
      %3091 = vmatmul.mubr.bf16.gmra.mxu0 %v1901
      %v3092 = vpop.f32.mrf.mxu0
      %v3093 = vadd.f32 0.0, %v3092
      %v3094 = vpop.f32.mrf.mxu0
      %v3095 = vpop.f32.mrf.mxu0
      %v3096 = vadd.f32 0.0, %v3095
      %v3097 = vpop.f32.mrf.mxu0
      %3098 = vdwg.mxu0
      %3100 = vset.pattern.permute.xlu0 0
      %3101 = vperm.xlu0 %3100, %v2973
      %v3102 = vpop.permute.xlu0 %3101
      %3105 = vset.pattern.permute.xlu0 0
      %3106 = vperm.xlu0 %3105, %v2976
      %v3107 = vpop.permute.xlu0 %3106
      %3110 = vset.pattern.permute.xlu0 0
      %3111 = vperm.xlu0 %3110, %v2981
      %v3112 = vpop.permute.xlu0 %3111
      %3115 = vset.pattern.permute.xlu0 0
      %3116 = vperm.xlu0 %3115, %v2984
      %v3117 = vpop.permute.xlu0 %3116
      %3120 = vset.pattern.permute.xlu0 0
      %3121 = vperm.xlu0 %3120, %v2989
      %v3122 = vpop.permute.xlu0 %3121
      %3125 = vset.pattern.permute.xlu0 0
      %3126 = vperm.xlu0 %3125, %v2992
      %v3127 = vpop.permute.xlu0 %3126
      %3130 = vset.pattern.permute.xlu0 0
      %3131 = vperm.xlu0 %3130, %v2997
      %v3132 = vpop.permute.xlu0 %3131
      %3135 = vset.pattern.permute.xlu0 0
      %3136 = vperm.xlu0 %3135, %v3000
      %v3137 = vpop.permute.xlu0 %3136
      %3140 = vset.pattern.permute.xlu0 0
      %3141 = vperm.xlu0 %3140, %v3005
      %v3142 = vpop.permute.xlu0 %3141
      %3145 = vset.pattern.permute.xlu0 0
      %3146 = vperm.xlu0 %3145, %v3008
      %v3147 = vpop.permute.xlu0 %3146
      %3150 = vset.pattern.permute.xlu0 0
      %3151 = vperm.xlu0 %3150, %v3013
      %v3152 = vpop.permute.xlu0 %3151
      %3155 = vset.pattern.permute.xlu0 0
      %3156 = vperm.xlu0 %3155, %v3016
      %v3157 = vpop.permute.xlu0 %3156
      %3160 = vset.pattern.permute.xlu0 0
      %3161 = vperm.xlu0 %3160, %v3021
      %v3162 = vpop.permute.xlu0 %3161
      %3165 = vset.pattern.permute.xlu0 0
      %3166 = vperm.xlu0 %3165, %v3024
      %v3167 = vpop.permute.xlu0 %3166
      %3170 = vset.pattern.permute.xlu0 0
      %3171 = vperm.xlu0 %3170, %v3029
      %v3172 = vpop.permute.xlu0 %3171
      %3175 = vset.pattern.permute.xlu0 0
      %3176 = vperm.xlu0 %3175, %v3032
      %v3177 = vpop.permute.xlu0 %3176
      %3180 = vset.pattern.permute.xlu0 0
      %3181 = vperm.xlu0 %3180, %v3037
      %v3182 = vpop.permute.xlu0 %3181
      %3185 = vset.pattern.permute.xlu0 0
      %3186 = vperm.xlu0 %3185, %v3040
      %v3187 = vpop.permute.xlu0 %3186
      %3190 = vset.pattern.permute.xlu0 0
      %3191 = vperm.xlu0 %3190, %v3045
      %v3192 = vpop.permute.xlu0 %3191
      %3195 = vset.pattern.permute.xlu0 0
      %3196 = vperm.xlu0 %3195, %v3048
      %v3197 = vpop.permute.xlu0 %3196
      %3200 = vset.pattern.permute.xlu0 0
      %3201 = vperm.xlu0 %3200, %v3053
      %v3202 = vpop.permute.xlu0 %3201
      %3205 = vset.pattern.permute.xlu0 0
      %3206 = vperm.xlu0 %3205, %v3056
      %v3207 = vpop.permute.xlu0 %3206
      %3210 = vset.pattern.permute.xlu0 0
      %3211 = vperm.xlu0 %3210, %v3061
      %v3212 = vpop.permute.xlu0 %3211
      %3215 = vset.pattern.permute.xlu0 0
      %3216 = vperm.xlu0 %3215, %v3064
      %v3217 = vpop.permute.xlu0 %3216
      %3220 = vset.pattern.permute.xlu0 0
      %3221 = vperm.xlu0 %3220, %v3069
      %v3222 = vpop.permute.xlu0 %3221
      %3225 = vset.pattern.permute.xlu0 0
      %3226 = vperm.xlu0 %3225, %v3072
      %v3227 = vpop.permute.xlu0 %3226
      %3230 = vset.pattern.permute.xlu0 0
      %3231 = vperm.xlu0 %3230, %v3077
      %v3232 = vpop.permute.xlu0 %3231
      %3235 = vset.pattern.permute.xlu0 0
      %3236 = vperm.xlu0 %3235, %v3080
      %v3237 = vpop.permute.xlu0 %3236
      %3240 = vset.pattern.permute.xlu0 0
      %3241 = vperm.xlu0 %3240, %v3085
      %v3242 = vpop.permute.xlu0 %3241
      %3245 = vset.pattern.permute.xlu0 0
      %3246 = vperm.xlu0 %3245, %v3088
      %v3247 = vpop.permute.xlu0 %3246
      %3250 = vset.pattern.permute.xlu0 0
      %3251 = vperm.xlu0 %3250, %v3093
      %v3252 = vpop.permute.xlu0 %3251
      %3255 = vset.pattern.permute.xlu0 0
      %3256 = vperm.xlu0 %3255, %v3096
      %v3257 = vpop.permute.xlu0 %3256
      %v3259 = vmul.f32 %v924, %v3102
      %v3260 = vmul.f32 %v925, %v3107
      %v3261 = vmul.f32 %v926, %v3112
      %v3262 = vmul.f32 %v927, %v3117
      %v3263 = vmul.f32 %v928, %v3122
      %v3264 = vmul.f32 %v929, %v3127
      %v3265 = vmul.f32 %v930, %v3132
      %v3266 = vmul.f32 %v931, %v3137
      %v3267 = vmul.f32 %v932, %v3142
      %v3268 = vmul.f32 %v933, %v3147
      %v3269 = vmul.f32 %v934, %v3152
      %v3270 = vmul.f32 %v935, %v3157
      %v3271 = vmul.f32 %v936, %v3162
      %v3272 = vmul.f32 %v937, %v3167
      %v3273 = vmul.f32 %v938, %v3172
      %v3274 = vmul.f32 %v939, %v3177
      %v3275 = vmul.f32 %v940, %v3182
      %v3276 = vmul.f32 %v941, %v3187
      %v3277 = vmul.f32 %v942, %v3192
      %v3278 = vmul.f32 %v943, %v3197
      %v3279 = vmul.f32 %v944, %v3202
      %v3280 = vmul.f32 %v945, %v3207
      %v3281 = vmul.f32 %v946, %v3212
      %v3282 = vmul.f32 %v947, %v3217
      %v3283 = vmul.f32 %v948, %v3222
      %v3284 = vmul.f32 %v949, %v3227
      %v3285 = vmul.f32 %v950, %v3232
      %v3286 = vmul.f32 %v951, %v3237
      %v3287 = vmul.f32 %v952, %v3242
      %v3288 = vmul.f32 %v953, %v3247
      %v3289 = vmul.f32 %v954, %v3252
      %v3290 = vmul.f32 %v955, %v3257
      %v3291 = vpack.c.bf16 %v3260, %v3259
      %v3292 = vpack.c.bf16 %v3262, %v3261
      %v3293 = vpack.c.bf16 %v3264, %v3263
      %v3294 = vpack.c.bf16 %v3266, %v3265
      %v3295 = vpack.c.bf16 %v3268, %v3267
      %v3296 = vpack.c.bf16 %v3270, %v3269
      %v3297 = vpack.c.bf16 %v3272, %v3271
      %v3298 = vpack.c.bf16 %v3274, %v3273
      %v3299 = vpack.c.bf16 %v3276, %v3275
      %v3300 = vpack.c.bf16 %v3278, %v3277
      %v3301 = vpack.c.bf16 %v3280, %v3279
      %v3302 = vpack.c.bf16 %v3282, %v3281
      %v3303 = vpack.c.bf16 %v3284, %v3283
      %v3304 = vpack.c.bf16 %v3286, %v3285
      %v3305 = vpack.c.bf16 %v3288, %v3287
      %v3306 = vpack.c.bf16 %v3290, %v3289
      %v3308 = vsel %vm980, %v3291, 0
      %v3311 = vsel %vm980, %v3292, 0
      %v3314 = vsel %vm980, %v3293, 0
      %v3317 = vsel %vm980, %v3294, 0
      %v3320 = vsel %vm980, %v3295, 0
      %v3323 = vsel %vm980, %v3296, 0
      %v3326 = vsel %vm980, %v3297, 0
      %v3329 = vsel %vm980, %v3298, 0
      %v3332 = vsel %vm980, %v3299, 0
      %v3335 = vsel %vm980, %v3300, 0
      %v3338 = vsel %vm980, %v3301, 0
      %v3341 = vsel %vm980, %v3302, 0
      %v3344 = vsel %vm980, %v3303, 0
      %v3347 = vsel %vm980, %v3304, 0
      %v3350 = vsel %vm980, %v3305, 0
      %v3353 = vsel %vm980, %v3306, 0
      %3355 = vmatprep.subr.bf16.mxu0 0
      %3356 = vmatpush1.bf16.msra.mxu0 0
      %3357 = vmatprep.subr.bf16.mxu0 0
      %3358 = vmatpush1.bf16.msra.mxu0 0
      %3359 = vmatprep.subr.bf16.mxu0 0
      %3360 = vmatpush1.bf16.msra.mxu0 0
      %3361 = vmatprep.subr.bf16.mxu0 0
      %3362 = vmatpush1.bf16.msra.mxu0 0
      %3363 = vmatprep.subr.bf16.mxu0 0
      %3364 = vmatpush1.bf16.msra.mxu0 0
      %3365 = vmatprep.subr.bf16.mxu0 0
      %3366 = vmatpush1.bf16.msra.mxu0 0
      %3367 = vmatprep.subr.bf16.mxu0 0
      %3368 = vmatpush1.bf16.msra.mxu0 0
      %3369 = vmatprep.subr.bf16.mxu0 0
      %3370 = vmatpush1.bf16.msra.mxu0 %v2329
      %3371 = vmatprep.subr.bf16.mxu0 0
      %3372 = vmatpush2.bf16.msra.mxu0 0
      %3373 = vmatprep.subr.bf16.mxu0 0
      %3374 = vmatpush2.bf16.msra.mxu0 0
      %3375 = vmatprep.subr.bf16.mxu0 0
      %3376 = vmatpush2.bf16.msra.mxu0 0
      %3377 = vmatprep.subr.bf16.mxu0 0
      %3378 = vmatpush2.bf16.msra.mxu0 0
      %3379 = vmatprep.subr.bf16.mxu0 0
      %3380 = vmatpush2.bf16.msra.mxu0 0
      %3381 = vmatprep.subr.bf16.mxu0 0
      %3382 = vmatpush2.bf16.msra.mxu0 0
      %3383 = vmatprep.subr.bf16.mxu0 0
      %3384 = vmatpush2.bf16.msra.mxu0 0
      %3385 = vmatprep.subr.bf16.mxu0 0
      %3386 = vmatpush2.bf16.msra.mxu0 0
      %3387 = vmatprep.mubr.bf16.mxu0 0
      %3388 = vmatmul.mubr.bf16.gmra.mxu0 %v3308
      %v3389 = vpop.f32.mrf.mxu0
      %v3390 = vadd.f32 %v2278, %v3389
      %v3391 = vpop.f32.mrf.mxu0
      %v3392 = vpop.f32.mrf.mxu0
      %v3393 = vadd.f32 %v2278, %v3392
      %v3394 = vpop.f32.mrf.mxu0
      %3395 = vmatprep.mubr.bf16.mxu0 0
      %3396 = vmatmul.mubr.bf16.gmra.mxu0 %v3311
      %v3397 = vpop.f32.mrf.mxu0
      %v3398 = vadd.f32 %v2278, %v3397
      %v3399 = vpop.f32.mrf.mxu0
      %v3400 = vpop.f32.mrf.mxu0
      %v3401 = vadd.f32 %v2278, %v3400
      %v3402 = vpop.f32.mrf.mxu0
      %3403 = vmatprep.mubr.bf16.mxu0 0
      %3404 = vmatmul.mubr.bf16.gmra.mxu0 %v3314
      %v3405 = vpop.f32.mrf.mxu0
      %v3406 = vadd.f32 %v2278, %v3405
      %v3407 = vpop.f32.mrf.mxu0
      %v3408 = vpop.f32.mrf.mxu0
      %v3409 = vadd.f32 %v2278, %v3408
      %v3410 = vpop.f32.mrf.mxu0
      %3411 = vmatprep.mubr.bf16.mxu0 0
      %3412 = vmatmul.mubr.bf16.gmra.mxu0 %v3317
      %v3413 = vpop.f32.mrf.mxu0
      %v3414 = vadd.f32 %v2278, %v3413
      %v3415 = vpop.f32.mrf.mxu0
      %v3416 = vpop.f32.mrf.mxu0
      %v3417 = vadd.f32 %v2278, %v3416
      %v3418 = vpop.f32.mrf.mxu0
      %3419 = vmatprep.mubr.bf16.mxu0 0
      %3420 = vmatmul.mubr.bf16.gmra.mxu0 %v3320
      %v3421 = vpop.f32.mrf.mxu0
      %v3422 = vadd.f32 %v2278, %v3421
      %v3423 = vpop.f32.mrf.mxu0
      %v3424 = vpop.f32.mrf.mxu0
      %v3425 = vadd.f32 %v2278, %v3424
      %v3426 = vpop.f32.mrf.mxu0
      %3427 = vmatprep.mubr.bf16.mxu0 0
      %3428 = vmatmul.mubr.bf16.gmra.mxu0 %v3323
      %v3429 = vpop.f32.mrf.mxu0
      %v3430 = vadd.f32 %v2278, %v3429
      %v3431 = vpop.f32.mrf.mxu0
      %v3432 = vpop.f32.mrf.mxu0
      %v3433 = vadd.f32 %v2278, %v3432
      %v3434 = vpop.f32.mrf.mxu0
      %3435 = vmatprep.mubr.bf16.mxu0 0
      %3436 = vmatmul.mubr.bf16.gmra.mxu0 %v3326
      %v3437 = vpop.f32.mrf.mxu0
      %v3438 = vadd.f32 %v2278, %v3437
      %v3439 = vpop.f32.mrf.mxu0
      %v3440 = vpop.f32.mrf.mxu0
      %v3441 = vadd.f32 %v2278, %v3440
      %v3442 = vpop.f32.mrf.mxu0
      %3443 = vmatprep.mubr.bf16.mxu0 0
      %3444 = vmatmul.mubr.bf16.gmra.mxu0 %v3329
      %v3445 = vpop.f32.mrf.mxu0
      %v3446 = vadd.f32 %v2278, %v3445
      %v3447 = vpop.f32.mrf.mxu0
      %v3448 = vpop.f32.mrf.mxu0
      %v3449 = vadd.f32 %v2278, %v3448
      %v3450 = vpop.f32.mrf.mxu0
      %3451 = vmatprep.mubr.bf16.mxu0 0
      %3452 = vmatmul.mubr.bf16.gmra.mxu0 %v3332
      %v3453 = vpop.f32.mrf.mxu0
      %v3454 = vadd.f32 %v2278, %v3453
      %v3455 = vpop.f32.mrf.mxu0
      %v3456 = vpop.f32.mrf.mxu0
      %v3457 = vadd.f32 %v2278, %v3456
      %v3458 = vpop.f32.mrf.mxu0
      %3459 = vmatprep.mubr.bf16.mxu0 0
      %3460 = vmatmul.mubr.bf16.gmra.mxu0 %v3335
      %v3461 = vpop.f32.mrf.mxu0
      %v3462 = vadd.f32 %v2278, %v3461
      %v3463 = vpop.f32.mrf.mxu0
      %v3464 = vpop.f32.mrf.mxu0
      %v3465 = vadd.f32 %v2278, %v3464
      %v3466 = vpop.f32.mrf.mxu0
      %3467 = vmatprep.mubr.bf16.mxu0 0
      %3468 = vmatmul.mubr.bf16.gmra.mxu0 %v3338
      %v3469 = vpop.f32.mrf.mxu0
      %v3470 = vadd.f32 %v2278, %v3469
      %v3471 = vpop.f32.mrf.mxu0
      %v3472 = vpop.f32.mrf.mxu0
      %v3473 = vadd.f32 %v2278, %v3472
      %v3474 = vpop.f32.mrf.mxu0
      %3475 = vmatprep.mubr.bf16.mxu0 0
      %3476 = vmatmul.mubr.bf16.gmra.mxu0 %v3341
      %v3477 = vpop.f32.mrf.mxu0
      %v3478 = vadd.f32 %v2278, %v3477
      %v3479 = vpop.f32.mrf.mxu0
      %v3480 = vpop.f32.mrf.mxu0
      %v3481 = vadd.f32 %v2278, %v3480
      %v3482 = vpop.f32.mrf.mxu0
      %3483 = vmatprep.mubr.bf16.mxu0 0
      %3484 = vmatmul.mubr.bf16.gmra.mxu0 %v3344
      %v3485 = vpop.f32.mrf.mxu0
      %v3486 = vadd.f32 %v2278, %v3485
      %v3487 = vpop.f32.mrf.mxu0
      %v3488 = vpop.f32.mrf.mxu0
      %v3489 = vadd.f32 %v2278, %v3488
      %v3490 = vpop.f32.mrf.mxu0
      %3491 = vmatprep.mubr.bf16.mxu0 0
      %3492 = vmatmul.mubr.bf16.gmra.mxu0 %v3347
      %v3493 = vpop.f32.mrf.mxu0
      %v3494 = vadd.f32 %v2278, %v3493
      %v3495 = vpop.f32.mrf.mxu0
      %v3496 = vpop.f32.mrf.mxu0
      %v3497 = vadd.f32 %v2278, %v3496
      %v3498 = vpop.f32.mrf.mxu0
      %3499 = vmatprep.mubr.bf16.mxu0 0
      %3500 = vmatmul.mubr.bf16.gmra.mxu0 %v3350
      %v3501 = vpop.f32.mrf.mxu0
      %v3502 = vadd.f32 %v2278, %v3501
      %v3503 = vpop.f32.mrf.mxu0
      %v3504 = vpop.f32.mrf.mxu0
      %v3505 = vadd.f32 %v2278, %v3504
      %v3506 = vpop.f32.mrf.mxu0
      %3507 = vmatprep.mubr.bf16.mxu0 0
      %3508 = vmatmul.mubr.bf16.gmra.mxu0 %v3353
      %v3509 = vpop.f32.mrf.mxu0
      %v3510 = vadd.f32 %v2278, %v3509
      %v3511 = vpop.f32.mrf.mxu0
      %v3512 = vpop.f32.mrf.mxu0
      %v3513 = vadd.f32 %v2278, %v3512
      %v3514 = vpop.f32.mrf.mxu0
      %3515 = vdwg.mxu0
      %v3516 = vmax.f32 %v3390, 0.0
      %v3517 = vmax.f32 %v3393, 0.0
      %v3518 = vmax.f32 %v3398, 0.0
      %v3519 = vmax.f32 %v3401, 0.0
      %v3520 = vmax.f32 %v3406, 0.0
      %v3521 = vmax.f32 %v3409, 0.0
      %v3522 = vmax.f32 %v3414, 0.0
      %v3523 = vmax.f32 %v3417, 0.0
      %v3524 = vmax.f32 %v3422, 0.0
      %v3525 = vmax.f32 %v3425, 0.0
      %v3526 = vmax.f32 %v3430, 0.0
      %v3527 = vmax.f32 %v3433, 0.0
      %v3528 = vmax.f32 %v3438, 0.0
      %v3529 = vmax.f32 %v3441, 0.0
      %v3530 = vmax.f32 %v3446, 0.0
      %v3531 = vmax.f32 %v3449, 0.0
      %v3532 = vmax.f32 %v3454, 0.0
      %v3533 = vmax.f32 %v3457, 0.0
      %v3534 = vmax.f32 %v3462, 0.0
      %v3535 = vmax.f32 %v3465, 0.0
      %v3536 = vmax.f32 %v3470, 0.0
      %v3537 = vmax.f32 %v3473, 0.0
      %v3538 = vmax.f32 %v3478, 0.0
      %v3539 = vmax.f32 %v3481, 0.0
      %v3540 = vmax.f32 %v3486, 0.0
      %v3541 = vmax.f32 %v3489, 0.0
      %v3542 = vmax.f32 %v3494, 0.0
      %v3543 = vmax.f32 %v3497, 0.0
      %v3544 = vmax.f32 %v3502, 0.0
      %v3545 = vmax.f32 %v3505, 0.0
      %v3546 = vmax.f32 %v3510, 0.0
      %v3547 = vmax.f32 %v3513, 0.0
      %v3548 = vpack.c.bf16 %v3517, %v3516
      %v3549 = vpack.c.bf16 %v3519, %v3518
      %v3550 = vpack.c.bf16 %v3521, %v3520
      %v3551 = vpack.c.bf16 %v3523, %v3522
      %v3552 = vpack.c.bf16 %v3525, %v3524
      %v3553 = vpack.c.bf16 %v3527, %v3526
      %v3554 = vpack.c.bf16 %v3529, %v3528
      %v3555 = vpack.c.bf16 %v3531, %v3530
      %v3556 = vpack.c.bf16 %v3533, %v3532
      %v3557 = vpack.c.bf16 %v3535, %v3534
      %v3558 = vpack.c.bf16 %v3537, %v3536
      %v3559 = vpack.c.bf16 %v3539, %v3538
      %v3560 = vpack.c.bf16 %v3541, %v3540
      %v3561 = vpack.c.bf16 %v3543, %v3542
      %v3562 = vpack.c.bf16 %v3545, %v3544
      %v3563 = vpack.c.bf16 %v3547, %v3546
      %3564 = vmatprep.subr.bf16.mxu0 0
      %3565 = vmatpush1.bf16.msra.mxu0 %v3555
      %3566 = vmatprep.subr.bf16.mxu0 0
      %3567 = vmatpush1.bf16.msra.mxu0 %v3554
      %3568 = vmatprep.subr.bf16.mxu0 0
      %3569 = vmatpush1.bf16.msra.mxu0 %v3553
      %3570 = vmatprep.subr.bf16.mxu0 0
      %3571 = vmatpush1.bf16.msra.mxu0 %v3552
      %3572 = vmatprep.subr.bf16.mxu0 0
      %3573 = vmatpush1.bf16.msra.mxu0 %v3551
      %3574 = vmatprep.subr.bf16.mxu0 0
      %3575 = vmatpush1.bf16.msra.mxu0 %v3550
      %3576 = vmatprep.subr.bf16.mxu0 0
      %3577 = vmatpush1.bf16.msra.mxu0 %v3549
      %3578 = vmatprep.subr.bf16.mxu0 0
      %3579 = vmatpush1.bf16.msra.mxu0 %v3548
      %3580 = vmatprep.subr.bf16.mxu0 0
      %3581 = vmatpush2.bf16.msra.mxu0 %v3563
      %3582 = vmatprep.subr.bf16.mxu0 0
      %3583 = vmatpush2.bf16.msra.mxu0 %v3562
      %3584 = vmatprep.subr.bf16.mxu0 0
      %3585 = vmatpush2.bf16.msra.mxu0 %v3561
      %3586 = vmatprep.subr.bf16.mxu0 0
      %3587 = vmatpush2.bf16.msra.mxu0 %v3560
      %3588 = vmatprep.subr.bf16.mxu0 0
      %3589 = vmatpush2.bf16.msra.mxu0 %v3559
      %3590 = vmatprep.subr.bf16.mxu0 0
      %3591 = vmatpush2.bf16.msra.mxu0 %v3558
      %3592 = vmatprep.subr.bf16.mxu0 0
      %3593 = vmatpush2.bf16.msra.mxu0 %v3557
      %3594 = vmatprep.subr.bf16.mxu0 0
      %3595 = vmatpush2.bf16.msra.mxu0 %v3556
      %3596 = vmatprep.mubr.bf16.mxu0 %v1278
      %3597 = vmatmul.mubr.bf16.gmra.mxu0 %v1277
      %v3598 = vpop.f32.mrf.mxu0
      %v3599 = vadd.f32 0.0, %v3598
      %v3600 = vpop.f32.mrf.mxu0
      %v3601 = vpop.f32.mrf.mxu0
      %v3602 = vadd.f32 0.0, %v3601
      %v3603 = vpop.f32.mrf.mxu0
      %3604 = vmatprep.mubr.bf16.mxu0 %v1280
      %3605 = vmatmul.mubr.bf16.gmra.mxu0 %v1279
      %v3606 = vpop.f32.mrf.mxu0
      %v3607 = vadd.f32 0.0, %v3606
      %v3608 = vpop.f32.mrf.mxu0
      %v3609 = vpop.f32.mrf.mxu0
      %v3610 = vadd.f32 0.0, %v3609
      %v3611 = vpop.f32.mrf.mxu0
      %3612 = vmatprep.mubr.bf16.mxu0 %v1282
      %3613 = vmatmul.mubr.bf16.gmra.mxu0 %v1281
      %v3614 = vpop.f32.mrf.mxu0
      %v3615 = vadd.f32 0.0, %v3614
      %v3616 = vpop.f32.mrf.mxu0
      %v3617 = vpop.f32.mrf.mxu0
      %v3618 = vadd.f32 0.0, %v3617
      %v3619 = vpop.f32.mrf.mxu0
      %3620 = vmatprep.mubr.bf16.mxu0 %v1284
      %3621 = vmatmul.mubr.bf16.gmra.mxu0 %v1283
      %v3622 = vpop.f32.mrf.mxu0
      %v3623 = vadd.f32 0.0, %v3622
      %v3624 = vpop.f32.mrf.mxu0
      %v3625 = vpop.f32.mrf.mxu0
      %v3626 = vadd.f32 0.0, %v3625
      %v3627 = vpop.f32.mrf.mxu0
      %3628 = vdwg.mxu0
      %v3629 = vpack.c.bf16 %v3602, %v3599
      %v3630 = vpack.c.bf16 %v3610, %v3607
      %v3631 = vpack.c.bf16 %v3618, %v3615
      %v3632 = vpack.c.bf16 %v3626, %v3623
      %v3633 = vld [vmem:[%s43] sm:$0xf]
      %v3634 = vld [vmem:[%s43 + $0x4] sm:$0xf]
      %v3635 = vld [vmem:[%s45] sm:$0x1]
      %v3637 = vlaneseq
      %v3638 = vshrl.u32 %v3637, 7
      %v3639 = vsub.s32 0, %v3638
      %v3640 = vrot.slane %v3635, %v3639
      %v3644 = vunpack.c.l.b16 %v3633
      %v3645 = vunpack.c.l.b16 %v3634
      %v3646 = vpack.c.b16 %v3645, %v3644
      %v3649 = vsel %vm1854, %v3629, 0
      %v3652 = vsel %vm1854, %v3630, 0
      %v3655 = vsel %vm1854, %v3631, 0
      %v3658 = vsel %vm1854, %v3632, 0
      %3660 = vmatprep.subr.bf16.mxu0 0
      %3661 = vmatpush1.bf16.msra.mxu0 0
      %3662 = vmatprep.subr.bf16.mxu0 0
      %3663 = vmatpush1.bf16.msra.mxu0 0
      %3664 = vmatprep.subr.bf16.mxu0 0
      %3665 = vmatpush1.bf16.msra.mxu0 0
      %3666 = vmatprep.subr.bf16.mxu0 0
      %3667 = vmatpush1.bf16.msra.mxu0 0
      %3668 = vmatprep.subr.bf16.mxu0 0
      %3669 = vmatpush1.bf16.msra.mxu0 0
      %3670 = vmatprep.subr.bf16.mxu0 0
      %3671 = vmatpush1.bf16.msra.mxu0 0
      %3672 = vmatprep.subr.bf16.mxu0 0
      %3673 = vmatpush1.bf16.msra.mxu0 0
      %3674 = vmatprep.subr.bf16.mxu0 0
      %3675 = vmatpush1.bf16.msra.mxu0 %v3646
      %3676 = vmatprep.subr.bf16.mxu0 0
      %3677 = vmatpush2.bf16.msra.mxu0 0
      %3678 = vmatprep.subr.bf16.mxu0 0
      %3679 = vmatpush2.bf16.msra.mxu0 0
      %3680 = vmatprep.subr.bf16.mxu0 0
      %3681 = vmatpush2.bf16.msra.mxu0 0
      %3682 = vmatprep.subr.bf16.mxu0 0
      %3683 = vmatpush2.bf16.msra.mxu0 0
      %3684 = vmatprep.subr.bf16.mxu0 0
      %3685 = vmatpush2.bf16.msra.mxu0 0
      %3686 = vmatprep.subr.bf16.mxu0 0
      %3687 = vmatpush2.bf16.msra.mxu0 0
      %3688 = vmatprep.subr.bf16.mxu0 0
      %3689 = vmatpush2.bf16.msra.mxu0 0
      %3690 = vmatprep.subr.bf16.mxu0 0
      %3691 = vmatpush2.bf16.msra.mxu0 0
      %3692 = vmatprep.mubr.bf16.mxu0 0
      %3693 = vmatmul.mubr.bf16.gmra.mxu0 %v3649
      %v3694 = vpop.f32.mrf.mxu0
      %v3695 = vadd.f32 %v3640, %v3694
      %v3696 = vpop.f32.mrf.mxu0
      %v3697 = vpop.f32.mrf.mxu0
      %v3698 = vadd.f32 %v3640, %v3697
      %v3699 = vpop.f32.mrf.mxu0
      %3700 = vmatprep.mubr.bf16.mxu0 0
      %3701 = vmatmul.mubr.bf16.gmra.mxu0 %v3652
      %v3702 = vpop.f32.mrf.mxu0
      %v3703 = vadd.f32 %v3640, %v3702
      %v3704 = vpop.f32.mrf.mxu0
      %v3705 = vpop.f32.mrf.mxu0
      %v3706 = vadd.f32 %v3640, %v3705
      %v3707 = vpop.f32.mrf.mxu0
      %3708 = vmatprep.mubr.bf16.mxu0 0
      %3709 = vmatmul.mubr.bf16.gmra.mxu0 %v3655
      %v3710 = vpop.f32.mrf.mxu0
      %v3711 = vadd.f32 %v3640, %v3710
      %v3712 = vpop.f32.mrf.mxu0
      %v3713 = vpop.f32.mrf.mxu0
      %v3714 = vadd.f32 %v3640, %v3713
      %v3715 = vpop.f32.mrf.mxu0
      %3716 = vmatprep.mubr.bf16.mxu0 0
      %3717 = vmatmul.mubr.bf16.gmra.mxu0 %v3658
      %v3718 = vpop.f32.mrf.mxu0
      %v3719 = vadd.f32 %v3640, %v3718
      %v3720 = vpop.f32.mrf.mxu0
      %v3721 = vpop.f32.mrf.mxu0
      %v3722 = vadd.f32 %v3640, %v3721
      %v3723 = vpop.f32.mrf.mxu0
      %3724 = vdwg.mxu0
      %v3725 = vmax.f32 %v3695, 0.0
      %v3726 = vmax.f32 %v3698, 0.0
      %v3727 = vmax.f32 %v3703, 0.0
      %v3728 = vmax.f32 %v3706, 0.0
      %v3729 = vmax.f32 %v3711, 0.0
      %v3730 = vmax.f32 %v3714, 0.0
      %v3731 = vmax.f32 %v3719, 0.0
      %v3732 = vmax.f32 %v3722, 0.0
      %v3733 = vpack.c.bf16 %v3726, %v3725
      %v3734 = vpack.c.bf16 %v3728, %v3727
      %v3735 = vpack.c.bf16 %v3730, %v3729
      %v3736 = vpack.c.bf16 %v3732, %v3731
      %3737 = vmatprep.subr.bf16.mxu0 0
      %3738 = vmatpush1.bf16.msra.mxu0 0
      %3739 = vmatprep.subr.bf16.mxu0 0
      %3740 = vmatpush1.bf16.msra.mxu0 0
      %3741 = vmatprep.subr.bf16.mxu0 0
      %3742 = vmatpush1.bf16.msra.mxu0 0
      %3743 = vmatprep.subr.bf16.mxu0 0
      %3744 = vmatpush1.bf16.msra.mxu0 0
      %3745 = vmatprep.subr.bf16.mxu0 0
      %3746 = vmatpush1.bf16.msra.mxu0 %v3736
      %3747 = vmatprep.subr.bf16.mxu0 0
      %3748 = vmatpush1.bf16.msra.mxu0 %v3735
      %3749 = vmatprep.subr.bf16.mxu0 0
      %3750 = vmatpush1.bf16.msra.mxu0 %v3734
      %3751 = vmatprep.subr.bf16.mxu0 0
      %3752 = vmatpush1.bf16.msra.mxu0 %v3733
      %3753 = vmatprep.subr.bf16.mxu0 0
      %3754 = vmatpush2.bf16.msra.mxu0 0
      %3755 = vmatprep.subr.bf16.mxu0 0
      %3756 = vmatpush2.bf16.msra.mxu0 0
      %3757 = vmatprep.subr.bf16.mxu0 0
      %3758 = vmatpush2.bf16.msra.mxu0 0
      %3759 = vmatprep.subr.bf16.mxu0 0
      %3760 = vmatpush2.bf16.msra.mxu0 0
      %3761 = vmatprep.subr.bf16.mxu0 0
      %3762 = vmatpush2.bf16.msra.mxu0 0
      %3763 = vmatprep.subr.bf16.mxu0 0
      %3764 = vmatpush2.bf16.msra.mxu0 0
      %3765 = vmatprep.subr.bf16.mxu0 0
      %3766 = vmatpush2.bf16.msra.mxu0 0
      %3767 = vmatprep.subr.bf16.mxu0 0
      %3768 = vmatpush2.bf16.msra.mxu0 0
      %3769 = vmatprep.mubr.bf16.mxu0 0
      %3770 = vmatmul.mubr.bf16.gmra.mxu0 %v1484
      %v3771 = vpop.f32.mrf.mxu0
      %v3772 = vadd.f32 0.0, %v3771
      %v3773 = vpop.f32.mrf.mxu0
      %v3774 = vpop.f32.mrf.mxu0
      %v3775 = vadd.f32 0.0, %v3774
      %v3776 = vpop.f32.mrf.mxu0
      %3777 = vdwg.mxu0
      %v3778 = vpack.c.bf16 %v3775, %v3772
      %v3779 = vld [vmem:[%s47] sm:$0xf]
      %v3780 = vld [vmem:[%s47 + $0x4] sm:$0xf]
      %v3781 = vld [vmem:[%s47 + $0x8] sm:$0xf]
      %v3782 = vld [vmem:[%s47 + $0xc] sm:$0xf]
      %v3783 = vld [vmem:[%s49] sm:$0x1]
      %v3785 = vlaneseq
      %v3786 = vshrl.u32 %v3785, 7
      %v3787 = vsub.s32 0, %v3786
      %v3788 = vrot.slane %v3783, %v3787
      %v3794 = vunpack.c.l.b16 %v3779
      %v3795 = vunpack.c.l.b16 %v3780
      %v3796 = vunpack.c.l.b16 %v3781
      %v3797 = vunpack.c.l.b16 %v3782
      %v3798 = vpack.c.b16 %v3795, %v3794
      %v3799 = vpack.c.b16 %v3797, %v3796
      %v3803 = vsel %vm1385, %v3778, 0
      %3805 = vmatprep.subr.bf16.mxu0 0
      %3806 = vmatpush1.bf16.msra.mxu0 0
      %3807 = vmatprep.subr.bf16.mxu0 0
      %3808 = vmatpush1.bf16.msra.mxu0 0
      %3809 = vmatprep.subr.bf16.mxu0 0
      %3810 = vmatpush1.bf16.msra.mxu0 0
      %3811 = vmatprep.subr.bf16.mxu0 0
      %3812 = vmatpush1.bf16.msra.mxu0 0
      %3813 = vmatprep.subr.bf16.mxu0 0
      %3814 = vmatpush1.bf16.msra.mxu0 0
      %3815 = vmatprep.subr.bf16.mxu0 0
      %3816 = vmatpush1.bf16.msra.mxu0 0
      %3817 = vmatprep.subr.bf16.mxu0 0
      %3818 = vmatpush1.bf16.msra.mxu0 %v3799
      %3819 = vmatprep.subr.bf16.mxu0 0
      %3820 = vmatpush1.bf16.msra.mxu0 %v3798
      %3821 = vmatprep.subr.bf16.mxu0 0
      %3822 = vmatpush2.bf16.msra.mxu0 0
      %3823 = vmatprep.subr.bf16.mxu0 0
      %3824 = vmatpush2.bf16.msra.mxu0 0
      %3825 = vmatprep.subr.bf16.mxu0 0
      %3826 = vmatpush2.bf16.msra.mxu0 0
      %3827 = vmatprep.subr.bf16.mxu0 0
      %3828 = vmatpush2.bf16.msra.mxu0 0
      %3829 = vmatprep.subr.bf16.mxu0 0
      %3830 = vmatpush2.bf16.msra.mxu0 0
      %3831 = vmatprep.subr.bf16.mxu0 0
      %3832 = vmatpush2.bf16.msra.mxu0 0
      %3833 = vmatprep.subr.bf16.mxu0 0
      %3834 = vmatpush2.bf16.msra.mxu0 0
      %3835 = vmatprep.subr.bf16.mxu0 0
      %3836 = vmatpush2.bf16.msra.mxu0 0
      %3837 = vmatprep.mubr.bf16.mxu0 0
      %3838 = vmatmul.mubr.bf16.gmra.mxu0 %v3803
      %v3839 = vpop.f32.mrf.mxu0
      %v3840 = vadd.f32 %v3788, %v3839
      %v3841 = vpop.f32.mrf.mxu0
      %v3842 = vpop.f32.mrf.mxu0
      %v3843 = vadd.f32 %v3788, %v3842
      %v3844 = vpop.f32.mrf.mxu0
      %3845 = vdwg.mxu0
      %v3846 = vmax.f32 %v3840, 0.0
      %v3847 = vmax.f32 %v3843, 0.0
      %v3848 = vsel %vm1385, %v3846, 0.0
      %v3849 = vsel %vm1385, %v3847, 0.0
      %v3850 = vadd.f32 %v3848, %v3849
      %v3851 = vrot.slane %v3850, 4
      %v3852 = vadd.f32 %v3850, %v3851
      %v3853 = vrot.slane %v3852, 2
      %v3854 = vadd.f32 %v3852, %v3853
      %v3855 = vrot.slane %v3854, 1
      %v3856 = vadd.f32 %v3854, %v3855
      %v3857 = vmul.f32 %v3856, %v1707
      %v3858 = vpack.c.bf16 %v3857, %v3857
      %v3859 = vld [vmem:[%s51] sm:$0xf]
      %v3860 = vld [vmem:[%s51 + $0x4] sm:$0xf]
      %v3861 = vld [vmem:[%s51 + $0x8] sm:$0xf]
      %v3862 = vld [vmem:[%s51 + $0xc] sm:$0xf]
      %v3863 = vld [vmem:[%s53] sm:$0x1]
      %v3868 = vunpack.c.l.b16 %v3859
      %v3869 = vunpack.c.l.b16 %v3860
      %v3870 = vunpack.c.l.b16 %v3861
      %v3871 = vunpack.c.l.b16 %v3862
      %v3872 = vpack.c.b16 %v3869, %v3868
      %v3873 = vpack.c.b16 %v3871, %v3870
      %v3877 = vsel %vm1385, %v3858, 0
      %3879 = vmatprep.subr.bf16.mxu0 0
      %3880 = vmatpush1.bf16.msra.mxu0 0
      %3881 = vmatprep.subr.bf16.mxu0 0
      %3882 = vmatpush1.bf16.msra.mxu0 0
      %3883 = vmatprep.subr.bf16.mxu0 0
      %3884 = vmatpush1.bf16.msra.mxu0 0
      %3885 = vmatprep.subr.bf16.mxu0 0
      %3886 = vmatpush1.bf16.msra.mxu0 0
      %3887 = vmatprep.subr.bf16.mxu0 0
      %3888 = vmatpush1.bf16.msra.mxu0 0
      %3889 = vmatprep.subr.bf16.mxu0 0
      %3890 = vmatpush1.bf16.msra.mxu0 0
      %3891 = vmatprep.subr.bf16.mxu0 0
      %3892 = vmatpush1.bf16.msra.mxu0 %v3873
      %3893 = vmatprep.subr.bf16.mxu0 0
      %3894 = vmatpush1.bf16.msra.mxu0 %v3872
      %3895 = vmatprep.subr.bf16.mxu0 0
      %3896 = vmatpush2.bf16.msra.mxu0 0
      %3897 = vmatprep.subr.bf16.mxu0 0
      %3898 = vmatpush2.bf16.msra.mxu0 0
      %3899 = vmatprep.subr.bf16.mxu0 0
      %3900 = vmatpush2.bf16.msra.mxu0 0
      %3901 = vmatprep.subr.bf16.mxu0 0
      %3902 = vmatpush2.bf16.msra.mxu0 0
      %3903 = vmatprep.subr.bf16.mxu0 0
      %3904 = vmatpush2.bf16.msra.mxu0 0
      %3905 = vmatprep.subr.bf16.mxu0 0
      %3906 = vmatpush2.bf16.msra.mxu0 0
      %3907 = vmatprep.subr.bf16.mxu0 0
      %3908 = vmatpush2.bf16.msra.mxu0 0
      %3909 = vmatprep.subr.bf16.mxu0 0
      %3910 = vmatpush2.bf16.msra.mxu0 0
      %3911 = vmatprep.mubr.bf16.mxu0 0
      %3912 = vmatmul.mubr.bf16.gmra.mxu0 %v3877
      %v3913 = vpop.f32.mrf.mxu0
      %v3914 = vadd.f32 %v3863, %v3913
      %v3915 = vpop.f32.mrf.mxu0
      %v3916 = vpop.f32.mrf.mxu0
      %v3917 = vpop.f32.mrf.mxu0
      %3918 = vdwg.mxu0
      %v3919 = vpack.c.bf16 %v1708, %v1708
      %v3920 = vld [vmem:[%s55] sm:$0xf]
      %v3921 = vld [vmem:[%s57] sm:$0x1]
      %3923 = vrot.lane.b32.xlu0 %v3919, 123
      %v3924 = vpop.permute.xlu0 %3923
      %vm3925 = vcmask 64512
      %v3927 = vsel %vm3925, %v3924, 0
      %vm3929 = vcmask 1043456
      %v3931 = vsel %vm3929, %v3920, 0
      %3933 = vmatprep.subr.bf16.mxu0 0
      %3934 = vmatpush1.bf16.msra.mxu0 0
      %3935 = vmatprep.subr.bf16.mxu0 0
      %3936 = vmatpush1.bf16.msra.mxu0 0
      %3937 = vmatprep.subr.bf16.mxu0 0
      %3938 = vmatpush1.bf16.msra.mxu0 0
      %3939 = vmatprep.subr.bf16.mxu0 0
      %3940 = vmatpush1.bf16.msra.mxu0 0
      %3941 = vmatprep.subr.bf16.mxu0 0
      %3942 = vmatpush1.bf16.msra.mxu0 0
      %3943 = vmatprep.subr.bf16.mxu0 0
      %3944 = vmatpush1.bf16.msra.mxu0 0
      %3945 = vmatprep.subr.bf16.mxu0 0
      %3946 = vmatpush1.bf16.msra.mxu0 0
      %3947 = vmatprep.subr.bf16.mxu0 0
      %3948 = vmatpush1.bf16.msra.mxu0 %v3931
      %3949 = vmatprep.subr.bf16.mxu0 0
      %3950 = vmatpush2.bf16.msra.mxu0 0
      %3951 = vmatprep.subr.bf16.mxu0 0
      %3952 = vmatpush2.bf16.msra.mxu0 0
      %3953 = vmatprep.subr.bf16.mxu0 0
      %3954 = vmatpush2.bf16.msra.mxu0 0
      %3955 = vmatprep.subr.bf16.mxu0 0
      %3956 = vmatpush2.bf16.msra.mxu0 0
      %3957 = vmatprep.subr.bf16.mxu0 0
      %3958 = vmatpush2.bf16.msra.mxu0 0
      %3959 = vmatprep.subr.bf16.mxu0 0
      %3960 = vmatpush2.bf16.msra.mxu0 0
      %3961 = vmatprep.subr.bf16.mxu0 0
      %3962 = vmatpush2.bf16.msra.mxu0 0
      %3963 = vmatprep.subr.bf16.mxu0 0
      %3964 = vmatpush2.bf16.msra.mxu0 0
      %3965 = vmatprep.mubr.bf16.mxu0 0
      %3966 = vmatmul.mubr.bf16.gmra.mxu0 %v3927
      %v3967 = vpop.f32.mrf.mxu0
      %v3968 = vadd.f32 %v3921, %v3967
      %v3969 = vpop.f32.mrf.mxu0
      %v3970 = vpop.f32.mrf.mxu0
      %v3971 = vpop.f32.mrf.mxu0
      %3972 = vdwg.mxu0
      %v3973 = vmul.f32 %v3968, 0.1
      %vm3974 = vcmask 16384
      %v3975 = vsel %vm3974, %v3973, -inf
      %3976 = vmax.xlane.f32.xlu0 %v3975
      %v3977 = vpop.xlane.xlu0 %3976
      %v3978 = vsub.f32 %v3973, %v3977
      %v3979 = vmul.f32 %v3978, 1.442695
      %v3980 = vpow.pop %v3979
      %v3981 = vsel %vm3974, %v3980, 0.0
      %3982 = vadd.xlane.f32.xlu0 %v3981
      %v3983 = vpop.xlane.xlu0 %3982
      %v3984 = vrcp.pop %v3983
      %v3985 = vmul.f32 %v3980, %v3984
      %3987 = vset.pattern.permute.xlu0 0
      %3988 = vperm.xlu0 %3987, %v3985
      %v3989 = vpop.permute.xlu0 %3988
      %v3991 = vmul.f32 %v1708, %v3989
      %3992 = vset.pattern.permute.xlu0 1
      %3993 = vperm.xlu0 %3992, %v3985
      %v3994 = vpop.permute.xlu0 %3993
      %v3996 = vmul.f32 %v2901, %v3994
      %v3997 = vadd.f32 %v3991, %v3996
      %3998 = vset.pattern.permute.xlu0 2
      %3999 = vperm.xlu0 %3998, %v3985
      %v4000 = vpop.permute.xlu0 %3999
      %v4002 = vmul.f32 %v3914, %v4000
      %v4003 = vadd.f32 %v3997, %v4002
      %4005 = vrot.lane.b32.xlu0 %v2901, 5
      %v4006 = vpop.permute.xlu0 %4005
      %4009 = vrot.lane.b32.xlu0 %v3914, 10
      %v4010 = vpop.permute.xlu0 %4009
      %4013 = vrot.lane.b32.xlu0 %v4003, 15
      %v4014 = vpop.permute.xlu0 %4013
      %4016 = vrot.lane.b32.xlu0 %v3985, 20
      %v4017 = vpop.permute.xlu0 %4016
      %v4019 = vsel %vm1713, %v1708, %v4006
      %vm4020 = vcmask 80896
      %v4021 = vsel %vm4020, %v4019, %v4010
      %vm4022 = vcmask 121856
      %v4023 = vsel %vm4022, %v4021, %v4014
      %vm4024 = vcmask 162816
      %v4025 = vsel %vm4024, %v4023, %v4017
      %vm4026 = vcmask 180224
      %4027 = vst.msk [vmem:[%s922] sm:$0x1] %vm4026, %v4025
      %p4028 = scmp.lt.s32.totalorder %s70, 1
      %s4029 = scalar_select %p4028, %s70, 1
      %s4030 = scalar_lea.vmem %s59, %s4029
      // Predicated region
      $region137: #{multibranch_forward.1} parent=135 // pred_check
        %p4031 = pneg %p707
      $region138: #{multibranch_forward.1} parent=135 // pred_check_branch
        %4033 = sbr.rel (%p4031) target = $region140
      $region139: #{multibranch_forward.1} parent=135 // pred_region
        _
      $region140: #{multibranch_forward.1} parent=135 // pred_fallthru
        _
    $region136: #{multibranch_forward.1} parent=5 // pred_fallthru
      _
    %p4034 = scmp.le.s32.totalorder 2, %s65
    // Predicated region
    $region141: #{multibranch_forward.1} parent=5 // pred_check
      %p4035 = pneg %p4034
    $region142: #{multibranch_forward.1} parent=5 // pred_check_branch
      %4037 = sbr.rel (%p4035) target = $region144
    $region143: #{multibranch_forward.1} parent=5 // pred_region
      %s4038 = ssub.s32 %s65, 2
      // Predicated region
      $region145: #{multibranch_forward.1} parent=143 // pred_check
        %p4039 = pneg %p713
      $region146: #{multibranch_forward.1} parent=143 // pred_check_branch
        %4041 = sbr.rel (%p4039) target = $region148
      $region147: #{multibranch_forward.1} parent=143 // pred_region
        %p4042 = scmp.lt.s32.totalorder %s71, 1
        %s4043 = scalar_select %p4042, %s71, 1
        %s4044 = scalar_lea.vmem %s59, %s4043
      $region148: #{multibranch_forward.1} parent=143 // pred_fallthru
        _
    $region144: #{multibranch_forward.1} parent=5 // pred_fallthru
      _
  $region6: #{multibranch_forward.1} parent=0 // loop_footer
    %s69 = sadd.s32 1, %s65
  $region7: #{multibranch_forward.1} parent=0 // loop_footer_branch
    %64 = sbr.rel target = $region3
  $region8: #{multibranch_forward.1} parent=0 // loop_exit
    _

</llo_original>
